<compile_context>
chip_gen: v7x
topology: tpu7x:2x2x1
jax: 0.10.0
libtpu: 0.0.40
codegen_flags: <defaults>
</compile_context>

<pallas_src>
import jax
import jax.numpy as jnp
import numpy as np
from jax.experimental import pallas as pl
from jax.experimental.pallas import tpu as pltpu


# ----------------------------------------------------------------------------
# Static geometry: flat-index bookkeeping (strided embedding through pool2,
# dense per-sample grid after the post-pool2 compaction).
# ----------------------------------------------------------------------------
def _geometry(N, H, W):
    W0, block = W, H * W

    # conv1: 3x3 valid, stride-1 embedding (flat index = n*H*W + r*W0 + c)
    taps1 = tuple(kh * W0 + kw for kh in range(3) for kw in range(3))
    L1 = N * block - max(taps1)
    H1, W1 = H - 2, W - 2
    # pool1: 2x2 stride-2 max; survivors stay at their stride-2 embedded slots
    ptaps1 = tuple(dh * W0 + dw for dh in (0, 1) for dw in (0, 1))
    L1p = L1 - max(ptaps1)
    H1p, W1p = H1 // 2, W1 // 2
    # conv2 at embedded stride 2
    taps2 = tuple(2 * t for t in taps1)
    L2 = L1p - max(taps2)
    H2, W2 = H1p - 2, W1p - 2
    # pool2 -> embedded stride 4
    ptaps2 = tuple(2 * t for t in ptaps1)
    L2p = L2 - max(ptaps2)
    H2p, W2p = H2 // 2, W2 // 2
    assert H2p >= 3 and W2p >= 3
    assert (N - 1) * block + 4 * ((H2p - 1) * W0 + (W2p - 1)) < L2p

    # Compaction: gather the H2p x W2p valid pool2 cells of every sample into
    # a dense per-sample grid (flat index = n*Wd + r*W2p + c).
    Wd = H2p * W2p
    gsel = np.zeros((L2p, N * Wd), np.float32)
    for n in range(N):
        for r in range(H2p):
            for c in range(W2p):
                gsel[n * block + 4 * (r * W0 + c), n * Wd + r * W2p + c] = 1.0

    # conv3 on the dense grid
    taps3 = tuple(kh * W2p + kw for kh in range(3) for kw in range(3))
    L3 = N * Wd - max(taps3)
    H3, W3 = H2p - 2, W2p - 2
    assert (N - 1) * Wd + (H3 - 1) * W2p + (W3 - 1) < L3

    # GAP: pre-transposed (L3, N) averaging matrix over the valid conv3 cells
    avg_t = np.zeros((L3, N), np.float32)
    for n in range(N):
        for r in range(H3):
            for c in range(W3):
                avg_t[n * Wd + r * W2p + c, n] = 1.0 / (H3 * W3)

    return dict(taps1=taps1, L1=L1, ptaps1=ptaps1, L1p=L1p,
                taps2=taps2, L2=L2, ptaps2=ptaps2, L2p=L2p,
                taps3=taps3, L3=L3, gsel=gsel, avg_t=avg_t)


# ----------------------------------------------------------------------------
# Fused forward pass
# ----------------------------------------------------------------------------
@jax.jit
def posecnn_forward(x, params):
    N, Cin, H, W = x.shape
    g = _geometry(N, H, W)
    C1, C2 = params["w1"].shape[0], params["w2"].shape[0]
    n_out = params["wd"].shape[0]

    taps1, L1 = g["taps1"], g["L1"]
    ptaps1, L1p = g["ptaps1"], g["L1p"]
    taps2, L2 = g["taps2"], g["L2"]
    ptaps2, L2p = g["ptaps2"], g["L2p"]
    taps3, L3 = g["taps3"], g["L3"]

    # --- operand layouts ------------------------------------------------------
    x_flat = x.transpose(1, 0, 2, 3).reshape(Cin, N * H * W)   # (1, n*H*W)
    w1f = params["w1"].reshape(C1, 9)                          # col = kh*3 + kw

    def stack(w):  # (Cout, Cin, 3, 3) -> (Cout, 9*Cin), col = (kh*3+kw)*Cin+cin
        return w.transpose(0, 2, 3, 1).reshape(w.shape[0], -1)

    w2s, w3s = stack(params["w2"]), stack(params["w3"])
    b1, b2, b3 = (params[k].reshape(-1, 1) for k in ("b1", "b2", "b3"))
    wd = params["wd"]                                          # (20, 32)
    bd = params["bd"].reshape(-1, 1)                           # (20, 1)
    gsel = jnp.asarray(g["gsel"])                              # (L2p, N*Wd)
    avg_t = jnp.asarray(g["avg_t"])                            # (L3, N)

    # --- the fused kernel -----------------------------------------------------
    def kernel(x_ref, w1_ref, b1_ref, w2_ref, b2_ref, w3_ref, b3_ref,
               gsel_ref, avgt_ref, wd_ref, bd_ref, o_ref, im2_ref, im3_ref):
        f32 = jnp.float32

        # conv1 (Cin=1): 9 VPU broadcast MACs + bias + ReLU.
        x1 = x_ref[...]                                        # (1, N*H*W)
        acc = None
        for k, s in enumerate(taps1):
            part = w1_ref[:, k:k + 1] * x1[:, s:s + L1]        # (C1,1)*(1,L1)
            acc = part if acc is None else acc + part
        a = jnp.maximum(acc + b1_ref[...], 0.0)                # (C1, L1)

        # pool1: 2x2 stride-2 max; result stays embedded at stride 2.
        p = a[:, ptaps1[0]:ptaps1[0] + L1p]
        for d in ptaps1[1:]:
            p = jnp.maximum(p, a[:, d:d + L1p])
        a = p                                                  # (C1, L1p)

        # conv2: stacked-K im2col in VMEM, one (C2, 9*C1) @ (9*C1, L2) matmul.
        # Each unaligned lane shift is consumed exactly once (scratch fill).
        for k, s in enumerate(taps2):
            im2_ref[C1 * k:C1 * (k + 1), :] = a[:, s:s + L2]
        a = jnp.maximum(
            jnp.dot(w2_ref[...], im2_ref[...], preferred_element_type=f32)
            + b2_ref[...], 0.0)                                # (C2, L2)

        # pool2 (embedded stride 4).
        p = a[:, ptaps2[0]:ptaps2[0] + L2p]
        for d in ptaps2[1:]:
            p = jnp.maximum(p, a[:, d:d + L2p])
        a = p                                                  # (C2, L2p)

        # Compaction: one constant 0/1 gather matmul packs the valid pool2
        # cells into dense lanes; conv3 / GAP never see dead lanes.
        dense = jnp.dot(a, gsel_ref[...], preferred_element_type=f32)

        # conv3 on the dense grid: stacked-K im2col + one (C3,9*C2)@(9*C2,L3).
        for k, s in enumerate(taps3):
            im3_ref[C2 * k:C2 * (k + 1), :] = dense[:, s:s + L3]
        a = jnp.maximum(
            jnp.dot(w3_ref[...], im3_ref[...], preferred_element_type=f32)
            + b3_ref[...], 0.0)                                # (C3, L3)

        # GAP, canonical (M,K)@(K,N): (C3, L3) @ (L3, N)  -> (C3, N).
        gap = jnp.dot(a, avgt_ref[...], preferred_element_type=f32)
        # Dense head kept transposed: (n_out, C3) @ (C3, N) + (n_out, 1).
        o_ref[...] = jnp.dot(wd_ref[...], gap,
                             preferred_element_type=f32) + bd_ref[...]

    vmem = lambda: pl.BlockSpec(memory_space=pltpu.MemorySpace.VMEM)
    out_t = pl.pallas_call(
        kernel,
        out_shape=jax.ShapeDtypeStruct((n_out, N), jnp.float32),
        in_specs=[vmem() for _ in range(11)],
        out_specs=vmem(),
        scratch_shapes=[
            pltpu.VMEM((9 * C1, L2), jnp.float32),   # conv2 im2col
            pltpu.VMEM((9 * C2, L3), jnp.float32),   # conv3 im2col (dense grid)
        ],
    )(x_flat, w1f, b1, w2s, b2, w3s, b3, gsel, avg_t, wd, bd)
    return out_t.T                                             # (N, n_out)


# ----------------------------------------------------------------------------
# Pure-JAX reference (mirrors the PyTorch module) for a correctness check
# ----------------------------------------------------------------------------
def _ref_conv(x, w, b):
    y = jax.lax.conv_general_dilated(
        x, w, window_strides=(1, 1), padding="VALID",
        dimension_numbers=("NCHW", "OIHW", "NCHW"),
    )
    return y + b.reshape(1, -1, 1, 1)


def _ref_pool(x):
    return jax.lax.reduce_window(
        x, -jnp.inf, jax.lax.max, (1, 1, 2, 2), (1, 1, 2, 2), "VALID"
    )


def posecnn_reference(x, p):
    x = jax.nn.relu(_ref_conv(x, p["w1"], p["b1"]))
    x = _ref_pool(x)
    x = jax.nn.relu(_ref_conv(x, p["w2"], p["b2"]))
    x = _ref_pool(x)
    x = jax.nn.relu(_ref_conv(x, p["w3"], p["b3"]))
    gap = jnp.mean(x, axis=(2, 3))
    return gap @ p["wd"].T + p["bd"]


# ----------------------------------------------------------------------------
# Main
# ----------------------------------------------------------------------------
def init_params(key):
    ks = jax.random.split(key, 8)

    def conv_w(k, cout, cin):
        fan_in = cin * 9
        return jax.random.normal(k, (cout, cin, 3, 3), jnp.float32) / np.sqrt(fan_in)

    return {
        "w1": conv_w(ks[0], 8, 1),
        "b1": 0.01 * jax.random.normal(ks[1], (8,), jnp.float32),
        "w2": conv_w(ks[2], 16, 8),
        "b2": 0.01 * jax.random.normal(ks[3], (16,), jnp.float32),
        "w3": conv_w(ks[4], 32, 16),
        "b3": 0.01 * jax.random.normal(ks[5], (32,), jnp.float32),
        "wd": jax.random.normal(ks[6], (20, 32), jnp.float32) / np.sqrt(32.0),
        "bd": 0.01 * jax.random.normal(ks[7], (20,), jnp.float32),
    }


if __name__ == "__main__":
    key = jax.random.PRNGKey(0)
    k_x, k_p = jax.random.split(key)

    # Input: batch=2, channels=1, spatial=32x32  (32 -> 30 -> 15 -> 13 -> 6 -> 4)
    x = jax.random.normal(k_x, (2, 1, 32, 32), jnp.float32)
    params = init_params(k_p)

    out = jax.block_until_ready(posecnn_forward(x, params))
    assert out.shape == (2, 20), out.shape

    ref = jax.block_until_ready(posecnn_reference(x, params))
    # Tolerance sized for default (single-pass bf16) MXU precision vs f32 ref.
    if not np.allclose(np.asarray(out), np.asarray(ref), rtol=5e-2, atol=1e-2):
        raise AssertionError("Pallas output does not match JAX reference")

    print("KERNEL_OK")
</pallas_src>

<mosaic_0001>
module attributes {stable_mosaic.version = 11 : i64} {
  func.func @kernel(%arg0: memref<1x2048xf32, #tpu.memory_space<vmem>>, %arg1: memref<8x9xf32, #tpu.memory_space<vmem>>, %arg2: memref<8x1xf32, #tpu.memory_space<vmem>>, %arg3: memref<16x72xf32, #tpu.memory_space<vmem>>, %arg4: memref<16x1xf32, #tpu.memory_space<vmem>>, %arg5: memref<32x144xf32, #tpu.memory_space<vmem>>, %arg6: memref<32x1xf32, #tpu.memory_space<vmem>>, %arg7: memref<1751x72xf32, #tpu.memory_space<vmem>>, %arg8: memref<58x2xf32, #tpu.memory_space<vmem>>, %arg9: memref<20x32xf32, #tpu.memory_space<vmem>>, %arg10: memref<20x1xf32, #tpu.memory_space<vmem>>, %arg11: memref<20x2xf32, #tpu.memory_space<vmem>>, %arg12: memref<72x1817xf32, #tpu.memory_space<vmem>>, %arg13: memref<144x58xf32, #tpu.memory_space<vmem>>) attributes {dimension_semantics = [], scalar_prefetch = 0 : i64, scratch_operands = 2 : i64, tpu.core_type = #tpu.core_type<tc>} {
    %c0 = arith.constant 0 : index
    %c0_0 = arith.constant 0 : index
    %0 = vector.load %arg0[%c0, %c0_0] : memref<1x2048xf32, #tpu.memory_space<vmem>>, vector<1x2048xf32>
    %c0_1 = arith.constant 0 : index
    %c0_2 = arith.constant 0 : index
    %1 = vector.load %arg1[%c0_1, %c0_2] : memref<8x9xf32, #tpu.memory_space<vmem>>, vector<8x1xf32>
    %2 = vector.extract_strided_slice %0 {offsets = [0, 0], sizes = [1, 1982], strides = [1, 1]} : vector<1x2048xf32> to vector<1x1982xf32>
    %3 = vector.broadcast %1 : vector<8x1xf32> to vector<8x1982xf32>
    %4 = vector.broadcast %2 : vector<1x1982xf32> to vector<8x1982xf32>
    %5 = arith.mulf %3, %4 : vector<8x1982xf32>
    %c0_3 = arith.constant 0 : index
    %c1 = arith.constant 1 : index
    %6 = vector.load %arg1[%c0_3, %c1] : memref<8x9xf32, #tpu.memory_space<vmem>>, vector<8x1xf32>
    %7 = vector.extract_strided_slice %0 {offsets = [0, 1], sizes = [1, 1982], strides = [1, 1]} : vector<1x2048xf32> to vector<1x1982xf32>
    %8 = vector.broadcast %6 : vector<8x1xf32> to vector<8x1982xf32>
    %9 = vector.broadcast %7 : vector<1x1982xf32> to vector<8x1982xf32>
    %10 = arith.mulf %8, %9 : vector<8x1982xf32>
    %11 = arith.addf %5, %10 : vector<8x1982xf32>
    %c0_4 = arith.constant 0 : index
    %c2 = arith.constant 2 : index
    %12 = vector.load %arg1[%c0_4, %c2] : memref<8x9xf32, #tpu.memory_space<vmem>>, vector<8x1xf32>
    %13 = vector.extract_strided_slice %0 {offsets = [0, 2], sizes = [1, 1982], strides = [1, 1]} : vector<1x2048xf32> to vector<1x1982xf32>
    %14 = vector.broadcast %12 : vector<8x1xf32> to vector<8x1982xf32>
    %15 = vector.broadcast %13 : vector<1x1982xf32> to vector<8x1982xf32>
    %16 = arith.mulf %14, %15 : vector<8x1982xf32>
    %17 = arith.addf %11, %16 : vector<8x1982xf32>
    %c0_5 = arith.constant 0 : index
    %c3 = arith.constant 3 : index
    %18 = vector.load %arg1[%c0_5, %c3] : memref<8x9xf32, #tpu.memory_space<vmem>>, vector<8x1xf32>
    %19 = vector.extract_strided_slice %0 {offsets = [0, 32], sizes = [1, 1982], strides = [1, 1]} : vector<1x2048xf32> to vector<1x1982xf32>
    %20 = vector.broadcast %18 : vector<8x1xf32> to vector<8x1982xf32>
    %21 = vector.broadcast %19 : vector<1x1982xf32> to vector<8x1982xf32>
    %22 = arith.mulf %20, %21 : vector<8x1982xf32>
    %23 = arith.addf %17, %22 : vector<8x1982xf32>
    %c0_6 = arith.constant 0 : index
    %c4 = arith.constant 4 : index
    %24 = vector.load %arg1[%c0_6, %c4] : memref<8x9xf32, #tpu.memory_space<vmem>>, vector<8x1xf32>
    %25 = vector.extract_strided_slice %0 {offsets = [0, 33], sizes = [1, 1982], strides = [1, 1]} : vector<1x2048xf32> to vector<1x1982xf32>
    %26 = vector.broadcast %24 : vector<8x1xf32> to vector<8x1982xf32>
    %27 = vector.broadcast %25 : vector<1x1982xf32> to vector<8x1982xf32>
    %28 = arith.mulf %26, %27 : vector<8x1982xf32>
    %29 = arith.addf %23, %28 : vector<8x1982xf32>
    %c0_7 = arith.constant 0 : index
    %c5 = arith.constant 5 : index
    %30 = vector.load %arg1[%c0_7, %c5] : memref<8x9xf32, #tpu.memory_space<vmem>>, vector<8x1xf32>
    %31 = vector.extract_strided_slice %0 {offsets = [0, 34], sizes = [1, 1982], strides = [1, 1]} : vector<1x2048xf32> to vector<1x1982xf32>
    %32 = vector.broadcast %30 : vector<8x1xf32> to vector<8x1982xf32>
    %33 = vector.broadcast %31 : vector<1x1982xf32> to vector<8x1982xf32>
    %34 = arith.mulf %32, %33 : vector<8x1982xf32>
    %35 = arith.addf %29, %34 : vector<8x1982xf32>
    %c0_8 = arith.constant 0 : index
    %c6 = arith.constant 6 : index
    %36 = vector.load %arg1[%c0_8, %c6] : memref<8x9xf32, #tpu.memory_space<vmem>>, vector<8x1xf32>
    %37 = vector.extract_strided_slice %0 {offsets = [0, 64], sizes = [1, 1982], strides = [1, 1]} : vector<1x2048xf32> to vector<1x1982xf32>
    %38 = vector.broadcast %36 : vector<8x1xf32> to vector<8x1982xf32>
    %39 = vector.broadcast %37 : vector<1x1982xf32> to vector<8x1982xf32>
    %40 = arith.mulf %38, %39 : vector<8x1982xf32>
    %41 = arith.addf %35, %40 : vector<8x1982xf32>
    %c0_9 = arith.constant 0 : index
    %c7 = arith.constant 7 : index
    %42 = vector.load %arg1[%c0_9, %c7] : memref<8x9xf32, #tpu.memory_space<vmem>>, vector<8x1xf32>
    %43 = vector.extract_strided_slice %0 {offsets = [0, 65], sizes = [1, 1982], strides = [1, 1]} : vector<1x2048xf32> to vector<1x1982xf32>
    %44 = vector.broadcast %42 : vector<8x1xf32> to vector<8x1982xf32>
    %45 = vector.broadcast %43 : vector<1x1982xf32> to vector<8x1982xf32>
    %46 = arith.mulf %44, %45 : vector<8x1982xf32>
    %47 = arith.addf %41, %46 : vector<8x1982xf32>
    %c0_10 = arith.constant 0 : index
    %c8 = arith.constant 8 : index
    %48 = vector.load %arg1[%c0_10, %c8] : memref<8x9xf32, #tpu.memory_space<vmem>>, vector<8x1xf32>
    %49 = vector.extract_strided_slice %0 {offsets = [0, 66], sizes = [1, 1982], strides = [1, 1]} : vector<1x2048xf32> to vector<1x1982xf32>
    %50 = vector.broadcast %48 : vector<8x1xf32> to vector<8x1982xf32>
    %51 = vector.broadcast %49 : vector<1x1982xf32> to vector<8x1982xf32>
    %52 = arith.mulf %50, %51 : vector<8x1982xf32>
    %53 = arith.addf %47, %52 : vector<8x1982xf32>
    %c0_11 = arith.constant 0 : index
    %c0_12 = arith.constant 0 : index
    %54 = vector.load %arg2[%c0_11, %c0_12] : memref<8x1xf32, #tpu.memory_space<vmem>>, vector<8x1xf32>
    %55 = vector.broadcast %54 : vector<8x1xf32> to vector<8x1982xf32>
    %56 = arith.addf %53, %55 : vector<8x1982xf32>
    %cst = arith.constant 0.000000e+00 : f32
    %57 = vector.broadcast %cst : f32 to vector<8x1982xf32>
    %58 = arith.maximumf %56, %57 : vector<8x1982xf32>
    %59 = vector.extract_strided_slice %58 {offsets = [0, 0], sizes = [8, 1949], strides = [1, 1]} : vector<8x1982xf32> to vector<8x1949xf32>
    %60 = vector.extract_strided_slice %58 {offsets = [0, 1], sizes = [8, 1949], strides = [1, 1]} : vector<8x1982xf32> to vector<8x1949xf32>
    %61 = arith.maximumf %59, %60 : vector<8x1949xf32>
    %62 = vector.extract_strided_slice %58 {offsets = [0, 32], sizes = [8, 1949], strides = [1, 1]} : vector<8x1982xf32> to vector<8x1949xf32>
    %63 = arith.maximumf %61, %62 : vector<8x1949xf32>
    %64 = vector.extract_strided_slice %58 {offsets = [0, 33], sizes = [8, 1949], strides = [1, 1]} : vector<8x1982xf32> to vector<8x1949xf32>
    %65 = arith.maximumf %63, %64 : vector<8x1949xf32>
    %66 = vector.extract_strided_slice %65 {offsets = [0, 0], sizes = [8, 1817], strides = [1, 1]} : vector<8x1949xf32> to vector<8x1817xf32>
    %c0_13 = arith.constant 0 : index
    %c0_14 = arith.constant 0 : index
    %67 = vector.load %arg12[%c0_13, %c0_14] : memref<72x1817xf32, #tpu.memory_space<vmem>>, vector<8x1817xf32>
    tpu.vector_store %arg12[%c0_13, %c0_14], %66 {strides = array<i32>} : memref<72x1817xf32, #tpu.memory_space<vmem>>, vector<8x1817xf32>,
    %68 = vector.extract_strided_slice %65 {offsets = [0, 2], sizes = [8, 1817], strides = [1, 1]} : vector<8x1949xf32> to vector<8x1817xf32>
    %c8_15 = arith.constant 8 : index
    %c0_16 = arith.constant 0 : index
    %69 = vector.load %arg12[%c8_15, %c0_16] : memref<72x1817xf32, #tpu.memory_space<vmem>>, vector<8x1817xf32>
    tpu.vector_store %arg12[%c8_15, %c0_16], %68 {strides = array<i32>} : memref<72x1817xf32, #tpu.memory_space<vmem>>, vector<8x1817xf32>,
    %70 = vector.extract_strided_slice %65 {offsets = [0, 4], sizes = [8, 1817], strides = [1, 1]} : vector<8x1949xf32> to vector<8x1817xf32>
    %c16 = arith.constant 16 : index
    %c0_17 = arith.constant 0 : index
    %71 = vector.load %arg12[%c16, %c0_17] : memref<72x1817xf32, #tpu.memory_space<vmem>>, vector<8x1817xf32>
    tpu.vector_store %arg12[%c16, %c0_17], %70 {strides = array<i32>} : memref<72x1817xf32, #tpu.memory_space<vmem>>, vector<8x1817xf32>,
    %72 = vector.extract_strided_slice %65 {offsets = [0, 64], sizes = [8, 1817], strides = [1, 1]} : vector<8x1949xf32> to vector<8x1817xf32>
    %c24 = arith.constant 24 : index
    %c0_18 = arith.constant 0 : index
    %73 = vector.load %arg12[%c24, %c0_18] : memref<72x1817xf32, #tpu.memory_space<vmem>>, vector<8x1817xf32>
    tpu.vector_store %arg12[%c24, %c0_18], %72 {strides = array<i32>} : memref<72x1817xf32, #tpu.memory_space<vmem>>, vector<8x1817xf32>,
    %74 = vector.extract_strided_slice %65 {offsets = [0, 66], sizes = [8, 1817], strides = [1, 1]} : vector<8x1949xf32> to vector<8x1817xf32>
    %c32 = arith.constant 32 : index
    %c0_19 = arith.constant 0 : index
    %75 = vector.load %arg12[%c32, %c0_19] : memref<72x1817xf32, #tpu.memory_space<vmem>>, vector<8x1817xf32>
    tpu.vector_store %arg12[%c32, %c0_19], %74 {strides = array<i32>} : memref<72x1817xf32, #tpu.memory_space<vmem>>, vector<8x1817xf32>,
    %76 = vector.extract_strided_slice %65 {offsets = [0, 68], sizes = [8, 1817], strides = [1, 1]} : vector<8x1949xf32> to vector<8x1817xf32>
    %c40 = arith.constant 40 : index
    %c0_20 = arith.constant 0 : index
    %77 = vector.load %arg12[%c40, %c0_20] : memref<72x1817xf32, #tpu.memory_space<vmem>>, vector<8x1817xf32>
    tpu.vector_store %arg12[%c40, %c0_20], %76 {strides = array<i32>} : memref<72x1817xf32, #tpu.memory_space<vmem>>, vector<8x1817xf32>,
    %78 = vector.extract_strided_slice %65 {offsets = [0, 128], sizes = [8, 1817], strides = [1, 1]} : vector<8x1949xf32> to vector<8x1817xf32>
    %c48 = arith.constant 48 : index
    %c0_21 = arith.constant 0 : index
    %79 = vector.load %arg12[%c48, %c0_21] : memref<72x1817xf32, #tpu.memory_space<vmem>>, vector<8x1817xf32>
    tpu.vector_store %arg12[%c48, %c0_21], %78 {strides = array<i32>} : memref<72x1817xf32, #tpu.memory_space<vmem>>, vector<8x1817xf32>,
    %80 = vector.extract_strided_slice %65 {offsets = [0, 130], sizes = [8, 1817], strides = [1, 1]} : vector<8x1949xf32> to vector<8x1817xf32>
    %c56 = arith.constant 56 : index
    %c0_22 = arith.constant 0 : index
    %81 = vector.load %arg12[%c56, %c0_22] : memref<72x1817xf32, #tpu.memory_space<vmem>>, vector<8x1817xf32>
    tpu.vector_store %arg12[%c56, %c0_22], %80 {strides = array<i32>} : memref<72x1817xf32, #tpu.memory_space<vmem>>, vector<8x1817xf32>,
    %82 = vector.extract_strided_slice %65 {offsets = [0, 132], sizes = [8, 1817], strides = [1, 1]} : vector<8x1949xf32> to vector<8x1817xf32>
    %c64 = arith.constant 64 : index
    %c0_23 = arith.constant 0 : index
    %83 = vector.load %arg12[%c64, %c0_23] : memref<72x1817xf32, #tpu.memory_space<vmem>>, vector<8x1817xf32>
    tpu.vector_store %arg12[%c64, %c0_23], %82 {strides = array<i32>} : memref<72x1817xf32, #tpu.memory_space<vmem>>, vector<8x1817xf32>,
    %c0_24 = arith.constant 0 : index
    %c0_25 = arith.constant 0 : index
    %84 = vector.load %arg3[%c0_24, %c0_25] : memref<16x72xf32, #tpu.memory_space<vmem>>, vector<16x72xf32>
    %c0_26 = arith.constant 0 : index
    %c0_27 = arith.constant 0 : index
    %85 = vector.load %arg12[%c0_26, %c0_27] : memref<72x1817xf32, #tpu.memory_space<vmem>>, vector<72x1817xf32>
    %cst_28 = arith.constant dense<0.000000e+00> : vector<16x1817xf32>
    %86 = tpu.matmul %84, %85, %cst_28 {dimension_numbers = #tpu.dot_dimension_numbers<[1], [0], [0], [1], [0, 0, 1, 1], [], []>} : vector<16x72xf32>, vector<72x1817xf32>, vector<16x1817xf32> -> vector<16x1817xf32>
    %c0_29 = arith.constant 0 : index
    %c0_30 = arith.constant 0 : index
    %87 = vector.load %arg4[%c0_29, %c0_30] : memref<16x1xf32, #tpu.memory_space<vmem>>, vector<16x1xf32>
    %88 = vector.broadcast %87 : vector<16x1xf32> to vector<16x1817xf32>
    %89 = arith.addf %86, %88 : vector<16x1817xf32>
    %cst_31 = arith.constant 0.000000e+00 : f32
    %90 = vector.broadcast %cst_31 : f32 to vector<16x1817xf32>
    %91 = arith.maximumf %89, %90 : vector<16x1817xf32>
    %92 = vector.extract_strided_slice %91 {offsets = [0, 0], sizes = [16, 1751], strides = [1, 1]} : vector<16x1817xf32> to vector<16x1751xf32>
    %93 = vector.extract_strided_slice %91 {offsets = [0, 2], sizes = [16, 1751], strides = [1, 1]} : vector<16x1817xf32> to vector<16x1751xf32>
    %94 = arith.maximumf %92, %93 : vector<16x1751xf32>
    %95 = vector.extract_strided_slice %91 {offsets = [0, 64], sizes = [16, 1751], strides = [1, 1]} : vector<16x1817xf32> to vector<16x1751xf32>
    %96 = arith.maximumf %94, %95 : vector<16x1751xf32>
    %97 = vector.extract_strided_slice %91 {offsets = [0, 66], sizes = [16, 1751], strides = [1, 1]} : vector<16x1817xf32> to vector<16x1751xf32>
    %98 = arith.maximumf %96, %97 : vector<16x1751xf32>
    %c0_32 = arith.constant 0 : index
    %c0_33 = arith.constant 0 : index
    %99 = vector.load %arg7[%c0_32, %c0_33] : memref<1751x72xf32, #tpu.memory_space<vmem>>, vector<1751x72xf32>
    %cst_34 = arith.constant dense<0.000000e+00> : vector<16x72xf32>
    %100 = tpu.matmul %98, %99, %cst_34 {dimension_numbers = #tpu.dot_dimension_numbers<[1], [0], [0], [1], [0, 0, 1, 1], [], []>} : vector<16x1751xf32>, vector<1751x72xf32>, vector<16x72xf32> -> vector<16x72xf32>
    %101 = vector.extract_strided_slice %100 {offsets = [0, 0], sizes = [16, 58], strides = [1, 1]} : vector<16x72xf32> to vector<16x58xf32>
    %c0_35 = arith.constant 0 : index
    %c0_36 = arith.constant 0 : index
    %102 = vector.load %arg13[%c0_35, %c0_36] : memref<144x58xf32, #tpu.memory_space<vmem>>, vector<16x58xf32>
    tpu.vector_store %arg13[%c0_35, %c0_36], %101 {strides = array<i32>} : memref<144x58xf32, #tpu.memory_space<vmem>>, vector<16x58xf32>,
    %103 = vector.extract_strided_slice %100 {offsets = [0, 1], sizes = [16, 58], strides = [1, 1]} : vector<16x72xf32> to vector<16x58xf32>
    %c16_37 = arith.constant 16 : index
    %c0_38 = arith.constant 0 : index
    %104 = vector.load %arg13[%c16_37, %c0_38] : memref<144x58xf32, #tpu.memory_space<vmem>>, vector<16x58xf32>
    tpu.vector_store %arg13[%c16_37, %c0_38], %103 {strides = array<i32>} : memref<144x58xf32, #tpu.memory_space<vmem>>, vector<16x58xf32>,
    %105 = vector.extract_strided_slice %100 {offsets = [0, 2], sizes = [16, 58], strides = [1, 1]} : vector<16x72xf32> to vector<16x58xf32>
    %c32_39 = arith.constant 32 : index
    %c0_40 = arith.constant 0 : index
    %106 = vector.load %arg13[%c32_39, %c0_40] : memref<144x58xf32, #tpu.memory_space<vmem>>, vector<16x58xf32>
    tpu.vector_store %arg13[%c32_39, %c0_40], %105 {strides = array<i32>} : memref<144x58xf32, #tpu.memory_space<vmem>>, vector<16x58xf32>,
    %107 = vector.extract_strided_slice %100 {offsets = [0, 6], sizes = [16, 58], strides = [1, 1]} : vector<16x72xf32> to vector<16x58xf32>
    %c48_41 = arith.constant 48 : index
    %c0_42 = arith.constant 0 : index
    %108 = vector.load %arg13[%c48_41, %c0_42] : memref<144x58xf32, #tpu.memory_space<vmem>>, vector<16x58xf32>
    tpu.vector_store %arg13[%c48_41, %c0_42], %107 {strides = array<i32>} : memref<144x58xf32, #tpu.memory_space<vmem>>, vector<16x58xf32>,
    %109 = vector.extract_strided_slice %100 {offsets = [0, 7], sizes = [16, 58], strides = [1, 1]} : vector<16x72xf32> to vector<16x58xf32>
    %c64_43 = arith.constant 64 : index
    %c0_44 = arith.constant 0 : index
    %110 = vector.load %arg13[%c64_43, %c0_44] : memref<144x58xf32, #tpu.memory_space<vmem>>, vector<16x58xf32>
    tpu.vector_store %arg13[%c64_43, %c0_44], %109 {strides = array<i32>} : memref<144x58xf32, #tpu.memory_space<vmem>>, vector<16x58xf32>,
    %111 = vector.extract_strided_slice %100 {offsets = [0, 8], sizes = [16, 58], strides = [1, 1]} : vector<16x72xf32> to vector<16x58xf32>
    %c80 = arith.constant 80 : index
    %c0_45 = arith.constant 0 : index
    %112 = vector.load %arg13[%c80, %c0_45] : memref<144x58xf32, #tpu.memory_space<vmem>>, vector<16x58xf32>
    tpu.vector_store %arg13[%c80, %c0_45], %111 {strides = array<i32>} : memref<144x58xf32, #tpu.memory_space<vmem>>, vector<16x58xf32>,
    %113 = vector.extract_strided_slice %100 {offsets = [0, 12], sizes = [16, 58], strides = [1, 1]} : vector<16x72xf32> to vector<16x58xf32>
    %c96 = arith.constant 96 : index
    %c0_46 = arith.constant 0 : index
    %114 = vector.load %arg13[%c96, %c0_46] : memref<144x58xf32, #tpu.memory_space<vmem>>, vector<16x58xf32>
    tpu.vector_store %arg13[%c96, %c0_46], %113 {strides = array<i32>} : memref<144x58xf32, #tpu.memory_space<vmem>>, vector<16x58xf32>,
    %115 = vector.extract_strided_slice %100 {offsets = [0, 13], sizes = [16, 58], strides = [1, 1]} : vector<16x72xf32> to vector<16x58xf32>
    %c112 = arith.constant 112 : index
    %c0_47 = arith.constant 0 : index
    %116 = vector.load %arg13[%c112, %c0_47] : memref<144x58xf32, #tpu.memory_space<vmem>>, vector<16x58xf32>
    tpu.vector_store %arg13[%c112, %c0_47], %115 {strides = array<i32>} : memref<144x58xf32, #tpu.memory_space<vmem>>, vector<16x58xf32>,
    %117 = vector.extract_strided_slice %100 {offsets = [0, 14], sizes = [16, 58], strides = [1, 1]} : vector<16x72xf32> to vector<16x58xf32>
    %c128 = arith.constant 128 : index
    %c0_48 = arith.constant 0 : index
    %118 = vector.load %arg13[%c128, %c0_48] : memref<144x58xf32, #tpu.memory_space<vmem>>, vector<16x58xf32>
    tpu.vector_store %arg13[%c128, %c0_48], %117 {strides = array<i32>} : memref<144x58xf32, #tpu.memory_space<vmem>>, vector<16x58xf32>,
    %c0_49 = arith.constant 0 : index
    %c0_50 = arith.constant 0 : index
    %119 = vector.load %arg5[%c0_49, %c0_50] : memref<32x144xf32, #tpu.memory_space<vmem>>, vector<32x144xf32>
    %c0_51 = arith.constant 0 : index
    %c0_52 = arith.constant 0 : index
    %120 = vector.load %arg13[%c0_51, %c0_52] : memref<144x58xf32, #tpu.memory_space<vmem>>, vector<144x58xf32>
    %cst_53 = arith.constant dense<0.000000e+00> : vector<32x58xf32>
    %121 = tpu.matmul %119, %120, %cst_53 {dimension_numbers = #tpu.dot_dimension_numbers<[1], [0], [0], [1], [0, 0, 1, 1], [], []>} : vector<32x144xf32>, vector<144x58xf32>, vector<32x58xf32> -> vector<32x58xf32>
    %c0_54 = arith.constant 0 : index
    %c0_55 = arith.constant 0 : index
    %122 = vector.load %arg6[%c0_54, %c0_55] : memref<32x1xf32, #tpu.memory_space<vmem>>, vector<32x1xf32>
    %123 = vector.broadcast %122 : vector<32x1xf32> to vector<32x58xf32>
    %124 = arith.addf %121, %123 : vector<32x58xf32>
    %cst_56 = arith.constant 0.000000e+00 : f32
    %125 = vector.broadcast %cst_56 : f32 to vector<32x58xf32>
    %126 = arith.maximumf %124, %125 : vector<32x58xf32>
    %c0_57 = arith.constant 0 : index
    %c0_58 = arith.constant 0 : index
    %127 = vector.load %arg8[%c0_57, %c0_58] : memref<58x2xf32, #tpu.memory_space<vmem>>, vector<58x2xf32>
    %cst_59 = arith.constant dense<0.000000e+00> : vector<32x2xf32>
    %128 = tpu.matmul %126, %127, %cst_59 {dimension_numbers = #tpu.dot_dimension_numbers<[1], [0], [0], [1], [0, 0, 1, 1], [], []>} : vector<32x58xf32>, vector<58x2xf32>, vector<32x2xf32> -> vector<32x2xf32>
    %c0_60 = arith.constant 0 : index
    %c0_61 = arith.constant 0 : index
    %129 = vector.load %arg9[%c0_60, %c0_61] : memref<20x32xf32, #tpu.memory_space<vmem>>, vector<20x32xf32>
    %cst_62 = arith.constant dense<0.000000e+00> : vector<20x2xf32>
    %130 = tpu.matmul %129, %128, %cst_62 {dimension_numbers = #tpu.dot_dimension_numbers<[1], [0], [0], [1], [0, 0, 1, 1], [], []>} : vector<20x32xf32>, vector<32x2xf32>, vector<20x2xf32> -> vector<20x2xf32>
    %c0_63 = arith.constant 0 : index
    %c0_64 = arith.constant 0 : index
    %131 = vector.load %arg10[%c0_63, %c0_64] : memref<20x1xf32, #tpu.memory_space<vmem>>, vector<20x1xf32>
    %132 = vector.broadcast %131 : vector<20x1xf32> to vector<20x2xf32>
    %133 = arith.addf %130, %132 : vector<20x2xf32>
    %c0_65 = arith.constant 0 : index
    %c0_66 = arith.constant 0 : index
    %134 = vector.load %arg11[%c0_65, %c0_66] : memref<20x2xf32, #tpu.memory_space<vmem>>, vector<20x2xf32>
    tpu.vector_store %arg11[%c0_65, %c0_66], %133 {strides = array<i32>} : memref<20x2xf32, #tpu.memory_space<vmem>>, vector<20x2xf32>,
    return
  }
}

</mosaic_0001>

<llo_original>
// kernel: posecnn_forward.1
$region0: #{posecnn_forward.1}
  #allocation0 [shape = 'u32[]', space=smem, size = 0x4, offset = 0x4, fixed_abs, tag = 'smem constant byte address 0x4 - core index']
  #allocation1 [shape = 'u32[144,128]{1,0:T(1,128)}', space=vmem, size = 0x12000, scoped, tag = 'internal scratch']
  #allocation2 [shape = 'f32[72,1817]{1,0:T(8,128)}', space=vmem, size = 0x87000, scoped, tag = 'scratch operand']
  #allocation3 [shape = 'f32[144,58]{1,0:T(8,128)}', space=vmem, size = 0x12000, scoped, tag = 'scratch operand']
  %s0 = inlined_call_operand.vmem [shape: f32[1,2048], index: 0, kind: input, shape index: {}]
  %s1 = inlined_call_operand.vmem [shape: f32[8,9], index: 1, kind: input, shape index: {}]
  %s2 = inlined_call_operand.vmem [shape: f32[8,1], index: 2, kind: input, shape index: {}]
  %s3 = inlined_call_operand.vmem [shape: f32[16,72], index: 3, kind: input, shape index: {}]
  %s4 = inlined_call_operand.vmem [shape: f32[16,1], index: 4, kind: input, shape index: {}]
  %s5 = inlined_call_operand.vmem [shape: f32[32,144], index: 5, kind: input, shape index: {}]
  %s6 = inlined_call_operand.vmem [shape: f32[32,1], index: 6, kind: input, shape index: {}]
  %s7 = inlined_call_operand.hbm [shape: f32[1751,72], index: 7, kind: input, shape index: {}]
  %s8 = inlined_call_operand.vmem [shape: f32[58,2], index: 8, kind: input, shape index: {}]
  %s9 = inlined_call_operand.vmem [shape: f32[20,32], index: 9, kind: input, shape index: {}]
  %s10 = inlined_call_operand.vmem [shape: f32[20,1], index: 10, kind: input, shape index: {}]
  %s11 = inlined_call_operand.vmem [shape: f32[20,2], index: 11, kind: output, shape index: {}]
  %s12 = sld [smem:[#allocation0]]
  $region58: #{posecnn_forward.1} parent=0
    _
  %s14 = ssub.s32 1, %s12
  %s15 = scalar_select 0, %s14, %s12
  $region1: #{posecnn_forward.1} parent=0
    #allocation4 [shape = 'u8[897024]{0}', space=vmem, size = 0xdb000, scoped, tag = 'input window, operand 7, single buffered']
    #allocation5 [shape = 's32[1]{0}', space=sflag, size = 0x4, scoped, tag = 'scoped memory for posecnn_forward.1']
    %16 = vsyncpa [#allocation5], 0
    // Predicated region
    $region2: #{posecnn_forward.1} parent=1 // pred_check
      _
    $region3: #{posecnn_forward.1} parent=1 // pred_check_branch
      %18 = sbr.rel (0) target = $region5
    $region4: #{posecnn_forward.1} parent=1 // pred_region
      _
    $region5: #{posecnn_forward.1} parent=1 // pred_fallthru
      _
    // Predicated region
    $region6: #{posecnn_forward.1} parent=1 // pred_check
      _
    $region7: #{posecnn_forward.1} parent=1 // pred_check_branch
      %20 = sbr.rel (0) target = $region9
    $region8: #{posecnn_forward.1} parent=1 // pred_region
      _
    $region9: #{posecnn_forward.1} parent=1 // pred_fallthru
      _
    // Predicated region
    $region10: #{posecnn_forward.1} parent=1 // pred_check
      _
    $region11: #{posecnn_forward.1} parent=1 // pred_check_branch
      %22 = sbr.rel (0) target = $region13
    $region12: #{posecnn_forward.1} parent=1 // pred_region
      _
    $region13: #{posecnn_forward.1} parent=1 // pred_fallthru
      _
    // Predicated region
    $region14: #{posecnn_forward.1} parent=1 // pred_check
      _
    $region15: #{posecnn_forward.1} parent=1 // pred_check_branch
      %24 = sbr.rel (0) target = $region17
    $region16: #{posecnn_forward.1} parent=1 // pred_region
      _
    $region17: #{posecnn_forward.1} parent=1 // pred_fallthru
      _
    // Predicated region
    $region18: #{posecnn_forward.1} parent=1 // pred_check
      _
    $region19: #{posecnn_forward.1} parent=1 // pred_check_branch
      %26 = sbr.rel (0) target = $region21
    $region20: #{posecnn_forward.1} parent=1 // pred_region
      _
    $region21: #{posecnn_forward.1} parent=1 // pred_fallthru
      _
    // Predicated region
    $region22: #{posecnn_forward.1} parent=1 // pred_check
      _
    $region23: #{posecnn_forward.1} parent=1 // pred_check_branch
      %28 = sbr.rel (0) target = $region25
    $region24: #{posecnn_forward.1} parent=1 // pred_region
      _
    $region25: #{posecnn_forward.1} parent=1 // pred_fallthru
      _
    // Predicated region
    $region26: #{posecnn_forward.1} parent=1 // pred_check
      _
    $region27: #{posecnn_forward.1} parent=1 // pred_check_branch
      %30 = sbr.rel (0) target = $region29
    $region28: #{posecnn_forward.1} parent=1 // pred_region
      _
    $region29: #{posecnn_forward.1} parent=1 // pred_fallthru
      _
    // Predicated region
    $region30: #{posecnn_forward.1} parent=1 // pred_check
      _
    $region31: #{posecnn_forward.1} parent=1 // pred_check_branch
      %32 = sbr.rel (0) target = $region33
    $region32: #{posecnn_forward.1} parent=1 // pred_region
      %s34 = ssub.s32 28032, 28032
      %35 = vsyncadd [#allocation5], %s34
      %s36 = sshll.u32 [#allocation4], 4
      %s37 = int_to_ptr.vmem [resolvable:$true] %s36
      %42 = dma.hbm_to_vmem [thread:$0]  %s7, 28032, %s37, [#allocation5], 128, 128, 8
    $region33: #{posecnn_forward.1} parent=1 // pred_fallthru
      _
    // Predicated region
    $region34: #{posecnn_forward.1} parent=1 // pred_check
      _
    $region35: #{posecnn_forward.1} parent=1 // pred_check_branch
      %44 = sbr.rel (0) target = $region37
    $region36: #{posecnn_forward.1} parent=1 // pred_region
      _
    $region37: #{posecnn_forward.1} parent=1 // pred_fallthru
      _
    // Predicated region
    $region38: #{posecnn_forward.1} parent=1 // pred_check
      _
    $region39: #{posecnn_forward.1} parent=1 // pred_check_branch
      %46 = sbr.rel (0) target = $region41
    $region40: #{posecnn_forward.1} parent=1 // pred_region
      _
    $region41: #{posecnn_forward.1} parent=1 // pred_fallthru
      _
    // Predicated region
    $region42: #{posecnn_forward.1} parent=1 // pred_check
      _
    $region43: #{posecnn_forward.1} parent=1 // pred_check_branch
      %48 = sbr.rel (0) target = $region45
    $region44: #{posecnn_forward.1} parent=1 // pred_region
      _
    $region45: #{posecnn_forward.1} parent=1 // pred_fallthru
      _
    // Predicated region
    $region46: #{posecnn_forward.1} parent=1 // pred_check
      _
    $region47: #{posecnn_forward.1} parent=1 // pred_check_branch
      %50 = sbr.rel (0) target = $region49
    $region48: #{posecnn_forward.1} parent=1 // pred_region
      %51 = dma.done [#allocation5], 28032
    $region49: #{posecnn_forward.1} parent=1 // pred_fallthru
      _
    %v52 = vld [vmem:[%s0] sm:$0xff]
    %v53 = vld [vmem:[%s0 + $0x8] sm:$0xff]
    %v54 = vld [vmem:[%s1] sm:$0xff]
    %56 = vset.pattern.permute.xlu0 0
    %57 = vperm.xlu0 %56, %v54
    %v58 = vpop.permute.xlu0 %57
    %v62 = vlaneseq
    %v63 = vshrl.u32 %v62, 7
    %v64 = vsub.s32 0, %v63
    %v65 = vrot.slane %v52, %v64
    %v66 = vlaneseq
    %v67 = vshrl.u32 %v66, 7
    %v68 = vsub.s32 1, %v67
    %v69 = vrot.slane %v52, %v68
    %v70 = vlaneseq
    %v71 = vshrl.u32 %v70, 7
    %v72 = vsub.s32 2, %v71
    %v73 = vrot.slane %v52, %v72
    %v74 = vlaneseq
    %v75 = vshrl.u32 %v74, 7
    %v76 = vsub.s32 3, %v75
    %v77 = vrot.slane %v52, %v76
    %v78 = vlaneseq
    %v79 = vshrl.u32 %v78, 7
    %v80 = vsub.s32 4, %v79
    %v81 = vrot.slane %v52, %v80
    %v82 = vlaneseq
    %v83 = vshrl.u32 %v82, 7
    %v84 = vsub.s32 5, %v83
    %v85 = vrot.slane %v52, %v84
    %v86 = vlaneseq
    %v87 = vshrl.u32 %v86, 7
    %v88 = vsub.s32 6, %v87
    %v89 = vrot.slane %v52, %v88
    %v90 = vlaneseq
    %v91 = vshrl.u32 %v90, 7
    %v92 = vsub.s32 7, %v91
    %v93 = vrot.slane %v52, %v92
    %v94 = vlaneseq
    %v95 = vshrl.u32 %v94, 7
    %v96 = vsub.s32 0, %v95
    %v97 = vrot.slane %v53, %v96
    %v98 = vlaneseq
    %v99 = vshrl.u32 %v98, 7
    %v100 = vsub.s32 1, %v99
    %v101 = vrot.slane %v53, %v100
    %v102 = vlaneseq
    %v103 = vshrl.u32 %v102, 7
    %v104 = vsub.s32 2, %v103
    %v105 = vrot.slane %v53, %v104
    %v106 = vlaneseq
    %v107 = vshrl.u32 %v106, 7
    %v108 = vsub.s32 3, %v107
    %v109 = vrot.slane %v53, %v108
    %v110 = vlaneseq
    %v111 = vshrl.u32 %v110, 7
    %v112 = vsub.s32 4, %v111
    %v113 = vrot.slane %v53, %v112
    %v114 = vlaneseq
    %v115 = vshrl.u32 %v114, 7
    %v116 = vsub.s32 5, %v115
    %v117 = vrot.slane %v53, %v116
    %v118 = vlaneseq
    %v119 = vshrl.u32 %v118, 7
    %v120 = vsub.s32 6, %v119
    %v121 = vrot.slane %v53, %v120
    %v122 = vlaneseq
    %v123 = vshrl.u32 %v122, 7
    %v124 = vsub.s32 7, %v123
    %v125 = vrot.slane %v53, %v124
    %v142 = vmul.f32 %v58, %v65
    %v143 = vmul.f32 %v58, %v69
    %v144 = vmul.f32 %v58, %v73
    %v145 = vmul.f32 %v58, %v77
    %v146 = vmul.f32 %v58, %v81
    %v147 = vmul.f32 %v58, %v85
    %v148 = vmul.f32 %v58, %v89
    %v149 = vmul.f32 %v58, %v93
    %v150 = vmul.f32 %v58, %v97
    %v151 = vmul.f32 %v58, %v101
    %v152 = vmul.f32 %v58, %v105
    %v153 = vmul.f32 %v58, %v109
    %v154 = vmul.f32 %v58, %v113
    %v155 = vmul.f32 %v58, %v117
    %v156 = vmul.f32 %v58, %v121
    %v157 = vmul.f32 %v58, %v125
    %158 = vset.pattern.permute.xlu0 1
    %159 = vperm.xlu0 %158, %v54
    %v160 = vpop.permute.xlu0 %159
    %v162 = vmul.f32 %v160, %v65
    %v163 = vmul.f32 %v160, %v69
    %v164 = vmul.f32 %v160, %v73
    %v165 = vmul.f32 %v160, %v77
    %v166 = vmul.f32 %v160, %v81
    %v167 = vmul.f32 %v160, %v85
    %v168 = vmul.f32 %v160, %v89
    %v169 = vmul.f32 %v160, %v93
    %v170 = vmul.f32 %v160, %v97
    %v171 = vmul.f32 %v160, %v101
    %v172 = vmul.f32 %v160, %v105
    %v173 = vmul.f32 %v160, %v109
    %v174 = vmul.f32 %v160, %v113
    %v175 = vmul.f32 %v160, %v117
    %v176 = vmul.f32 %v160, %v121
    %v177 = vmul.f32 %v160, %v125
    %194 = vrot.lane.b32.xlu0 %v162, 127
    %v195 = vpop.permute.xlu0 %194
    %196 = vrot.lane.b32.xlu0 %v163, 127
    %v197 = vpop.permute.xlu0 %196
    %198 = vrot.lane.b32.xlu0 %v164, 127
    %v199 = vpop.permute.xlu0 %198
    %200 = vrot.lane.b32.xlu0 %v165, 127
    %v201 = vpop.permute.xlu0 %200
    %202 = vrot.lane.b32.xlu0 %v166, 127
    %v203 = vpop.permute.xlu0 %202
    %204 = vrot.lane.b32.xlu0 %v167, 127
    %v205 = vpop.permute.xlu0 %204
    %206 = vrot.lane.b32.xlu0 %v168, 127
    %v207 = vpop.permute.xlu0 %206
    %208 = vrot.lane.b32.xlu0 %v169, 127
    %v209 = vpop.permute.xlu0 %208
    %210 = vrot.lane.b32.xlu0 %v170, 127
    %v211 = vpop.permute.xlu0 %210
    %212 = vrot.lane.b32.xlu0 %v171, 127
    %v213 = vpop.permute.xlu0 %212
    %214 = vrot.lane.b32.xlu0 %v172, 127
    %v215 = vpop.permute.xlu0 %214
    %216 = vrot.lane.b32.xlu0 %v173, 127
    %v217 = vpop.permute.xlu0 %216
    %218 = vrot.lane.b32.xlu0 %v174, 127
    %v219 = vpop.permute.xlu0 %218
    %220 = vrot.lane.b32.xlu0 %v175, 127
    %v221 = vpop.permute.xlu0 %220
    %222 = vrot.lane.b32.xlu0 %v176, 127
    %v223 = vpop.permute.xlu0 %222
    %224 = vrot.lane.b32.xlu0 %v177, 127
    %v225 = vpop.permute.xlu0 %224
    %vm226 = vcmask 1039360
    %v227 = vsel %vm226, %v195, %v197
    %v228 = vsel %vm226, %v197, %v199
    %v229 = vsel %vm226, %v199, %v201
    %v230 = vsel %vm226, %v201, %v203
    %v231 = vsel %vm226, %v203, %v205
    %v232 = vsel %vm226, %v205, %v207
    %v233 = vsel %vm226, %v207, %v209
    %v234 = vsel %vm226, %v209, %v211
    %v235 = vsel %vm226, %v211, %v213
    %v236 = vsel %vm226, %v213, %v215
    %v237 = vsel %vm226, %v215, %v217
    %v238 = vsel %vm226, %v217, %v219
    %v239 = vsel %vm226, %v219, %v221
    %v240 = vsel %vm226, %v221, %v223
    %v241 = vsel %vm226, %v223, %v225
    %v258 = vadd.f32 %v142, %v227
    %v259 = vadd.f32 %v143, %v228
    %v260 = vadd.f32 %v144, %v229
    %v261 = vadd.f32 %v145, %v230
    %v262 = vadd.f32 %v146, %v231
    %v263 = vadd.f32 %v147, %v232
    %v264 = vadd.f32 %v148, %v233
    %v265 = vadd.f32 %v149, %v234
    %v266 = vadd.f32 %v150, %v235
    %v267 = vadd.f32 %v151, %v236
    %v268 = vadd.f32 %v152, %v237
    %v269 = vadd.f32 %v153, %v238
    %v270 = vadd.f32 %v154, %v239
    %v271 = vadd.f32 %v155, %v240
    %v272 = vadd.f32 %v156, %v241
    %v273 = vadd.f32 %v157, %v225
    %274 = vset.pattern.permute.xlu0 2
    %275 = vperm.xlu0 %274, %v54
    %v276 = vpop.permute.xlu0 %275
    %v278 = vmul.f32 %v276, %v65
    %v279 = vmul.f32 %v276, %v69
    %v280 = vmul.f32 %v276, %v73
    %v281 = vmul.f32 %v276, %v77
    %v282 = vmul.f32 %v276, %v81
    %v283 = vmul.f32 %v276, %v85
    %v284 = vmul.f32 %v276, %v89
    %v285 = vmul.f32 %v276, %v93
    %v286 = vmul.f32 %v276, %v97
    %v287 = vmul.f32 %v276, %v101
    %v288 = vmul.f32 %v276, %v105
    %v289 = vmul.f32 %v276, %v109
    %v290 = vmul.f32 %v276, %v113
    %v291 = vmul.f32 %v276, %v117
    %v292 = vmul.f32 %v276, %v121
    %v293 = vmul.f32 %v276, %v125
    %310 = vrot.lane.b32.xlu0 %v278, 126
    %v311 = vpop.permute.xlu0 %310
    %312 = vrot.lane.b32.xlu0 %v279, 126
    %v313 = vpop.permute.xlu0 %312
    %314 = vrot.lane.b32.xlu0 %v280, 126
    %v315 = vpop.permute.xlu0 %314
    %316 = vrot.lane.b32.xlu0 %v281, 126
    %v317 = vpop.permute.xlu0 %316
    %318 = vrot.lane.b32.xlu0 %v282, 126
    %v319 = vpop.permute.xlu0 %318
    %320 = vrot.lane.b32.xlu0 %v283, 126
    %v321 = vpop.permute.xlu0 %320
    %322 = vrot.lane.b32.xlu0 %v284, 126
    %v323 = vpop.permute.xlu0 %322
    %324 = vrot.lane.b32.xlu0 %v285, 126
    %v325 = vpop.permute.xlu0 %324
    %326 = vrot.lane.b32.xlu0 %v286, 126
    %v327 = vpop.permute.xlu0 %326
    %328 = vrot.lane.b32.xlu0 %v287, 126
    %v329 = vpop.permute.xlu0 %328
    %330 = vrot.lane.b32.xlu0 %v288, 126
    %v331 = vpop.permute.xlu0 %330
    %332 = vrot.lane.b32.xlu0 %v289, 126
    %v333 = vpop.permute.xlu0 %332
    %334 = vrot.lane.b32.xlu0 %v290, 126
    %v335 = vpop.permute.xlu0 %334
    %336 = vrot.lane.b32.xlu0 %v291, 126
    %v337 = vpop.permute.xlu0 %336
    %338 = vrot.lane.b32.xlu0 %v292, 126
    %v339 = vpop.permute.xlu0 %338
    %340 = vrot.lane.b32.xlu0 %v293, 126
    %v341 = vpop.permute.xlu0 %340
    %vm342 = vcmask 1031168
    %v343 = vsel %vm342, %v311, %v313
    %v344 = vsel %vm342, %v313, %v315
    %v345 = vsel %vm342, %v315, %v317
    %v346 = vsel %vm342, %v317, %v319
    %v347 = vsel %vm342, %v319, %v321
    %v348 = vsel %vm342, %v321, %v323
    %v349 = vsel %vm342, %v323, %v325
    %v350 = vsel %vm342, %v325, %v327
    %v351 = vsel %vm342, %v327, %v329
    %v352 = vsel %vm342, %v329, %v331
    %v353 = vsel %vm342, %v331, %v333
    %v354 = vsel %vm342, %v333, %v335
    %v355 = vsel %vm342, %v335, %v337
    %v356 = vsel %vm342, %v337, %v339
    %v357 = vsel %vm342, %v339, %v341
    %v374 = vadd.f32 %v258, %v343
    %v375 = vadd.f32 %v259, %v344
    %v376 = vadd.f32 %v260, %v345
    %v377 = vadd.f32 %v261, %v346
    %v378 = vadd.f32 %v262, %v347
    %v379 = vadd.f32 %v263, %v348
    %v380 = vadd.f32 %v264, %v349
    %v381 = vadd.f32 %v265, %v350
    %v382 = vadd.f32 %v266, %v351
    %v383 = vadd.f32 %v267, %v352
    %v384 = vadd.f32 %v268, %v353
    %v385 = vadd.f32 %v269, %v354
    %v386 = vadd.f32 %v270, %v355
    %v387 = vadd.f32 %v271, %v356
    %v388 = vadd.f32 %v272, %v357
    %v389 = vadd.f32 %v273, %v341
    %390 = vset.pattern.permute.xlu0 3
    %391 = vperm.xlu0 %390, %v54
    %v392 = vpop.permute.xlu0 %391
    %v394 = vmul.f32 %v392, %v65
    %v395 = vmul.f32 %v392, %v69
    %v396 = vmul.f32 %v392, %v73
    %v397 = vmul.f32 %v392, %v77
    %v398 = vmul.f32 %v392, %v81
    %v399 = vmul.f32 %v392, %v85
    %v400 = vmul.f32 %v392, %v89
    %v401 = vmul.f32 %v392, %v93
    %v402 = vmul.f32 %v392, %v97
    %v403 = vmul.f32 %v392, %v101
    %v404 = vmul.f32 %v392, %v105
    %v405 = vmul.f32 %v392, %v109
    %v406 = vmul.f32 %v392, %v113
    %v407 = vmul.f32 %v392, %v117
    %v408 = vmul.f32 %v392, %v121
    %v409 = vmul.f32 %v392, %v125
    %426 = vrot.lane.b32.xlu0 %v394, 96
    %v427 = vpop.permute.xlu0 %426
    %428 = vrot.lane.b32.xlu0 %v395, 96
    %v429 = vpop.permute.xlu0 %428
    %430 = vrot.lane.b32.xlu0 %v396, 96
    %v431 = vpop.permute.xlu0 %430
    %432 = vrot.lane.b32.xlu0 %v397, 96
    %v433 = vpop.permute.xlu0 %432
    %434 = vrot.lane.b32.xlu0 %v398, 96
    %v435 = vpop.permute.xlu0 %434
    %436 = vrot.lane.b32.xlu0 %v399, 96
    %v437 = vpop.permute.xlu0 %436
    %438 = vrot.lane.b32.xlu0 %v400, 96
    %v439 = vpop.permute.xlu0 %438
    %440 = vrot.lane.b32.xlu0 %v401, 96
    %v441 = vpop.permute.xlu0 %440
    %442 = vrot.lane.b32.xlu0 %v402, 96
    %v443 = vpop.permute.xlu0 %442
    %444 = vrot.lane.b32.xlu0 %v403, 96
    %v445 = vpop.permute.xlu0 %444
    %446 = vrot.lane.b32.xlu0 %v404, 96
    %v447 = vpop.permute.xlu0 %446
    %448 = vrot.lane.b32.xlu0 %v405, 96
    %v449 = vpop.permute.xlu0 %448
    %450 = vrot.lane.b32.xlu0 %v406, 96
    %v451 = vpop.permute.xlu0 %450
    %452 = vrot.lane.b32.xlu0 %v407, 96
    %v453 = vpop.permute.xlu0 %452
    %454 = vrot.lane.b32.xlu0 %v408, 96
    %v455 = vpop.permute.xlu0 %454
    %456 = vrot.lane.b32.xlu0 %v409, 96
    %v457 = vpop.permute.xlu0 %456
    %vm458 = vcmask 785408
    %v459 = vsel %vm458, %v427, %v429
    %v460 = vsel %vm458, %v429, %v431
    %v461 = vsel %vm458, %v431, %v433
    %v462 = vsel %vm458, %v433, %v435
    %v463 = vsel %vm458, %v435, %v437
    %v464 = vsel %vm458, %v437, %v439
    %v465 = vsel %vm458, %v439, %v441
    %v466 = vsel %vm458, %v441, %v443
    %v467 = vsel %vm458, %v443, %v445
    %v468 = vsel %vm458, %v445, %v447
    %v469 = vsel %vm458, %v447, %v449
    %v470 = vsel %vm458, %v449, %v451
    %v471 = vsel %vm458, %v451, %v453
    %v472 = vsel %vm458, %v453, %v455
    %v473 = vsel %vm458, %v455, %v457
    %v490 = vadd.f32 %v374, %v459
    %v491 = vadd.f32 %v375, %v460
    %v492 = vadd.f32 %v376, %v461
    %v493 = vadd.f32 %v377, %v462
    %v494 = vadd.f32 %v378, %v463
    %v495 = vadd.f32 %v379, %v464
    %v496 = vadd.f32 %v380, %v465
    %v497 = vadd.f32 %v381, %v466
    %v498 = vadd.f32 %v382, %v467
    %v499 = vadd.f32 %v383, %v468
    %v500 = vadd.f32 %v384, %v469
    %v501 = vadd.f32 %v385, %v470
    %v502 = vadd.f32 %v386, %v471
    %v503 = vadd.f32 %v387, %v472
    %v504 = vadd.f32 %v388, %v473
    %v505 = vadd.f32 %v389, %v457
    %506 = vset.pattern.permute.xlu0 4
    %507 = vperm.xlu0 %506, %v54
    %v508 = vpop.permute.xlu0 %507
    %v510 = vmul.f32 %v508, %v65
    %v511 = vmul.f32 %v508, %v69
    %v512 = vmul.f32 %v508, %v73
    %v513 = vmul.f32 %v508, %v77
    %v514 = vmul.f32 %v508, %v81
    %v515 = vmul.f32 %v508, %v85
    %v516 = vmul.f32 %v508, %v89
    %v517 = vmul.f32 %v508, %v93
    %v518 = vmul.f32 %v508, %v97
    %v519 = vmul.f32 %v508, %v101
    %v520 = vmul.f32 %v508, %v105
    %v521 = vmul.f32 %v508, %v109
    %v522 = vmul.f32 %v508, %v113
    %v523 = vmul.f32 %v508, %v117
    %v524 = vmul.f32 %v508, %v121
    %v525 = vmul.f32 %v508, %v125
    %542 = vrot.lane.b32.xlu0 %v510, 95
    %v543 = vpop.permute.xlu0 %542
    %544 = vrot.lane.b32.xlu0 %v511, 95
    %v545 = vpop.permute.xlu0 %544
    %546 = vrot.lane.b32.xlu0 %v512, 95
    %v547 = vpop.permute.xlu0 %546
    %548 = vrot.lane.b32.xlu0 %v513, 95
    %v549 = vpop.permute.xlu0 %548
    %550 = vrot.lane.b32.xlu0 %v514, 95
    %v551 = vpop.permute.xlu0 %550
    %552 = vrot.lane.b32.xlu0 %v515, 95
    %v553 = vpop.permute.xlu0 %552
    %554 = vrot.lane.b32.xlu0 %v516, 95
    %v555 = vpop.permute.xlu0 %554
    %556 = vrot.lane.b32.xlu0 %v517, 95
    %v557 = vpop.permute.xlu0 %556
    %558 = vrot.lane.b32.xlu0 %v518, 95
    %v559 = vpop.permute.xlu0 %558
    %560 = vrot.lane.b32.xlu0 %v519, 95
    %v561 = vpop.permute.xlu0 %560
    %562 = vrot.lane.b32.xlu0 %v520, 95
    %v563 = vpop.permute.xlu0 %562
    %564 = vrot.lane.b32.xlu0 %v521, 95
    %v565 = vpop.permute.xlu0 %564
    %566 = vrot.lane.b32.xlu0 %v522, 95
    %v567 = vpop.permute.xlu0 %566
    %568 = vrot.lane.b32.xlu0 %v523, 95
    %v569 = vpop.permute.xlu0 %568
    %570 = vrot.lane.b32.xlu0 %v524, 95
    %v571 = vpop.permute.xlu0 %570
    %572 = vrot.lane.b32.xlu0 %v525, 95
    %v573 = vpop.permute.xlu0 %572
    %vm574 = vcmask 777216
    %v575 = vsel %vm574, %v543, %v545
    %v576 = vsel %vm574, %v545, %v547
    %v577 = vsel %vm574, %v547, %v549
    %v578 = vsel %vm574, %v549, %v551
    %v579 = vsel %vm574, %v551, %v553
    %v580 = vsel %vm574, %v553, %v555
    %v581 = vsel %vm574, %v555, %v557
    %v582 = vsel %vm574, %v557, %v559
    %v583 = vsel %vm574, %v559, %v561
    %v584 = vsel %vm574, %v561, %v563
    %v585 = vsel %vm574, %v563, %v565
    %v586 = vsel %vm574, %v565, %v567
    %v587 = vsel %vm574, %v567, %v569
    %v588 = vsel %vm574, %v569, %v571
    %v589 = vsel %vm574, %v571, %v573
    %v606 = vadd.f32 %v490, %v575
    %v607 = vadd.f32 %v491, %v576
    %v608 = vadd.f32 %v492, %v577
    %v609 = vadd.f32 %v493, %v578
    %v610 = vadd.f32 %v494, %v579
    %v611 = vadd.f32 %v495, %v580
    %v612 = vadd.f32 %v496, %v581
    %v613 = vadd.f32 %v497, %v582
    %v614 = vadd.f32 %v498, %v583
    %v615 = vadd.f32 %v499, %v584
    %v616 = vadd.f32 %v500, %v585
    %v617 = vadd.f32 %v501, %v586
    %v618 = vadd.f32 %v502, %v587
    %v619 = vadd.f32 %v503, %v588
    %v620 = vadd.f32 %v504, %v589
    %v621 = vadd.f32 %v505, %v573
    %622 = vset.pattern.permute.xlu0 5
    %623 = vperm.xlu0 %622, %v54
    %v624 = vpop.permute.xlu0 %623
    %v626 = vmul.f32 %v624, %v65
    %v627 = vmul.f32 %v624, %v69
    %v628 = vmul.f32 %v624, %v73
    %v629 = vmul.f32 %v624, %v77
    %v630 = vmul.f32 %v624, %v81
    %v631 = vmul.f32 %v624, %v85
    %v632 = vmul.f32 %v624, %v89
    %v633 = vmul.f32 %v624, %v93
    %v634 = vmul.f32 %v624, %v97
    %v635 = vmul.f32 %v624, %v101
    %v636 = vmul.f32 %v624, %v105
    %v637 = vmul.f32 %v624, %v109
    %v638 = vmul.f32 %v624, %v113
    %v639 = vmul.f32 %v624, %v117
    %v640 = vmul.f32 %v624, %v121
    %v641 = vmul.f32 %v624, %v125
    %658 = vrot.lane.b32.xlu0 %v626, 94
    %v659 = vpop.permute.xlu0 %658
    %660 = vrot.lane.b32.xlu0 %v627, 94
    %v661 = vpop.permute.xlu0 %660
    %662 = vrot.lane.b32.xlu0 %v628, 94
    %v663 = vpop.permute.xlu0 %662
    %664 = vrot.lane.b32.xlu0 %v629, 94
    %v665 = vpop.permute.xlu0 %664
    %666 = vrot.lane.b32.xlu0 %v630, 94
    %v667 = vpop.permute.xlu0 %666
    %668 = vrot.lane.b32.xlu0 %v631, 94
    %v669 = vpop.permute.xlu0 %668
    %670 = vrot.lane.b32.xlu0 %v632, 94
    %v671 = vpop.permute.xlu0 %670
    %672 = vrot.lane.b32.xlu0 %v633, 94
    %v673 = vpop.permute.xlu0 %672
    %674 = vrot.lane.b32.xlu0 %v634, 94
    %v675 = vpop.permute.xlu0 %674
    %676 = vrot.lane.b32.xlu0 %v635, 94
    %v677 = vpop.permute.xlu0 %676
    %678 = vrot.lane.b32.xlu0 %v636, 94
    %v679 = vpop.permute.xlu0 %678
    %680 = vrot.lane.b32.xlu0 %v637, 94
    %v681 = vpop.permute.xlu0 %680
    %682 = vrot.lane.b32.xlu0 %v638, 94
    %v683 = vpop.permute.xlu0 %682
    %684 = vrot.lane.b32.xlu0 %v639, 94
    %v685 = vpop.permute.xlu0 %684
    %686 = vrot.lane.b32.xlu0 %v640, 94
    %v687 = vpop.permute.xlu0 %686
    %688 = vrot.lane.b32.xlu0 %v641, 94
    %v689 = vpop.permute.xlu0 %688
    %vm690 = vcmask 769024
    %v691 = vsel %vm690, %v659, %v661
    %v692 = vsel %vm690, %v661, %v663
    %v693 = vsel %vm690, %v663, %v665
    %v694 = vsel %vm690, %v665, %v667
    %v695 = vsel %vm690, %v667, %v669
    %v696 = vsel %vm690, %v669, %v671
    %v697 = vsel %vm690, %v671, %v673
    %v698 = vsel %vm690, %v673, %v675
    %v699 = vsel %vm690, %v675, %v677
    %v700 = vsel %vm690, %v677, %v679
    %v701 = vsel %vm690, %v679, %v681
    %v702 = vsel %vm690, %v681, %v683
    %v703 = vsel %vm690, %v683, %v685
    %v704 = vsel %vm690, %v685, %v687
    %v705 = vsel %vm690, %v687, %v689
    %v722 = vadd.f32 %v606, %v691
    %v723 = vadd.f32 %v607, %v692
    %v724 = vadd.f32 %v608, %v693
    %v725 = vadd.f32 %v609, %v694
    %v726 = vadd.f32 %v610, %v695
    %v727 = vadd.f32 %v611, %v696
    %v728 = vadd.f32 %v612, %v697
    %v729 = vadd.f32 %v613, %v698
    %v730 = vadd.f32 %v614, %v699
    %v731 = vadd.f32 %v615, %v700
    %v732 = vadd.f32 %v616, %v701
    %v733 = vadd.f32 %v617, %v702
    %v734 = vadd.f32 %v618, %v703
    %v735 = vadd.f32 %v619, %v704
    %v736 = vadd.f32 %v620, %v705
    %v737 = vadd.f32 %v621, %v689
    %738 = vset.pattern.permute.xlu0 6
    %739 = vperm.xlu0 %738, %v54
    %v740 = vpop.permute.xlu0 %739
    %v742 = vmul.f32 %v740, %v65
    %v743 = vmul.f32 %v740, %v69
    %v744 = vmul.f32 %v740, %v73
    %v745 = vmul.f32 %v740, %v77
    %v746 = vmul.f32 %v740, %v81
    %v747 = vmul.f32 %v740, %v85
    %v748 = vmul.f32 %v740, %v89
    %v749 = vmul.f32 %v740, %v93
    %v750 = vmul.f32 %v740, %v97
    %v751 = vmul.f32 %v740, %v101
    %v752 = vmul.f32 %v740, %v105
    %v753 = vmul.f32 %v740, %v109
    %v754 = vmul.f32 %v740, %v113
    %v755 = vmul.f32 %v740, %v117
    %v756 = vmul.f32 %v740, %v121
    %v757 = vmul.f32 %v740, %v125
    %774 = vrot.lane.b32.xlu0 %v742, 64
    %v775 = vpop.permute.xlu0 %774
    %776 = vrot.lane.b32.xlu0 %v743, 64
    %v777 = vpop.permute.xlu0 %776
    %778 = vrot.lane.b32.xlu0 %v744, 64
    %v779 = vpop.permute.xlu0 %778
    %780 = vrot.lane.b32.xlu0 %v745, 64
    %v781 = vpop.permute.xlu0 %780
    %782 = vrot.lane.b32.xlu0 %v746, 64
    %v783 = vpop.permute.xlu0 %782
    %784 = vrot.lane.b32.xlu0 %v747, 64
    %v785 = vpop.permute.xlu0 %784
    %786 = vrot.lane.b32.xlu0 %v748, 64
    %v787 = vpop.permute.xlu0 %786
    %788 = vrot.lane.b32.xlu0 %v749, 64
    %v789 = vpop.permute.xlu0 %788
    %790 = vrot.lane.b32.xlu0 %v750, 64
    %v791 = vpop.permute.xlu0 %790
    %792 = vrot.lane.b32.xlu0 %v751, 64
    %v793 = vpop.permute.xlu0 %792
    %794 = vrot.lane.b32.xlu0 %v752, 64
    %v795 = vpop.permute.xlu0 %794
    %796 = vrot.lane.b32.xlu0 %v753, 64
    %v797 = vpop.permute.xlu0 %796
    %798 = vrot.lane.b32.xlu0 %v754, 64
    %v799 = vpop.permute.xlu0 %798
    %800 = vrot.lane.b32.xlu0 %v755, 64
    %v801 = vpop.permute.xlu0 %800
    %802 = vrot.lane.b32.xlu0 %v756, 64
    %v803 = vpop.permute.xlu0 %802
    %804 = vrot.lane.b32.xlu0 %v757, 64
    %v805 = vpop.permute.xlu0 %804
    %vm806 = vcmask 523264
    %v807 = vsel %vm806, %v775, %v777
    %v808 = vsel %vm806, %v777, %v779
    %v809 = vsel %vm806, %v779, %v781
    %v810 = vsel %vm806, %v781, %v783
    %v811 = vsel %vm806, %v783, %v785
    %v812 = vsel %vm806, %v785, %v787
    %v813 = vsel %vm806, %v787, %v789
    %v814 = vsel %vm806, %v789, %v791
    %v815 = vsel %vm806, %v791, %v793
    %v816 = vsel %vm806, %v793, %v795
    %v817 = vsel %vm806, %v795, %v797
    %v818 = vsel %vm806, %v797, %v799
    %v819 = vsel %vm806, %v799, %v801
    %v820 = vsel %vm806, %v801, %v803
    %v821 = vsel %vm806, %v803, %v805
    %v838 = vadd.f32 %v722, %v807
    %v839 = vadd.f32 %v723, %v808
    %v840 = vadd.f32 %v724, %v809
    %v841 = vadd.f32 %v725, %v810
    %v842 = vadd.f32 %v726, %v811
    %v843 = vadd.f32 %v727, %v812
    %v844 = vadd.f32 %v728, %v813
    %v845 = vadd.f32 %v729, %v814
    %v846 = vadd.f32 %v730, %v815
    %v847 = vadd.f32 %v731, %v816
    %v848 = vadd.f32 %v732, %v817
    %v849 = vadd.f32 %v733, %v818
    %v850 = vadd.f32 %v734, %v819
    %v851 = vadd.f32 %v735, %v820
    %v852 = vadd.f32 %v736, %v821
    %v853 = vadd.f32 %v737, %v805
    %854 = vset.pattern.permute.xlu0 7
    %855 = vperm.xlu0 %854, %v54
    %v856 = vpop.permute.xlu0 %855
    %v858 = vmul.f32 %v856, %v65
    %v859 = vmul.f32 %v856, %v69
    %v860 = vmul.f32 %v856, %v73
    %v861 = vmul.f32 %v856, %v77
    %v862 = vmul.f32 %v856, %v81
    %v863 = vmul.f32 %v856, %v85
    %v864 = vmul.f32 %v856, %v89
    %v865 = vmul.f32 %v856, %v93
    %v866 = vmul.f32 %v856, %v97
    %v867 = vmul.f32 %v856, %v101
    %v868 = vmul.f32 %v856, %v105
    %v869 = vmul.f32 %v856, %v109
    %v870 = vmul.f32 %v856, %v113
    %v871 = vmul.f32 %v856, %v117
    %v872 = vmul.f32 %v856, %v121
    %v873 = vmul.f32 %v856, %v125
    %890 = vrot.lane.b32.xlu0 %v858, 63
    %v891 = vpop.permute.xlu0 %890
    %892 = vrot.lane.b32.xlu0 %v859, 63
    %v893 = vpop.permute.xlu0 %892
    %894 = vrot.lane.b32.xlu0 %v860, 63
    %v895 = vpop.permute.xlu0 %894
    %896 = vrot.lane.b32.xlu0 %v861, 63
    %v897 = vpop.permute.xlu0 %896
    %898 = vrot.lane.b32.xlu0 %v862, 63
    %v899 = vpop.permute.xlu0 %898
    %900 = vrot.lane.b32.xlu0 %v863, 63
    %v901 = vpop.permute.xlu0 %900
    %902 = vrot.lane.b32.xlu0 %v864, 63
    %v903 = vpop.permute.xlu0 %902
    %904 = vrot.lane.b32.xlu0 %v865, 63
    %v905 = vpop.permute.xlu0 %904
    %906 = vrot.lane.b32.xlu0 %v866, 63
    %v907 = vpop.permute.xlu0 %906
    %908 = vrot.lane.b32.xlu0 %v867, 63
    %v909 = vpop.permute.xlu0 %908
    %910 = vrot.lane.b32.xlu0 %v868, 63
    %v911 = vpop.permute.xlu0 %910
    %912 = vrot.lane.b32.xlu0 %v869, 63
    %v913 = vpop.permute.xlu0 %912
    %914 = vrot.lane.b32.xlu0 %v870, 63
    %v915 = vpop.permute.xlu0 %914
    %916 = vrot.lane.b32.xlu0 %v871, 63
    %v917 = vpop.permute.xlu0 %916
    %918 = vrot.lane.b32.xlu0 %v872, 63
    %v919 = vpop.permute.xlu0 %918
    %920 = vrot.lane.b32.xlu0 %v873, 63
    %v921 = vpop.permute.xlu0 %920
    %vm922 = vcmask 515072
    %v923 = vsel %vm922, %v891, %v893
    %v924 = vsel %vm922, %v893, %v895
    %v925 = vsel %vm922, %v895, %v897
    %v926 = vsel %vm922, %v897, %v899
    %v927 = vsel %vm922, %v899, %v901
    %v928 = vsel %vm922, %v901, %v903
    %v929 = vsel %vm922, %v903, %v905
    %v930 = vsel %vm922, %v905, %v907
    %v931 = vsel %vm922, %v907, %v909
    %v932 = vsel %vm922, %v909, %v911
    %v933 = vsel %vm922, %v911, %v913
    %v934 = vsel %vm922, %v913, %v915
    %v935 = vsel %vm922, %v915, %v917
    %v936 = vsel %vm922, %v917, %v919
    %v937 = vsel %vm922, %v919, %v921
    %v954 = vadd.f32 %v838, %v923
    %v955 = vadd.f32 %v839, %v924
    %v956 = vadd.f32 %v840, %v925
    %v957 = vadd.f32 %v841, %v926
    %v958 = vadd.f32 %v842, %v927
    %v959 = vadd.f32 %v843, %v928
    %v960 = vadd.f32 %v844, %v929
    %v961 = vadd.f32 %v845, %v930
    %v962 = vadd.f32 %v846, %v931
    %v963 = vadd.f32 %v847, %v932
    %v964 = vadd.f32 %v848, %v933
    %v965 = vadd.f32 %v849, %v934
    %v966 = vadd.f32 %v850, %v935
    %v967 = vadd.f32 %v851, %v936
    %v968 = vadd.f32 %v852, %v937
    %v969 = vadd.f32 %v853, %v921
    %970 = vset.pattern.permute.xlu0 8
    %971 = vperm.xlu0 %970, %v54
    %v972 = vpop.permute.xlu0 %971
    %v974 = vmul.f32 %v972, %v65
    %v975 = vmul.f32 %v972, %v69
    %v976 = vmul.f32 %v972, %v73
    %v977 = vmul.f32 %v972, %v77
    %v978 = vmul.f32 %v972, %v81
    %v979 = vmul.f32 %v972, %v85
    %v980 = vmul.f32 %v972, %v89
    %v981 = vmul.f32 %v972, %v93
    %v982 = vmul.f32 %v972, %v97
    %v983 = vmul.f32 %v972, %v101
    %v984 = vmul.f32 %v972, %v105
    %v985 = vmul.f32 %v972, %v109
    %v986 = vmul.f32 %v972, %v113
    %v987 = vmul.f32 %v972, %v117
    %v988 = vmul.f32 %v972, %v121
    %v989 = vmul.f32 %v972, %v125
    %1006 = vrot.lane.b32.xlu0 %v974, 62
    %v1007 = vpop.permute.xlu0 %1006
    %1008 = vrot.lane.b32.xlu0 %v975, 62
    %v1009 = vpop.permute.xlu0 %1008
    %1010 = vrot.lane.b32.xlu0 %v976, 62
    %v1011 = vpop.permute.xlu0 %1010
    %1012 = vrot.lane.b32.xlu0 %v977, 62
    %v1013 = vpop.permute.xlu0 %1012
    %1014 = vrot.lane.b32.xlu0 %v978, 62
    %v1015 = vpop.permute.xlu0 %1014
    %1016 = vrot.lane.b32.xlu0 %v979, 62
    %v1017 = vpop.permute.xlu0 %1016
    %1018 = vrot.lane.b32.xlu0 %v980, 62
    %v1019 = vpop.permute.xlu0 %1018
    %1020 = vrot.lane.b32.xlu0 %v981, 62
    %v1021 = vpop.permute.xlu0 %1020
    %1022 = vrot.lane.b32.xlu0 %v982, 62
    %v1023 = vpop.permute.xlu0 %1022
    %1024 = vrot.lane.b32.xlu0 %v983, 62
    %v1025 = vpop.permute.xlu0 %1024
    %1026 = vrot.lane.b32.xlu0 %v984, 62
    %v1027 = vpop.permute.xlu0 %1026
    %1028 = vrot.lane.b32.xlu0 %v985, 62
    %v1029 = vpop.permute.xlu0 %1028
    %1030 = vrot.lane.b32.xlu0 %v986, 62
    %v1031 = vpop.permute.xlu0 %1030
    %1032 = vrot.lane.b32.xlu0 %v987, 62
    %v1033 = vpop.permute.xlu0 %1032
    %1034 = vrot.lane.b32.xlu0 %v988, 62
    %v1035 = vpop.permute.xlu0 %1034
    %1036 = vrot.lane.b32.xlu0 %v989, 62
    %v1037 = vpop.permute.xlu0 %1036
    %vm1038 = vcmask 506880
    %v1039 = vsel %vm1038, %v1007, %v1009
    %v1040 = vsel %vm1038, %v1009, %v1011
    %v1041 = vsel %vm1038, %v1011, %v1013
    %v1042 = vsel %vm1038, %v1013, %v1015
    %v1043 = vsel %vm1038, %v1015, %v1017
    %v1044 = vsel %vm1038, %v1017, %v1019
    %v1045 = vsel %vm1038, %v1019, %v1021
    %v1046 = vsel %vm1038, %v1021, %v1023
    %v1047 = vsel %vm1038, %v1023, %v1025
    %v1048 = vsel %vm1038, %v1025, %v1027
    %v1049 = vsel %vm1038, %v1027, %v1029
    %v1050 = vsel %vm1038, %v1029, %v1031
    %v1051 = vsel %vm1038, %v1031, %v1033
    %v1052 = vsel %vm1038, %v1033, %v1035
    %v1053 = vsel %vm1038, %v1035, %v1037
    %v1070 = vadd.f32 %v954, %v1039
    %v1071 = vadd.f32 %v955, %v1040
    %v1072 = vadd.f32 %v956, %v1041
    %v1073 = vadd.f32 %v957, %v1042
    %v1074 = vadd.f32 %v958, %v1043
    %v1075 = vadd.f32 %v959, %v1044
    %v1076 = vadd.f32 %v960, %v1045
    %v1077 = vadd.f32 %v961, %v1046
    %v1078 = vadd.f32 %v962, %v1047
    %v1079 = vadd.f32 %v963, %v1048
    %v1080 = vadd.f32 %v964, %v1049
    %v1081 = vadd.f32 %v965, %v1050
    %v1082 = vadd.f32 %v966, %v1051
    %v1083 = vadd.f32 %v967, %v1052
    %v1084 = vadd.f32 %v968, %v1053
    %v1085 = vadd.f32 %v969, %v1037
    %v1086 = vld [vmem:[%s2] sm:$0xff]
    %1088 = vset.pattern.permute.xlu0 0
    %1089 = vperm.xlu0 %1088, %v1086
    %v1090 = vpop.permute.xlu0 %1089
    %v1092 = vadd.f32 %v1070, %v1090
    %v1093 = vadd.f32 %v1071, %v1090
    %v1094 = vadd.f32 %v1072, %v1090
    %v1095 = vadd.f32 %v1073, %v1090
    %v1096 = vadd.f32 %v1074, %v1090
    %v1097 = vadd.f32 %v1075, %v1090
    %v1098 = vadd.f32 %v1076, %v1090
    %v1099 = vadd.f32 %v1077, %v1090
    %v1100 = vadd.f32 %v1078, %v1090
    %v1101 = vadd.f32 %v1079, %v1090
    %v1102 = vadd.f32 %v1080, %v1090
    %v1103 = vadd.f32 %v1081, %v1090
    %v1104 = vadd.f32 %v1082, %v1090
    %v1105 = vadd.f32 %v1083, %v1090
    %v1106 = vadd.f32 %v1084, %v1090
    %v1107 = vadd.f32 %v1085, %v1090
    %v1108 = vmax.f32 %v1092, 0.0
    %v1109 = vmax.f32 %v1093, 0.0
    %v1110 = vmax.f32 %v1094, 0.0
    %v1111 = vmax.f32 %v1095, 0.0
    %v1112 = vmax.f32 %v1096, 0.0
    %v1113 = vmax.f32 %v1097, 0.0
    %v1114 = vmax.f32 %v1098, 0.0
    %v1115 = vmax.f32 %v1099, 0.0
    %v1116 = vmax.f32 %v1100, 0.0
    %v1117 = vmax.f32 %v1101, 0.0
    %v1118 = vmax.f32 %v1102, 0.0
    %v1119 = vmax.f32 %v1103, 0.0
    %v1120 = vmax.f32 %v1104, 0.0
    %v1121 = vmax.f32 %v1105, 0.0
    %v1122 = vmax.f32 %v1106, 0.0
    %v1123 = vmax.f32 %v1107, 0.0
    %1140 = vrot.lane.b32.xlu0 %v1108, 127
    %v1141 = vpop.permute.xlu0 %1140
    %1142 = vrot.lane.b32.xlu0 %v1109, 127
    %v1143 = vpop.permute.xlu0 %1142
    %1144 = vrot.lane.b32.xlu0 %v1110, 127
    %v1145 = vpop.permute.xlu0 %1144
    %1146 = vrot.lane.b32.xlu0 %v1111, 127
    %v1147 = vpop.permute.xlu0 %1146
    %1148 = vrot.lane.b32.xlu0 %v1112, 127
    %v1149 = vpop.permute.xlu0 %1148
    %1150 = vrot.lane.b32.xlu0 %v1113, 127
    %v1151 = vpop.permute.xlu0 %1150
    %1152 = vrot.lane.b32.xlu0 %v1114, 127
    %v1153 = vpop.permute.xlu0 %1152
    %1154 = vrot.lane.b32.xlu0 %v1115, 127
    %v1155 = vpop.permute.xlu0 %1154
    %1156 = vrot.lane.b32.xlu0 %v1116, 127
    %v1157 = vpop.permute.xlu0 %1156
    %1158 = vrot.lane.b32.xlu0 %v1117, 127
    %v1159 = vpop.permute.xlu0 %1158
    %1160 = vrot.lane.b32.xlu0 %v1118, 127
    %v1161 = vpop.permute.xlu0 %1160
    %1162 = vrot.lane.b32.xlu0 %v1119, 127
    %v1163 = vpop.permute.xlu0 %1162
    %1164 = vrot.lane.b32.xlu0 %v1120, 127
    %v1165 = vpop.permute.xlu0 %1164
    %1166 = vrot.lane.b32.xlu0 %v1121, 127
    %v1167 = vpop.permute.xlu0 %1166
    %1168 = vrot.lane.b32.xlu0 %v1122, 127
    %v1169 = vpop.permute.xlu0 %1168
    %1170 = vrot.lane.b32.xlu0 %v1123, 127
    %v1171 = vpop.permute.xlu0 %1170
    %v1172 = vsel %vm226, %v1141, %v1143
    %v1173 = vsel %vm226, %v1143, %v1145
    %v1174 = vsel %vm226, %v1145, %v1147
    %v1175 = vsel %vm226, %v1147, %v1149
    %v1176 = vsel %vm226, %v1149, %v1151
    %v1177 = vsel %vm226, %v1151, %v1153
    %v1178 = vsel %vm226, %v1153, %v1155
    %v1179 = vsel %vm226, %v1155, %v1157
    %v1180 = vsel %vm226, %v1157, %v1159
    %v1181 = vsel %vm226, %v1159, %v1161
    %v1182 = vsel %vm226, %v1161, %v1163
    %v1183 = vsel %vm226, %v1163, %v1165
    %v1184 = vsel %vm226, %v1165, %v1167
    %v1185 = vsel %vm226, %v1167, %v1169
    %v1186 = vsel %vm226, %v1169, %v1171
    %v1203 = vmax.f32 %v1108, %v1172
    %v1204 = vmax.f32 %v1109, %v1173
    %v1205 = vmax.f32 %v1110, %v1174
    %v1206 = vmax.f32 %v1111, %v1175
    %v1207 = vmax.f32 %v1112, %v1176
    %v1208 = vmax.f32 %v1113, %v1177
    %v1209 = vmax.f32 %v1114, %v1178
    %v1210 = vmax.f32 %v1115, %v1179
    %v1211 = vmax.f32 %v1116, %v1180
    %v1212 = vmax.f32 %v1117, %v1181
    %v1213 = vmax.f32 %v1118, %v1182
    %v1214 = vmax.f32 %v1119, %v1183
    %v1215 = vmax.f32 %v1120, %v1184
    %v1216 = vmax.f32 %v1121, %v1185
    %v1217 = vmax.f32 %v1122, %v1186
    %v1218 = vmax.f32 %v1123, %v1171
    %1219 = vrot.lane.b32.xlu0 %v1108, 96
    %v1220 = vpop.permute.xlu0 %1219
    %1221 = vrot.lane.b32.xlu0 %v1109, 96
    %v1222 = vpop.permute.xlu0 %1221
    %1223 = vrot.lane.b32.xlu0 %v1110, 96
    %v1224 = vpop.permute.xlu0 %1223
    %1225 = vrot.lane.b32.xlu0 %v1111, 96
    %v1226 = vpop.permute.xlu0 %1225
    %1227 = vrot.lane.b32.xlu0 %v1112, 96
    %v1228 = vpop.permute.xlu0 %1227
    %1229 = vrot.lane.b32.xlu0 %v1113, 96
    %v1230 = vpop.permute.xlu0 %1229
    %1231 = vrot.lane.b32.xlu0 %v1114, 96
    %v1232 = vpop.permute.xlu0 %1231
    %1233 = vrot.lane.b32.xlu0 %v1115, 96
    %v1234 = vpop.permute.xlu0 %1233
    %1235 = vrot.lane.b32.xlu0 %v1116, 96
    %v1236 = vpop.permute.xlu0 %1235
    %1237 = vrot.lane.b32.xlu0 %v1117, 96
    %v1238 = vpop.permute.xlu0 %1237
    %1239 = vrot.lane.b32.xlu0 %v1118, 96
    %v1240 = vpop.permute.xlu0 %1239
    %1241 = vrot.lane.b32.xlu0 %v1119, 96
    %v1242 = vpop.permute.xlu0 %1241
    %1243 = vrot.lane.b32.xlu0 %v1120, 96
    %v1244 = vpop.permute.xlu0 %1243
    %1245 = vrot.lane.b32.xlu0 %v1121, 96
    %v1246 = vpop.permute.xlu0 %1245
    %1247 = vrot.lane.b32.xlu0 %v1122, 96
    %v1248 = vpop.permute.xlu0 %1247
    %1249 = vrot.lane.b32.xlu0 %v1123, 96
    %v1250 = vpop.permute.xlu0 %1249
    %v1251 = vsel %vm458, %v1220, %v1222
    %v1252 = vsel %vm458, %v1222, %v1224
    %v1253 = vsel %vm458, %v1224, %v1226
    %v1254 = vsel %vm458, %v1226, %v1228
    %v1255 = vsel %vm458, %v1228, %v1230
    %v1256 = vsel %vm458, %v1230, %v1232
    %v1257 = vsel %vm458, %v1232, %v1234
    %v1258 = vsel %vm458, %v1234, %v1236
    %v1259 = vsel %vm458, %v1236, %v1238
    %v1260 = vsel %vm458, %v1238, %v1240
    %v1261 = vsel %vm458, %v1240, %v1242
    %v1262 = vsel %vm458, %v1242, %v1244
    %v1263 = vsel %vm458, %v1244, %v1246
    %v1264 = vsel %vm458, %v1246, %v1248
    %v1265 = vsel %vm458, %v1248, %v1250
    %v1282 = vmax.f32 %v1203, %v1251
    %v1283 = vmax.f32 %v1204, %v1252
    %v1284 = vmax.f32 %v1205, %v1253
    %v1285 = vmax.f32 %v1206, %v1254
    %v1286 = vmax.f32 %v1207, %v1255
    %v1287 = vmax.f32 %v1208, %v1256
    %v1288 = vmax.f32 %v1209, %v1257
    %v1289 = vmax.f32 %v1210, %v1258
    %v1290 = vmax.f32 %v1211, %v1259
    %v1291 = vmax.f32 %v1212, %v1260
    %v1292 = vmax.f32 %v1213, %v1261
    %v1293 = vmax.f32 %v1214, %v1262
    %v1294 = vmax.f32 %v1215, %v1263
    %v1295 = vmax.f32 %v1216, %v1264
    %v1296 = vmax.f32 %v1217, %v1265
    %v1297 = vmax.f32 %v1218, %v1250
    %1298 = vrot.lane.b32.xlu0 %v1108, 95
    %v1299 = vpop.permute.xlu0 %1298
    %1300 = vrot.lane.b32.xlu0 %v1109, 95
    %v1301 = vpop.permute.xlu0 %1300
    %1302 = vrot.lane.b32.xlu0 %v1110, 95
    %v1303 = vpop.permute.xlu0 %1302
    %1304 = vrot.lane.b32.xlu0 %v1111, 95
    %v1305 = vpop.permute.xlu0 %1304
    %1306 = vrot.lane.b32.xlu0 %v1112, 95
    %v1307 = vpop.permute.xlu0 %1306
    %1308 = vrot.lane.b32.xlu0 %v1113, 95
    %v1309 = vpop.permute.xlu0 %1308
    %1310 = vrot.lane.b32.xlu0 %v1114, 95
    %v1311 = vpop.permute.xlu0 %1310
    %1312 = vrot.lane.b32.xlu0 %v1115, 95
    %v1313 = vpop.permute.xlu0 %1312
    %1314 = vrot.lane.b32.xlu0 %v1116, 95
    %v1315 = vpop.permute.xlu0 %1314
    %1316 = vrot.lane.b32.xlu0 %v1117, 95
    %v1317 = vpop.permute.xlu0 %1316
    %1318 = vrot.lane.b32.xlu0 %v1118, 95
    %v1319 = vpop.permute.xlu0 %1318
    %1320 = vrot.lane.b32.xlu0 %v1119, 95
    %v1321 = vpop.permute.xlu0 %1320
    %1322 = vrot.lane.b32.xlu0 %v1120, 95
    %v1323 = vpop.permute.xlu0 %1322
    %1324 = vrot.lane.b32.xlu0 %v1121, 95
    %v1325 = vpop.permute.xlu0 %1324
    %1326 = vrot.lane.b32.xlu0 %v1122, 95
    %v1327 = vpop.permute.xlu0 %1326
    %1328 = vrot.lane.b32.xlu0 %v1123, 95
    %v1329 = vpop.permute.xlu0 %1328
    %v1330 = vsel %vm574, %v1299, %v1301
    %v1331 = vsel %vm574, %v1301, %v1303
    %v1332 = vsel %vm574, %v1303, %v1305
    %v1333 = vsel %vm574, %v1305, %v1307
    %v1334 = vsel %vm574, %v1307, %v1309
    %v1335 = vsel %vm574, %v1309, %v1311
    %v1336 = vsel %vm574, %v1311, %v1313
    %v1337 = vsel %vm574, %v1313, %v1315
    %v1338 = vsel %vm574, %v1315, %v1317
    %v1339 = vsel %vm574, %v1317, %v1319
    %v1340 = vsel %vm574, %v1319, %v1321
    %v1341 = vsel %vm574, %v1321, %v1323
    %v1342 = vsel %vm574, %v1323, %v1325
    %v1343 = vsel %vm574, %v1325, %v1327
    %v1344 = vsel %vm574, %v1327, %v1329
    %v1361 = vmax.f32 %v1282, %v1330
    %v1362 = vmax.f32 %v1283, %v1331
    %v1363 = vmax.f32 %v1284, %v1332
    %v1364 = vmax.f32 %v1285, %v1333
    %v1365 = vmax.f32 %v1286, %v1334
    %v1366 = vmax.f32 %v1287, %v1335
    %v1367 = vmax.f32 %v1288, %v1336
    %v1368 = vmax.f32 %v1289, %v1337
    %v1369 = vmax.f32 %v1290, %v1338
    %v1370 = vmax.f32 %v1291, %v1339
    %v1371 = vmax.f32 %v1292, %v1340
    %v1372 = vmax.f32 %v1293, %v1341
    %v1373 = vmax.f32 %v1294, %v1342
    %v1374 = vmax.f32 %v1295, %v1343
    %v1375 = vmax.f32 %v1296, %v1344
    %v1376 = vmax.f32 %v1297, %v1329
    %1377 = vst [vmem:[#allocation2] sm:$0xff] %v1361
    %1378 = vst [vmem:[#allocation2 + $0x8] sm:$0xff] %v1362
    %1379 = vst [vmem:[#allocation2 + $0x10] sm:$0xff] %v1363
    %1380 = vst [vmem:[#allocation2 + $0x18] sm:$0xff] %v1364
    %1381 = vst [vmem:[#allocation2 + $0x20] sm:$0xff] %v1365
    %1382 = vst [vmem:[#allocation2 + $0x28] sm:$0xff] %v1366
    %1383 = vst [vmem:[#allocation2 + $0x30] sm:$0xff] %v1367
    %1384 = vst [vmem:[#allocation2 + $0x38] sm:$0xff] %v1368
    %1385 = vst [vmem:[#allocation2 + $0x40] sm:$0xff] %v1369
    %1386 = vst [vmem:[#allocation2 + $0x48] sm:$0xff] %v1370
    %1387 = vst [vmem:[#allocation2 + $0x50] sm:$0xff] %v1371
    %1388 = vst [vmem:[#allocation2 + $0x58] sm:$0xff] %v1372
    %1389 = vst [vmem:[#allocation2 + $0x60] sm:$0xff] %v1373
    %1390 = vst [vmem:[#allocation2 + $0x68] sm:$0xff] %v1374
    %vm1391 = vcmask 203776
    %1392 = vst.msk [vmem:[#allocation2 + $0x70] sm:$0xff] %vm1391, %v1375
    %1408 = vrot.lane.b32.xlu0 %v1361, 126
    %v1409 = vpop.permute.xlu0 %1408
    %1410 = vrot.lane.b32.xlu0 %v1362, 126
    %v1411 = vpop.permute.xlu0 %1410
    %1412 = vrot.lane.b32.xlu0 %v1363, 126
    %v1413 = vpop.permute.xlu0 %1412
    %1414 = vrot.lane.b32.xlu0 %v1364, 126
    %v1415 = vpop.permute.xlu0 %1414
    %1416 = vrot.lane.b32.xlu0 %v1365, 126
    %v1417 = vpop.permute.xlu0 %1416
    %1418 = vrot.lane.b32.xlu0 %v1366, 126
    %v1419 = vpop.permute.xlu0 %1418
    %1420 = vrot.lane.b32.xlu0 %v1367, 126
    %v1421 = vpop.permute.xlu0 %1420
    %1422 = vrot.lane.b32.xlu0 %v1368, 126
    %v1423 = vpop.permute.xlu0 %1422
    %1424 = vrot.lane.b32.xlu0 %v1369, 126
    %v1425 = vpop.permute.xlu0 %1424
    %1426 = vrot.lane.b32.xlu0 %v1370, 126
    %v1427 = vpop.permute.xlu0 %1426
    %1428 = vrot.lane.b32.xlu0 %v1371, 126
    %v1429 = vpop.permute.xlu0 %1428
    %1430 = vrot.lane.b32.xlu0 %v1372, 126
    %v1431 = vpop.permute.xlu0 %1430
    %1432 = vrot.lane.b32.xlu0 %v1373, 126
    %v1433 = vpop.permute.xlu0 %1432
    %1434 = vrot.lane.b32.xlu0 %v1374, 126
    %v1435 = vpop.permute.xlu0 %1434
    %1436 = vrot.lane.b32.xlu0 %v1375, 126
    %v1437 = vpop.permute.xlu0 %1436
    %v1438 = vsel %vm342, %v1409, %v1411
    %v1439 = vsel %vm342, %v1411, %v1413
    %v1440 = vsel %vm342, %v1413, %v1415
    %v1441 = vsel %vm342, %v1415, %v1417
    %v1442 = vsel %vm342, %v1417, %v1419
    %v1443 = vsel %vm342, %v1419, %v1421
    %v1444 = vsel %vm342, %v1421, %v1423
    %v1445 = vsel %vm342, %v1423, %v1425
    %v1446 = vsel %vm342, %v1425, %v1427
    %v1447 = vsel %vm342, %v1427, %v1429
    %v1448 = vsel %vm342, %v1429, %v1431
    %v1449 = vsel %vm342, %v1431, %v1433
    %v1450 = vsel %vm342, %v1433, %v1435
    %v1451 = vsel %vm342, %v1435, %v1437
    %1467 = vst [vmem:[#allocation2 + $0x78] sm:$0xff] %v1438
    %1468 = vst [vmem:[#allocation2 + $0x80] sm:$0xff] %v1439
    %1469 = vst [vmem:[#allocation2 + $0x88] sm:$0xff] %v1440
    %1470 = vst [vmem:[#allocation2 + $0x90] sm:$0xff] %v1441
    %1471 = vst [vmem:[#allocation2 + $0x98] sm:$0xff] %v1442
    %1472 = vst [vmem:[#allocation2 + $0xa0] sm:$0xff] %v1443
    %1473 = vst [vmem:[#allocation2 + $0xa8] sm:$0xff] %v1444
    %1474 = vst [vmem:[#allocation2 + $0xb0] sm:$0xff] %v1445
    %1475 = vst [vmem:[#allocation2 + $0xb8] sm:$0xff] %v1446
    %1476 = vst [vmem:[#allocation2 + $0xc0] sm:$0xff] %v1447
    %1477 = vst [vmem:[#allocation2 + $0xc8] sm:$0xff] %v1448
    %1478 = vst [vmem:[#allocation2 + $0xd0] sm:$0xff] %v1449
    %1479 = vst [vmem:[#allocation2 + $0xd8] sm:$0xff] %v1450
    %1480 = vst [vmem:[#allocation2 + $0xe0] sm:$0xff] %v1451
    %1481 = vst.msk [vmem:[#allocation2 + $0xe8] sm:$0xff] %vm1391, %v1437
    %1482 = vrot.lane.b32.xlu0 %v1361, 124
    %v1483 = vpop.permute.xlu0 %1482
    %1484 = vrot.lane.b32.xlu0 %v1362, 124
    %v1485 = vpop.permute.xlu0 %1484
    %1486 = vrot.lane.b32.xlu0 %v1363, 124
    %v1487 = vpop.permute.xlu0 %1486
    %1488 = vrot.lane.b32.xlu0 %v1364, 124
    %v1489 = vpop.permute.xlu0 %1488
    %1490 = vrot.lane.b32.xlu0 %v1365, 124
    %v1491 = vpop.permute.xlu0 %1490
    %1492 = vrot.lane.b32.xlu0 %v1366, 124
    %v1493 = vpop.permute.xlu0 %1492
    %1494 = vrot.lane.b32.xlu0 %v1367, 124
    %v1495 = vpop.permute.xlu0 %1494
    %1496 = vrot.lane.b32.xlu0 %v1368, 124
    %v1497 = vpop.permute.xlu0 %1496
    %1498 = vrot.lane.b32.xlu0 %v1369, 124
    %v1499 = vpop.permute.xlu0 %1498
    %1500 = vrot.lane.b32.xlu0 %v1370, 124
    %v1501 = vpop.permute.xlu0 %1500
    %1502 = vrot.lane.b32.xlu0 %v1371, 124
    %v1503 = vpop.permute.xlu0 %1502
    %1504 = vrot.lane.b32.xlu0 %v1372, 124
    %v1505 = vpop.permute.xlu0 %1504
    %1506 = vrot.lane.b32.xlu0 %v1373, 124
    %v1507 = vpop.permute.xlu0 %1506
    %1508 = vrot.lane.b32.xlu0 %v1374, 124
    %v1509 = vpop.permute.xlu0 %1508
    %1510 = vrot.lane.b32.xlu0 %v1375, 124
    %v1511 = vpop.permute.xlu0 %1510
    %vm1512 = vcmask 1014784
    %v1513 = vsel %vm1512, %v1483, %v1485
    %v1514 = vsel %vm1512, %v1485, %v1487
    %v1515 = vsel %vm1512, %v1487, %v1489
    %v1516 = vsel %vm1512, %v1489, %v1491
    %v1517 = vsel %vm1512, %v1491, %v1493
    %v1518 = vsel %vm1512, %v1493, %v1495
    %v1519 = vsel %vm1512, %v1495, %v1497
    %v1520 = vsel %vm1512, %v1497, %v1499
    %v1521 = vsel %vm1512, %v1499, %v1501
    %v1522 = vsel %vm1512, %v1501, %v1503
    %v1523 = vsel %vm1512, %v1503, %v1505
    %v1524 = vsel %vm1512, %v1505, %v1507
    %v1525 = vsel %vm1512, %v1507, %v1509
    %v1526 = vsel %vm1512, %v1509, %v1511
    %1542 = vst [vmem:[#allocation2 + $0xf0] sm:$0xff] %v1513
    %1543 = vst [vmem:[#allocation2 + $0xf8] sm:$0xff] %v1514
    %1544 = vst [vmem:[#allocation2 + $0x100] sm:$0xff] %v1515
    %1545 = vst [vmem:[#allocation2 + $0x108] sm:$0xff] %v1516
    %1546 = vst [vmem:[#allocation2 + $0x110] sm:$0xff] %v1517
    %1547 = vst [vmem:[#allocation2 + $0x118] sm:$0xff] %v1518
    %1548 = vst [vmem:[#allocation2 + $0x120] sm:$0xff] %v1519
    %1549 = vst [vmem:[#allocation2 + $0x128] sm:$0xff] %v1520
    %1550 = vst [vmem:[#allocation2 + $0x130] sm:$0xff] %v1521
    %1551 = vst [vmem:[#allocation2 + $0x138] sm:$0xff] %v1522
    %1552 = vst [vmem:[#allocation2 + $0x140] sm:$0xff] %v1523
    %1553 = vst [vmem:[#allocation2 + $0x148] sm:$0xff] %v1524
    %1554 = vst [vmem:[#allocation2 + $0x150] sm:$0xff] %v1525
    %1555 = vst [vmem:[#allocation2 + $0x158] sm:$0xff] %v1526
    %1556 = vst.msk [vmem:[#allocation2 + $0x160] sm:$0xff] %vm1391, %v1511
    %1557 = vrot.lane.b32.xlu0 %v1361, 64
    %v1558 = vpop.permute.xlu0 %1557
    %1559 = vrot.lane.b32.xlu0 %v1362, 64
    %v1560 = vpop.permute.xlu0 %1559
    %1561 = vrot.lane.b32.xlu0 %v1363, 64
    %v1562 = vpop.permute.xlu0 %1561
    %1563 = vrot.lane.b32.xlu0 %v1364, 64
    %v1564 = vpop.permute.xlu0 %1563
    %1565 = vrot.lane.b32.xlu0 %v1365, 64
    %v1566 = vpop.permute.xlu0 %1565
    %1567 = vrot.lane.b32.xlu0 %v1366, 64
    %v1568 = vpop.permute.xlu0 %1567
    %1569 = vrot.lane.b32.xlu0 %v1367, 64
    %v1570 = vpop.permute.xlu0 %1569
    %1571 = vrot.lane.b32.xlu0 %v1368, 64
    %v1572 = vpop.permute.xlu0 %1571
    %1573 = vrot.lane.b32.xlu0 %v1369, 64
    %v1574 = vpop.permute.xlu0 %1573
    %1575 = vrot.lane.b32.xlu0 %v1370, 64
    %v1576 = vpop.permute.xlu0 %1575
    %1577 = vrot.lane.b32.xlu0 %v1371, 64
    %v1578 = vpop.permute.xlu0 %1577
    %1579 = vrot.lane.b32.xlu0 %v1372, 64
    %v1580 = vpop.permute.xlu0 %1579
    %1581 = vrot.lane.b32.xlu0 %v1373, 64
    %v1582 = vpop.permute.xlu0 %1581
    %1583 = vrot.lane.b32.xlu0 %v1374, 64
    %v1584 = vpop.permute.xlu0 %1583
    %1585 = vrot.lane.b32.xlu0 %v1375, 64
    %v1586 = vpop.permute.xlu0 %1585
    %v1587 = vsel %vm806, %v1558, %v1560
    %v1588 = vsel %vm806, %v1560, %v1562
    %v1589 = vsel %vm806, %v1562, %v1564
    %v1590 = vsel %vm806, %v1564, %v1566
    %v1591 = vsel %vm806, %v1566, %v1568
    %v1592 = vsel %vm806, %v1568, %v1570
    %v1593 = vsel %vm806, %v1570, %v1572
    %v1594 = vsel %vm806, %v1572, %v1574
    %v1595 = vsel %vm806, %v1574, %v1576
    %v1596 = vsel %vm806, %v1576, %v1578
    %v1597 = vsel %vm806, %v1578, %v1580
    %v1598 = vsel %vm806, %v1580, %v1582
    %v1599 = vsel %vm806, %v1582, %v1584
    %v1600 = vsel %vm806, %v1584, %v1586
    %1616 = vst [vmem:[#allocation2 + $0x168] sm:$0xff] %v1587
    %1617 = vst [vmem:[#allocation2 + $0x170] sm:$0xff] %v1588
    %1618 = vst [vmem:[#allocation2 + $0x178] sm:$0xff] %v1589
    %1619 = vst [vmem:[#allocation2 + $0x180] sm:$0xff] %v1590
    %1620 = vst [vmem:[#allocation2 + $0x188] sm:$0xff] %v1591
    %1621 = vst [vmem:[#allocation2 + $0x190] sm:$0xff] %v1592
    %1622 = vst [vmem:[#allocation2 + $0x198] sm:$0xff] %v1593
    %1623 = vst [vmem:[#allocation2 + $0x1a0] sm:$0xff] %v1594
    %1624 = vst [vmem:[#allocation2 + $0x1a8] sm:$0xff] %v1595
    %1625 = vst [vmem:[#allocation2 + $0x1b0] sm:$0xff] %v1596
    %1626 = vst [vmem:[#allocation2 + $0x1b8] sm:$0xff] %v1597
    %1627 = vst [vmem:[#allocation2 + $0x1c0] sm:$0xff] %v1598
    %1628 = vst [vmem:[#allocation2 + $0x1c8] sm:$0xff] %v1599
    %1629 = vst [vmem:[#allocation2 + $0x1d0] sm:$0xff] %v1600
    %1630 = vst.msk [vmem:[#allocation2 + $0x1d8] sm:$0xff] %vm1391, %v1586
    %1631 = vrot.lane.b32.xlu0 %v1361, 62
    %v1632 = vpop.permute.xlu0 %1631
    %1633 = vrot.lane.b32.xlu0 %v1362, 62
    %v1634 = vpop.permute.xlu0 %1633
    %1635 = vrot.lane.b32.xlu0 %v1363, 62
    %v1636 = vpop.permute.xlu0 %1635
    %1637 = vrot.lane.b32.xlu0 %v1364, 62
    %v1638 = vpop.permute.xlu0 %1637
    %1639 = vrot.lane.b32.xlu0 %v1365, 62
    %v1640 = vpop.permute.xlu0 %1639
    %1641 = vrot.lane.b32.xlu0 %v1366, 62
    %v1642 = vpop.permute.xlu0 %1641
    %1643 = vrot.lane.b32.xlu0 %v1367, 62
    %v1644 = vpop.permute.xlu0 %1643
    %1645 = vrot.lane.b32.xlu0 %v1368, 62
    %v1646 = vpop.permute.xlu0 %1645
    %1647 = vrot.lane.b32.xlu0 %v1369, 62
    %v1648 = vpop.permute.xlu0 %1647
    %1649 = vrot.lane.b32.xlu0 %v1370, 62
    %v1650 = vpop.permute.xlu0 %1649
    %1651 = vrot.lane.b32.xlu0 %v1371, 62
    %v1652 = vpop.permute.xlu0 %1651
    %1653 = vrot.lane.b32.xlu0 %v1372, 62
    %v1654 = vpop.permute.xlu0 %1653
    %1655 = vrot.lane.b32.xlu0 %v1373, 62
    %v1656 = vpop.permute.xlu0 %1655
    %1657 = vrot.lane.b32.xlu0 %v1374, 62
    %v1658 = vpop.permute.xlu0 %1657
    %1659 = vrot.lane.b32.xlu0 %v1375, 62
    %v1660 = vpop.permute.xlu0 %1659
    %v1661 = vsel %vm1038, %v1632, %v1634
    %v1662 = vsel %vm1038, %v1634, %v1636
    %v1663 = vsel %vm1038, %v1636, %v1638
    %v1664 = vsel %vm1038, %v1638, %v1640
    %v1665 = vsel %vm1038, %v1640, %v1642
    %v1666 = vsel %vm1038, %v1642, %v1644
    %v1667 = vsel %vm1038, %v1644, %v1646
    %v1668 = vsel %vm1038, %v1646, %v1648
    %v1669 = vsel %vm1038, %v1648, %v1650
    %v1670 = vsel %vm1038, %v1650, %v1652
    %v1671 = vsel %vm1038, %v1652, %v1654
    %v1672 = vsel %vm1038, %v1654, %v1656
    %v1673 = vsel %vm1038, %v1656, %v1658
    %v1674 = vsel %vm1038, %v1658, %v1660
    %1690 = vst [vmem:[#allocation2 + $0x1e0] sm:$0xff] %v1661
    %1691 = vst [vmem:[#allocation2 + $0x1e8] sm:$0xff] %v1662
    %1692 = vst [vmem:[#allocation2 + $0x1f0] sm:$0xff] %v1663
    %1693 = vst [vmem:[#allocation2 + $0x1f8] sm:$0xff] %v1664
    %1694 = vst [vmem:[#allocation2 + $0x200] sm:$0xff] %v1665
    %1695 = vst [vmem:[#allocation2 + $0x208] sm:$0xff] %v1666
    %1696 = vst [vmem:[#allocation2 + $0x210] sm:$0xff] %v1667
    %1697 = vst [vmem:[#allocation2 + $0x218] sm:$0xff] %v1668
    %1698 = vst [vmem:[#allocation2 + $0x220] sm:$0xff] %v1669
    %1699 = vst [vmem:[#allocation2 + $0x228] sm:$0xff] %v1670
    %1700 = vst [vmem:[#allocation2 + $0x230] sm:$0xff] %v1671
    %1701 = vst [vmem:[#allocation2 + $0x238] sm:$0xff] %v1672
    %1702 = vst [vmem:[#allocation2 + $0x240] sm:$0xff] %v1673
    %1703 = vst [vmem:[#allocation2 + $0x248] sm:$0xff] %v1674
    %1704 = vst.msk [vmem:[#allocation2 + $0x250] sm:$0xff] %vm1391, %v1660
    %1705 = vrot.lane.b32.xlu0 %v1361, 60
    %v1706 = vpop.permute.xlu0 %1705
    %1707 = vrot.lane.b32.xlu0 %v1362, 60
    %v1708 = vpop.permute.xlu0 %1707
    %1709 = vrot.lane.b32.xlu0 %v1363, 60
    %v1710 = vpop.permute.xlu0 %1709
    %1711 = vrot.lane.b32.xlu0 %v1364, 60
    %v1712 = vpop.permute.xlu0 %1711
    %1713 = vrot.lane.b32.xlu0 %v1365, 60
    %v1714 = vpop.permute.xlu0 %1713
    %1715 = vrot.lane.b32.xlu0 %v1366, 60
    %v1716 = vpop.permute.xlu0 %1715
    %1717 = vrot.lane.b32.xlu0 %v1367, 60
    %v1718 = vpop.permute.xlu0 %1717
    %1719 = vrot.lane.b32.xlu0 %v1368, 60
    %v1720 = vpop.permute.xlu0 %1719
    %1721 = vrot.lane.b32.xlu0 %v1369, 60
    %v1722 = vpop.permute.xlu0 %1721
    %1723 = vrot.lane.b32.xlu0 %v1370, 60
    %v1724 = vpop.permute.xlu0 %1723
    %1725 = vrot.lane.b32.xlu0 %v1371, 60
    %v1726 = vpop.permute.xlu0 %1725
    %1727 = vrot.lane.b32.xlu0 %v1372, 60
    %v1728 = vpop.permute.xlu0 %1727
    %1729 = vrot.lane.b32.xlu0 %v1373, 60
    %v1730 = vpop.permute.xlu0 %1729
    %1731 = vrot.lane.b32.xlu0 %v1374, 60
    %v1732 = vpop.permute.xlu0 %1731
    %1733 = vrot.lane.b32.xlu0 %v1375, 60
    %v1734 = vpop.permute.xlu0 %1733
    %vm1735 = vcmask 490496
    %v1736 = vsel %vm1735, %v1706, %v1708
    %v1737 = vsel %vm1735, %v1708, %v1710
    %v1738 = vsel %vm1735, %v1710, %v1712
    %v1739 = vsel %vm1735, %v1712, %v1714
    %v1740 = vsel %vm1735, %v1714, %v1716
    %v1741 = vsel %vm1735, %v1716, %v1718
    %v1742 = vsel %vm1735, %v1718, %v1720
    %v1743 = vsel %vm1735, %v1720, %v1722
    %v1744 = vsel %vm1735, %v1722, %v1724
    %v1745 = vsel %vm1735, %v1724, %v1726
    %v1746 = vsel %vm1735, %v1726, %v1728
    %v1747 = vsel %vm1735, %v1728, %v1730
    %v1748 = vsel %vm1735, %v1730, %v1732
    %v1749 = vsel %vm1735, %v1732, %v1734
    %1765 = vst [vmem:[#allocation2 + $0x258] sm:$0xff] %v1736
    %1766 = vst [vmem:[#allocation2 + $0x260] sm:$0xff] %v1737
    %1767 = vst [vmem:[#allocation2 + $0x268] sm:$0xff] %v1738
    %1768 = vst [vmem:[#allocation2 + $0x270] sm:$0xff] %v1739
    %1769 = vst [vmem:[#allocation2 + $0x278] sm:$0xff] %v1740
    %1770 = vst [vmem:[#allocation2 + $0x280] sm:$0xff] %v1741
    %1771 = vst [vmem:[#allocation2 + $0x288] sm:$0xff] %v1742
    %1772 = vst [vmem:[#allocation2 + $0x290] sm:$0xff] %v1743
    %1773 = vst [vmem:[#allocation2 + $0x298] sm:$0xff] %v1744
    %1774 = vst [vmem:[#allocation2 + $0x2a0] sm:$0xff] %v1745
    %1775 = vst [vmem:[#allocation2 + $0x2a8] sm:$0xff] %v1746
    %1776 = vst [vmem:[#allocation2 + $0x2b0] sm:$0xff] %v1747
    %1777 = vst [vmem:[#allocation2 + $0x2b8] sm:$0xff] %v1748
    %1778 = vst [vmem:[#allocation2 + $0x2c0] sm:$0xff] %v1749
    %1779 = vst.msk [vmem:[#allocation2 + $0x2c8] sm:$0xff] %vm1391, %v1734
    %1780 = vst [vmem:[#allocation2 + $0x2d0] sm:$0xff] %v1362
    %1781 = vst [vmem:[#allocation2 + $0x2d8] sm:$0xff] %v1363
    %1782 = vst [vmem:[#allocation2 + $0x2e0] sm:$0xff] %v1364
    %1783 = vst [vmem:[#allocation2 + $0x2e8] sm:$0xff] %v1365
    %1784 = vst [vmem:[#allocation2 + $0x2f0] sm:$0xff] %v1366
    %1785 = vst [vmem:[#allocation2 + $0x2f8] sm:$0xff] %v1367
    %1786 = vst [vmem:[#allocation2 + $0x300] sm:$0xff] %v1368
    %1787 = vst [vmem:[#allocation2 + $0x308] sm:$0xff] %v1369
    %1788 = vst [vmem:[#allocation2 + $0x310] sm:$0xff] %v1370
    %1789 = vst [vmem:[#allocation2 + $0x318] sm:$0xff] %v1371
    %1790 = vst [vmem:[#allocation2 + $0x320] sm:$0xff] %v1372
    %1791 = vst [vmem:[#allocation2 + $0x328] sm:$0xff] %v1373
    %1792 = vst [vmem:[#allocation2 + $0x330] sm:$0xff] %v1374
    %1793 = vst [vmem:[#allocation2 + $0x338] sm:$0xff] %v1375
    %1794 = vst.msk [vmem:[#allocation2 + $0x340] sm:$0xff] %vm1391, %v1376
    %1796 = vrot.lane.b32.xlu0 %v1376, 126
    %v1797 = vpop.permute.xlu0 %1796
    %v1798 = vsel %vm342, %v1437, %v1797
    %1801 = vst [vmem:[#allocation2 + $0x348] sm:$0xff] %v1439
    %1802 = vst [vmem:[#allocation2 + $0x350] sm:$0xff] %v1440
    %1803 = vst [vmem:[#allocation2 + $0x358] sm:$0xff] %v1441
    %1804 = vst [vmem:[#allocation2 + $0x360] sm:$0xff] %v1442
    %1805 = vst [vmem:[#allocation2 + $0x368] sm:$0xff] %v1443
    %1806 = vst [vmem:[#allocation2 + $0x370] sm:$0xff] %v1444
    %1807 = vst [vmem:[#allocation2 + $0x378] sm:$0xff] %v1445
    %1808 = vst [vmem:[#allocation2 + $0x380] sm:$0xff] %v1446
    %1809 = vst [vmem:[#allocation2 + $0x388] sm:$0xff] %v1447
    %1810 = vst [vmem:[#allocation2 + $0x390] sm:$0xff] %v1448
    %1811 = vst [vmem:[#allocation2 + $0x398] sm:$0xff] %v1449
    %1812 = vst [vmem:[#allocation2 + $0x3a0] sm:$0xff] %v1450
    %1813 = vst [vmem:[#allocation2 + $0x3a8] sm:$0xff] %v1451
    %1814 = vst [vmem:[#allocation2 + $0x3b0] sm:$0xff] %v1798
    %1815 = vst.msk [vmem:[#allocation2 + $0x3b8] sm:$0xff] %vm1391, %v1797
    %1816 = vrot.lane.b32.xlu0 %v1376, 124
    %v1817 = vpop.permute.xlu0 %1816
    %v1818 = vsel %vm1512, %v1511, %v1817
    %1821 = vst [vmem:[#allocation2 + $0x3c0] sm:$0xff] %v1514
    %1822 = vst [vmem:[#allocation2 + $0x3c8] sm:$0xff] %v1515
    %1823 = vst [vmem:[#allocation2 + $0x3d0] sm:$0xff] %v1516
    %1824 = vst [vmem:[#allocation2 + $0x3d8] sm:$0xff] %v1517
    %1825 = vst [vmem:[#allocation2 + $0x3e0] sm:$0xff] %v1518
    %1826 = vst [vmem:[#allocation2 + $0x3e8] sm:$0xff] %v1519
    %1827 = vst [vmem:[#allocation2 + $0x3f0] sm:$0xff] %v1520
    %1828 = vst [vmem:[#allocation2 + $0x3f8] sm:$0xff] %v1521
    %1829 = vst [vmem:[#allocation2 + $0x400] sm:$0xff] %v1522
    %1830 = vst [vmem:[#allocation2 + $0x408] sm:$0xff] %v1523
    %1831 = vst [vmem:[#allocation2 + $0x410] sm:$0xff] %v1524
    %1832 = vst [vmem:[#allocation2 + $0x418] sm:$0xff] %v1525
    %1833 = vst [vmem:[#allocation2 + $0x420] sm:$0xff] %v1526
    %1834 = vst [vmem:[#allocation2 + $0x428] sm:$0xff] %v1818
    %1835 = vst.msk [vmem:[#allocation2 + $0x430] sm:$0xff] %vm1391, %v1817
    %v1836 = vld [vmem:[%s3] sm:$0xff]
    %v1837 = vld [vmem:[%s3 + $0x8] sm:$0xff]
    %v1838 = vld [vmem:[#allocation2] sm:$0xff]
    %v1839 = vld [vmem:[#allocation2 + $0x8] sm:$0xff]
    %v1840 = vld [vmem:[#allocation2 + $0x10] sm:$0xff]
    %v1841 = vld [vmem:[#allocation2 + $0x18] sm:$0xff]
    %v1842 = vld [vmem:[#allocation2 + $0x20] sm:$0xff]
    %v1843 = vld [vmem:[#allocation2 + $0x28] sm:$0xff]
    %v1844 = vld [vmem:[#allocation2 + $0x30] sm:$0xff]
    %v1845 = vld [vmem:[#allocation2 + $0x38] sm:$0xff]
    %v1846 = vld [vmem:[#allocation2 + $0x40] sm:$0xff]
    %v1847 = vld [vmem:[#allocation2 + $0x48] sm:$0xff]
    %v1848 = vld [vmem:[#allocation2 + $0x50] sm:$0xff]
    %v1849 = vld [vmem:[#allocation2 + $0x58] sm:$0xff]
    %v1850 = vld [vmem:[#allocation2 + $0x60] sm:$0xff]
    %v1851 = vld [vmem:[#allocation2 + $0x68] sm:$0xff]
    %v1852 = vld [vmem:[#allocation2 + $0x70] sm:$0xff]
    %v1853 = vld [vmem:[#allocation2 + $0x78] sm:$0xff]
    %v1854 = vld [vmem:[#allocation2 + $0x80] sm:$0xff]
    %v1855 = vld [vmem:[#allocation2 + $0x88] sm:$0xff]
    %v1856 = vld [vmem:[#allocation2 + $0x90] sm:$0xff]
    %v1857 = vld [vmem:[#allocation2 + $0x98] sm:$0xff]
    %v1858 = vld [vmem:[#allocation2 + $0xa0] sm:$0xff]
    %v1859 = vld [vmem:[#allocation2 + $0xa8] sm:$0xff]
    %v1860 = vld [vmem:[#allocation2 + $0xb0] sm:$0xff]
    %v1861 = vld [vmem:[#allocation2 + $0xb8] sm:$0xff]
    %v1862 = vld [vmem:[#allocation2 + $0xc0] sm:$0xff]
    %v1863 = vld [vmem:[#allocation2 + $0xc8] sm:$0xff]
    %v1864 = vld [vmem:[#allocation2 + $0xd0] sm:$0xff]
    %v1865 = vld [vmem:[#allocation2 + $0xd8] sm:$0xff]
    %v1866 = vld [vmem:[#allocation2 + $0xe0] sm:$0xff]
    %v1867 = vld [vmem:[#allocation2 + $0xe8] sm:$0xff]
    %v1868 = vld [vmem:[#allocation2 + $0xf0] sm:$0xff]
    %v1869 = vld [vmem:[#allocation2 + $0xf8] sm:$0xff]
    %v1870 = vld [vmem:[#allocation2 + $0x100] sm:$0xff]
    %v1871 = vld [vmem:[#allocation2 + $0x108] sm:$0xff]
    %v1872 = vld [vmem:[#allocation2 + $0x110] sm:$0xff]
    %v1873 = vld [vmem:[#allocation2 + $0x118] sm:$0xff]
    %v1874 = vld [vmem:[#allocation2 + $0x120] sm:$0xff]
    %v1875 = vld [vmem:[#allocation2 + $0x128] sm:$0xff]
    %v1876 = vld [vmem:[#allocation2 + $0x130] sm:$0xff]
    %v1877 = vld [vmem:[#allocation2 + $0x138] sm:$0xff]
    %v1878 = vld [vmem:[#allocation2 + $0x140] sm:$0xff]
    %v1879 = vld [vmem:[#allocation2 + $0x148] sm:$0xff]
    %v1880 = vld [vmem:[#allocation2 + $0x150] sm:$0xff]
    %v1881 = vld [vmem:[#allocation2 + $0x158] sm:$0xff]
    %v1882 = vld [vmem:[#allocation2 + $0x160] sm:$0xff]
    %v1883 = vld [vmem:[#allocation2 + $0x168] sm:$0xff]
    %v1884 = vld [vmem:[#allocation2 + $0x170] sm:$0xff]
    %v1885 = vld [vmem:[#allocation2 + $0x178] sm:$0xff]
    %v1886 = vld [vmem:[#allocation2 + $0x180] sm:$0xff]
    %v1887 = vld [vmem:[#allocation2 + $0x188] sm:$0xff]
    %v1888 = vld [vmem:[#allocation2 + $0x190] sm:$0xff]
    %v1889 = vld [vmem:[#allocation2 + $0x198] sm:$0xff]
    %v1890 = vld [vmem:[#allocation2 + $0x1a0] sm:$0xff]
    %v1891 = vld [vmem:[#allocation2 + $0x1a8] sm:$0xff]
    %v1892 = vld [vmem:[#allocation2 + $0x1b0] sm:$0xff]
    %v1893 = vld [vmem:[#allocation2 + $0x1b8] sm:$0xff]
    %v1894 = vld [vmem:[#allocation2 + $0x1c0] sm:$0xff]
    %v1895 = vld [vmem:[#allocation2 + $0x1c8] sm:$0xff]
    %v1896 = vld [vmem:[#allocation2 + $0x1d0] sm:$0xff]
    %v1897 = vld [vmem:[#allocation2 + $0x1d8] sm:$0xff]
    %v1898 = vld [vmem:[#allocation2 + $0x1e0] sm:$0xff]
    %v1899 = vld [vmem:[#allocation2 + $0x1e8] sm:$0xff]
    %v1900 = vld [vmem:[#allocation2 + $0x1f0] sm:$0xff]
    %v1901 = vld [vmem:[#allocation2 + $0x1f8] sm:$0xff]
    %v1902 = vld [vmem:[#allocation2 + $0x200] sm:$0xff]
    %v1903 = vld [vmem:[#allocation2 + $0x208] sm:$0xff]
    %v1904 = vld [vmem:[#allocation2 + $0x210] sm:$0xff]
    %v1905 = vld [vmem:[#allocation2 + $0x218] sm:$0xff]
    %v1906 = vld [vmem:[#allocation2 + $0x220] sm:$0xff]
    %v1907 = vld [vmem:[#allocation2 + $0x228] sm:$0xff]
    %v1908 = vld [vmem:[#allocation2 + $0x230] sm:$0xff]
    %v1909 = vld [vmem:[#allocation2 + $0x238] sm:$0xff]
    %v1910 = vld [vmem:[#allocation2 + $0x240] sm:$0xff]
    %v1911 = vld [vmem:[#allocation2 + $0x248] sm:$0xff]
    %v1912 = vld [vmem:[#allocation2 + $0x250] sm:$0xff]
    %v1913 = vld [vmem:[#allocation2 + $0x258] sm:$0xff]
    %v1914 = vld [vmem:[#allocation2 + $0x260] sm:$0xff]
    %v1915 = vld [vmem:[#allocation2 + $0x268] sm:$0xff]
    %v1916 = vld [vmem:[#allocation2 + $0x270] sm:$0xff]
    %v1917 = vld [vmem:[#allocation2 + $0x278] sm:$0xff]
    %v1918 = vld [vmem:[#allocation2 + $0x280] sm:$0xff]
    %v1919 = vld [vmem:[#allocation2 + $0x288] sm:$0xff]
    %v1920 = vld [vmem:[#allocation2 + $0x290] sm:$0xff]
    %v1921 = vld [vmem:[#allocation2 + $0x298] sm:$0xff]
    %v1922 = vld [vmem:[#allocation2 + $0x2a0] sm:$0xff]
    %v1923 = vld [vmem:[#allocation2 + $0x2a8] sm:$0xff]
    %v1924 = vld [vmem:[#allocation2 + $0x2b0] sm:$0xff]
    %v1925 = vld [vmem:[#allocation2 + $0x2b8] sm:$0xff]
    %v1926 = vld [vmem:[#allocation2 + $0x2c0] sm:$0xff]
    %v1927 = vld [vmem:[#allocation2 + $0x2c8] sm:$0xff]
    %v1928 = vld [vmem:[#allocation2 + $0x2d0] sm:$0xff]
    %v1929 = vld [vmem:[#allocation2 + $0x2d8] sm:$0xff]
    %v1930 = vld [vmem:[#allocation2 + $0x2e0] sm:$0xff]
    %v1931 = vld [vmem:[#allocation2 + $0x2e8] sm:$0xff]
    %v1932 = vld [vmem:[#allocation2 + $0x2f0] sm:$0xff]
    %v1933 = vld [vmem:[#allocation2 + $0x2f8] sm:$0xff]
    %v1934 = vld [vmem:[#allocation2 + $0x300] sm:$0xff]
    %v1935 = vld [vmem:[#allocation2 + $0x308] sm:$0xff]
    %v1936 = vld [vmem:[#allocation2 + $0x310] sm:$0xff]
    %v1937 = vld [vmem:[#allocation2 + $0x318] sm:$0xff]
    %v1938 = vld [vmem:[#allocation2 + $0x320] sm:$0xff]
    %v1939 = vld [vmem:[#allocation2 + $0x328] sm:$0xff]
    %v1940 = vld [vmem:[#allocation2 + $0x330] sm:$0xff]
    %v1941 = vld [vmem:[#allocation2 + $0x338] sm:$0xff]
    %v1942 = vld [vmem:[#allocation2 + $0x340] sm:$0xff]
    %v1943 = vld [vmem:[#allocation2 + $0x348] sm:$0xff]
    %v1944 = vld [vmem:[#allocation2 + $0x350] sm:$0xff]
    %v1945 = vld [vmem:[#allocation2 + $0x358] sm:$0xff]
    %v1946 = vld [vmem:[#allocation2 + $0x360] sm:$0xff]
    %v1947 = vld [vmem:[#allocation2 + $0x368] sm:$0xff]
    %v1948 = vld [vmem:[#allocation2 + $0x370] sm:$0xff]
    %v1949 = vld [vmem:[#allocation2 + $0x378] sm:$0xff]
    %v1950 = vld [vmem:[#allocation2 + $0x380] sm:$0xff]
    %v1951 = vld [vmem:[#allocation2 + $0x388] sm:$0xff]
    %v1952 = vld [vmem:[#allocation2 + $0x390] sm:$0xff]
    %v1953 = vld [vmem:[#allocation2 + $0x398] sm:$0xff]
    %v1954 = vld [vmem:[#allocation2 + $0x3a0] sm:$0xff]
    %v1955 = vld [vmem:[#allocation2 + $0x3a8] sm:$0xff]
    %v1956 = vld [vmem:[#allocation2 + $0x3b0] sm:$0xff]
    %v1957 = vld [vmem:[#allocation2 + $0x3b8] sm:$0xff]
    %v1958 = vld [vmem:[#allocation2 + $0x3c0] sm:$0xff]
    %v1959 = vld [vmem:[#allocation2 + $0x3c8] sm:$0xff]
    %v1960 = vld [vmem:[#allocation2 + $0x3d0] sm:$0xff]
    %v1961 = vld [vmem:[#allocation2 + $0x3d8] sm:$0xff]
    %v1962 = vld [vmem:[#allocation2 + $0x3e0] sm:$0xff]
    %v1963 = vld [vmem:[#allocation2 + $0x3e8] sm:$0xff]
    %v1964 = vld [vmem:[#allocation2 + $0x3f0] sm:$0xff]
    %v1965 = vld [vmem:[#allocation2 + $0x3f8] sm:$0xff]
    %v1966 = vld [vmem:[#allocation2 + $0x400] sm:$0xff]
    %v1967 = vld [vmem:[#allocation2 + $0x408] sm:$0xff]
    %v1968 = vld [vmem:[#allocation2 + $0x410] sm:$0xff]
    %v1969 = vld [vmem:[#allocation2 + $0x418] sm:$0xff]
    %v1970 = vld [vmem:[#allocation2 + $0x420] sm:$0xff]
    %v1971 = vld [vmem:[#allocation2 + $0x428] sm:$0xff]
    %v1972 = vld [vmem:[#allocation2 + $0x430] sm:$0xff]
    %v1973 = vld [vmem:[%s4] sm:$0xff]
    %v1974 = vld [vmem:[%s4 + $0x8] sm:$0xff]
    %1976 = vset.pattern.permute.xlu0 0
    %1977 = vperm.xlu0 %1976, %v1973
    %v1978 = vpop.permute.xlu0 %1977
    %1981 = vset.pattern.permute.xlu0 0
    %1982 = vperm.xlu0 %1981, %v1974
    %v1983 = vpop.permute.xlu0 %1982
    %vm1985 = vcmask 588800
    %v1987 = vsel %vm1985, %v1836, 0
    %v1990 = vsel %vm1985, %v1837, 0
    %1992 = vmatprep.subr.mxu0 %v1839
    %1993 = vmatpush1.msra.mxu0 %v1838
    %1994 = vmatprep.subr.mxu0 %v1854
    %1995 = vmatpush1.msra.mxu0 %v1853
    %1996 = vmatprep.subr.mxu0 %v1869
    %1997 = vmatpush1.msra.mxu0 %v1868
    %1998 = vmatprep.subr.mxu0 %v1884
    %1999 = vmatpush1.msra.mxu0 %v1883
    %2000 = vmatprep.subr.mxu0 %v1899
    %2001 = vmatpush1.msra.mxu0 %v1898
    %2002 = vmatprep.subr.mxu0 %v1914
    %2003 = vmatpush1.msra.mxu0 %v1913
    %2004 = vmatprep.subr.mxu0 %v1929
    %2005 = vmatpush1.msra.mxu0 %v1928
    %2006 = vmatprep.subr.mxu0 %v1944
    %2007 = vmatpush1.msra.mxu0 %v1943
    %2008 = vmatprep.subr.mxu0 %v1959
    %2009 = vmatpush1.msra.mxu0 %v1958
    %2010 = vmatprep.subr.mxu0 0.0
    %2011 = vmatpush1.msra.mxu0 0.0
    %2012 = vmatprep.subr.mxu0 0.0
    %2013 = vmatpush1.msra.mxu0 0.0
    %2014 = vmatprep.subr.mxu0 0.0
    %2015 = vmatpush1.msra.mxu0 0.0
    %2016 = vmatprep.subr.mxu0 0.0
    %2017 = vmatpush1.msra.mxu0 0.0
    %2018 = vmatprep.subr.mxu0 0.0
    %2019 = vmatpush1.msra.mxu0 0.0
    %2020 = vmatprep.subr.mxu0 0.0
    %2021 = vmatpush1.msra.mxu0 0.0
    %2022 = vmatprep.subr.mxu0 0.0
    %2023 = vmatpush1.msra.mxu0 0.0
    %2024 = vmatprep.subr.mxu0 0.0
    %2025 = vmatpush1.msra.mxu0 0.0
    %2026 = vmatprep.subr.mxu0 0.0
    %2027 = vmatpush1.msra.mxu0 0.0
    %2028 = vmatprep.subr.mxu0 0.0
    %2029 = vmatpush1.msra.mxu0 0.0
    %2030 = vmatprep.subr.mxu0 0.0
    %2031 = vmatpush1.msra.mxu0 0.0
    %2032 = vmatprep.subr.mxu0 0.0
    %2033 = vmatpush1.msra.mxu0 0.0
    %2034 = vmatprep.subr.mxu0 0.0
    %2035 = vmatpush1.msra.mxu0 0.0
    %2036 = vmatprep.subr.mxu0 0.0
    %2037 = vmatpush1.msra.mxu0 0.0
    %2038 = vmatprep.subr.mxu0 0.0
    %2039 = vmatpush1.msra.mxu0 0.0
    %2040 = vmatprep.subr.mxu0 0.0
    %2041 = vmatpush1.msra.mxu0 0.0
    %2042 = vmatprep.subr.mxu0 0.0
    %2043 = vmatpush1.msra.mxu0 0.0
    %2044 = vmatprep.subr.mxu0 0.0
    %2045 = vmatpush1.msra.mxu0 0.0
    %2046 = vmatprep.subr.mxu0 0.0
    %2047 = vmatpush1.msra.mxu0 0.0
    %2048 = vmatprep.subr.mxu0 0.0
    %2049 = vmatpush1.msra.mxu0 0.0
    %2050 = vmatprep.subr.mxu0 0.0
    %2051 = vmatpush1.msra.mxu0 0.0
    %2052 = vmatprep.subr.mxu0 0.0
    %2053 = vmatpush1.msra.mxu0 0.0
    %2054 = vmatprep.subr.mxu0 0.0
    %2055 = vmatpush1.msra.mxu0 0.0
    %2056 = vmatprep.mubr.f32.mxu0 0.0
    %2057 = vmatmul.mubr.f32.gmra.mrb[0].mxu0 %v1987
    %v2058 = vpop.f32.mrb[0].mxu0
    %v2059 = vadd.f32 %v1978, %v2058
    %v2060 = vpop.f32.mrb[0].mxu0
    %v2061 = vadd.f32 %v1978, %v2060
    %2062 = vmatprep.mubr.f32.mxu0 0.0
    %2063 = vmatmul.mubr.f32.gmra.mrb[0].mxu0 %v1990
    %v2064 = vpop.f32.mrb[0].mxu0
    %v2065 = vadd.f32 %v1983, %v2064
    %v2066 = vpop.f32.mrb[0].mxu0
    %v2067 = vadd.f32 %v1983, %v2066
    %2068 = vdwg.mxu0
    %2069 = vmatprep.subr.mxu0 %v1841
    %2070 = vmatpush1.msra.mxu0 %v1840
    %2071 = vmatprep.subr.mxu0 %v1856
    %2072 = vmatpush1.msra.mxu0 %v1855
    %2073 = vmatprep.subr.mxu0 %v1871
    %2074 = vmatpush1.msra.mxu0 %v1870
    %2075 = vmatprep.subr.mxu0 %v1886
    %2076 = vmatpush1.msra.mxu0 %v1885
    %2077 = vmatprep.subr.mxu0 %v1901
    %2078 = vmatpush1.msra.mxu0 %v1900
    %2079 = vmatprep.subr.mxu0 %v1916
    %2080 = vmatpush1.msra.mxu0 %v1915
    %2081 = vmatprep.subr.mxu0 %v1931
    %2082 = vmatpush1.msra.mxu0 %v1930
    %2083 = vmatprep.subr.mxu0 %v1946
    %2084 = vmatpush1.msra.mxu0 %v1945
    %2085 = vmatprep.subr.mxu0 %v1961
    %2086 = vmatpush1.msra.mxu0 %v1960
    %2087 = vmatprep.subr.mxu0 0.0
    %2088 = vmatpush1.msra.mxu0 0.0
    %2089 = vmatprep.subr.mxu0 0.0
    %2090 = vmatpush1.msra.mxu0 0.0
    %2091 = vmatprep.subr.mxu0 0.0
    %2092 = vmatpush1.msra.mxu0 0.0
    %2093 = vmatprep.subr.mxu0 0.0
    %2094 = vmatpush1.msra.mxu0 0.0
    %2095 = vmatprep.subr.mxu0 0.0
    %2096 = vmatpush1.msra.mxu0 0.0
    %2097 = vmatprep.subr.mxu0 0.0
    %2098 = vmatpush1.msra.mxu0 0.0
    %2099 = vmatprep.subr.mxu0 0.0
    %2100 = vmatpush1.msra.mxu0 0.0
    %2101 = vmatprep.subr.mxu0 0.0
    %2102 = vmatpush1.msra.mxu0 0.0
    %2103 = vmatprep.subr.mxu0 0.0
    %2104 = vmatpush1.msra.mxu0 0.0
    %2105 = vmatprep.subr.mxu0 0.0
    %2106 = vmatpush1.msra.mxu0 0.0
    %2107 = vmatprep.subr.mxu0 0.0
    %2108 = vmatpush1.msra.mxu0 0.0
    %2109 = vmatprep.subr.mxu0 0.0
    %2110 = vmatpush1.msra.mxu0 0.0
    %2111 = vmatprep.subr.mxu0 0.0
    %2112 = vmatpush1.msra.mxu0 0.0
    %2113 = vmatprep.subr.mxu0 0.0
    %2114 = vmatpush1.msra.mxu0 0.0
    %2115 = vmatprep.subr.mxu0 0.0
    %2116 = vmatpush1.msra.mxu0 0.0
    %2117 = vmatprep.subr.mxu0 0.0
    %2118 = vmatpush1.msra.mxu0 0.0
    %2119 = vmatprep.subr.mxu0 0.0
    %2120 = vmatpush1.msra.mxu0 0.0
    %2121 = vmatprep.subr.mxu0 0.0
    %2122 = vmatpush1.msra.mxu0 0.0
    %2123 = vmatprep.subr.mxu0 0.0
    %2124 = vmatpush1.msra.mxu0 0.0
    %2125 = vmatprep.subr.mxu0 0.0
    %2126 = vmatpush1.msra.mxu0 0.0
    %2127 = vmatprep.subr.mxu0 0.0
    %2128 = vmatpush1.msra.mxu0 0.0
    %2129 = vmatprep.subr.mxu0 0.0
    %2130 = vmatpush1.msra.mxu0 0.0
    %2131 = vmatprep.subr.mxu0 0.0
    %2132 = vmatpush1.msra.mxu0 0.0
    %2133 = vmatprep.mubr.f32.mxu0 0.0
    %2134 = vmatmul.mubr.f32.gmra.mrb[0].mxu0 %v1987
    %v2135 = vpop.f32.mrb[0].mxu0
    %v2136 = vadd.f32 %v1978, %v2135
    %v2137 = vpop.f32.mrb[0].mxu0
    %v2138 = vadd.f32 %v1978, %v2137
    %2139 = vmatprep.mubr.f32.mxu0 0.0
    %2140 = vmatmul.mubr.f32.gmra.mrb[0].mxu0 %v1990
    %v2141 = vpop.f32.mrb[0].mxu0
    %v2142 = vadd.f32 %v1983, %v2141
    %v2143 = vpop.f32.mrb[0].mxu0
    %v2144 = vadd.f32 %v1983, %v2143
    %2145 = vdwg.mxu0
    %2146 = vmatprep.subr.mxu0 %v1843
    %2147 = vmatpush1.msra.mxu0 %v1842
    %2148 = vmatprep.subr.mxu0 %v1858
    %2149 = vmatpush1.msra.mxu0 %v1857
    %2150 = vmatprep.subr.mxu0 %v1873
    %2151 = vmatpush1.msra.mxu0 %v1872
    %2152 = vmatprep.subr.mxu0 %v1888
    %2153 = vmatpush1.msra.mxu0 %v1887
    %2154 = vmatprep.subr.mxu0 %v1903
    %2155 = vmatpush1.msra.mxu0 %v1902
    %2156 = vmatprep.subr.mxu0 %v1918
    %2157 = vmatpush1.msra.mxu0 %v1917
    %2158 = vmatprep.subr.mxu0 %v1933
    %2159 = vmatpush1.msra.mxu0 %v1932
    %2160 = vmatprep.subr.mxu0 %v1948
    %2161 = vmatpush1.msra.mxu0 %v1947
    %2162 = vmatprep.subr.mxu0 %v1963
    %2163 = vmatpush1.msra.mxu0 %v1962
    %2164 = vmatprep.subr.mxu0 0.0
    %2165 = vmatpush1.msra.mxu0 0.0
    %2166 = vmatprep.subr.mxu0 0.0
    %2167 = vmatpush1.msra.mxu0 0.0
    %2168 = vmatprep.subr.mxu0 0.0
    %2169 = vmatpush1.msra.mxu0 0.0
    %2170 = vmatprep.subr.mxu0 0.0
    %2171 = vmatpush1.msra.mxu0 0.0
    %2172 = vmatprep.subr.mxu0 0.0
    %2173 = vmatpush1.msra.mxu0 0.0
    %2174 = vmatprep.subr.mxu0 0.0
    %2175 = vmatpush1.msra.mxu0 0.0
    %2176 = vmatprep.subr.mxu0 0.0
    %2177 = vmatpush1.msra.mxu0 0.0
    %2178 = vmatprep.subr.mxu0 0.0
    %2179 = vmatpush1.msra.mxu0 0.0
    %2180 = vmatprep.subr.mxu0 0.0
    %2181 = vmatpush1.msra.mxu0 0.0
    %2182 = vmatprep.subr.mxu0 0.0
    %2183 = vmatpush1.msra.mxu0 0.0
    %2184 = vmatprep.subr.mxu0 0.0
    %2185 = vmatpush1.msra.mxu0 0.0
    %2186 = vmatprep.subr.mxu0 0.0
    %2187 = vmatpush1.msra.mxu0 0.0
    %2188 = vmatprep.subr.mxu0 0.0
    %2189 = vmatpush1.msra.mxu0 0.0
    %2190 = vmatprep.subr.mxu0 0.0
    %2191 = vmatpush1.msra.mxu0 0.0
    %2192 = vmatprep.subr.mxu0 0.0
    %2193 = vmatpush1.msra.mxu0 0.0
    %2194 = vmatprep.subr.mxu0 0.0
    %2195 = vmatpush1.msra.mxu0 0.0
    %2196 = vmatprep.subr.mxu0 0.0
    %2197 = vmatpush1.msra.mxu0 0.0
    %2198 = vmatprep.subr.mxu0 0.0
    %2199 = vmatpush1.msra.mxu0 0.0
    %2200 = vmatprep.subr.mxu0 0.0
    %2201 = vmatpush1.msra.mxu0 0.0
    %2202 = vmatprep.subr.mxu0 0.0
    %2203 = vmatpush1.msra.mxu0 0.0
    %2204 = vmatprep.subr.mxu0 0.0
    %2205 = vmatpush1.msra.mxu0 0.0
    %2206 = vmatprep.subr.mxu0 0.0
    %2207 = vmatpush1.msra.mxu0 0.0
    %2208 = vmatprep.subr.mxu0 0.0
    %2209 = vmatpush1.msra.mxu0 0.0
    %2210 = vmatprep.mubr.f32.mxu0 0.0
    %2211 = vmatmul.mubr.f32.gmra.mrb[0].mxu0 %v1987
    %v2212 = vpop.f32.mrb[0].mxu0
    %v2213 = vadd.f32 %v1978, %v2212
    %v2214 = vpop.f32.mrb[0].mxu0
    %v2215 = vadd.f32 %v1978, %v2214
    %2216 = vmatprep.mubr.f32.mxu0 0.0
    %2217 = vmatmul.mubr.f32.gmra.mrb[0].mxu0 %v1990
    %v2218 = vpop.f32.mrb[0].mxu0
    %v2219 = vadd.f32 %v1983, %v2218
    %v2220 = vpop.f32.mrb[0].mxu0
    %v2221 = vadd.f32 %v1983, %v2220
    %2222 = vdwg.mxu0
    %2223 = vmatprep.subr.mxu0 %v1845
    %2224 = vmatpush1.msra.mxu0 %v1844
    %2225 = vmatprep.subr.mxu0 %v1860
    %2226 = vmatpush1.msra.mxu0 %v1859
    %2227 = vmatprep.subr.mxu0 %v1875
    %2228 = vmatpush1.msra.mxu0 %v1874
    %2229 = vmatprep.subr.mxu0 %v1890
    %2230 = vmatpush1.msra.mxu0 %v1889
    %2231 = vmatprep.subr.mxu0 %v1905
    %2232 = vmatpush1.msra.mxu0 %v1904
    %2233 = vmatprep.subr.mxu0 %v1920
    %2234 = vmatpush1.msra.mxu0 %v1919
    %2235 = vmatprep.subr.mxu0 %v1935
    %2236 = vmatpush1.msra.mxu0 %v1934
    %2237 = vmatprep.subr.mxu0 %v1950
    %2238 = vmatpush1.msra.mxu0 %v1949
    %2239 = vmatprep.subr.mxu0 %v1965
    %2240 = vmatpush1.msra.mxu0 %v1964
    %2241 = vmatprep.subr.mxu0 0.0
    %2242 = vmatpush1.msra.mxu0 0.0
    %2243 = vmatprep.subr.mxu0 0.0
    %2244 = vmatpush1.msra.mxu0 0.0
    %2245 = vmatprep.subr.mxu0 0.0
    %2246 = vmatpush1.msra.mxu0 0.0
    %2247 = vmatprep.subr.mxu0 0.0
    %2248 = vmatpush1.msra.mxu0 0.0
    %2249 = vmatprep.subr.mxu0 0.0
    %2250 = vmatpush1.msra.mxu0 0.0
    %2251 = vmatprep.subr.mxu0 0.0
    %2252 = vmatpush1.msra.mxu0 0.0
    %2253 = vmatprep.subr.mxu0 0.0
    %2254 = vmatpush1.msra.mxu0 0.0
    %2255 = vmatprep.subr.mxu0 0.0
    %2256 = vmatpush1.msra.mxu0 0.0
    %2257 = vmatprep.subr.mxu0 0.0
    %2258 = vmatpush1.msra.mxu0 0.0
    %2259 = vmatprep.subr.mxu0 0.0
    %2260 = vmatpush1.msra.mxu0 0.0
    %2261 = vmatprep.subr.mxu0 0.0
    %2262 = vmatpush1.msra.mxu0 0.0
    %2263 = vmatprep.subr.mxu0 0.0
    %2264 = vmatpush1.msra.mxu0 0.0
    %2265 = vmatprep.subr.mxu0 0.0
    %2266 = vmatpush1.msra.mxu0 0.0
    %2267 = vmatprep.subr.mxu0 0.0
    %2268 = vmatpush1.msra.mxu0 0.0
    %2269 = vmatprep.subr.mxu0 0.0
    %2270 = vmatpush1.msra.mxu0 0.0
    %2271 = vmatprep.subr.mxu0 0.0
    %2272 = vmatpush1.msra.mxu0 0.0
    %2273 = vmatprep.subr.mxu0 0.0
    %2274 = vmatpush1.msra.mxu0 0.0
    %2275 = vmatprep.subr.mxu0 0.0
    %2276 = vmatpush1.msra.mxu0 0.0
    %2277 = vmatprep.subr.mxu0 0.0
    %2278 = vmatpush1.msra.mxu0 0.0
    %2279 = vmatprep.subr.mxu0 0.0
    %2280 = vmatpush1.msra.mxu0 0.0
    %2281 = vmatprep.subr.mxu0 0.0
    %2282 = vmatpush1.msra.mxu0 0.0
    %2283 = vmatprep.subr.mxu0 0.0
    %2284 = vmatpush1.msra.mxu0 0.0
    %2285 = vmatprep.subr.mxu0 0.0
    %2286 = vmatpush1.msra.mxu0 0.0
    %2287 = vmatprep.mubr.f32.mxu0 0.0
    %2288 = vmatmul.mubr.f32.gmra.mrb[0].mxu0 %v1987
    %v2289 = vpop.f32.mrb[0].mxu0
    %v2290 = vadd.f32 %v1978, %v2289
    %v2291 = vpop.f32.mrb[0].mxu0
    %v2292 = vadd.f32 %v1978, %v2291
    %2293 = vmatprep.mubr.f32.mxu0 0.0
    %2294 = vmatmul.mubr.f32.gmra.mrb[0].mxu0 %v1990
    %v2295 = vpop.f32.mrb[0].mxu0
    %v2296 = vadd.f32 %v1983, %v2295
    %v2297 = vpop.f32.mrb[0].mxu0
    %v2298 = vadd.f32 %v1983, %v2297
    %2299 = vdwg.mxu0
    %2300 = vmatprep.subr.mxu0 %v1847
    %2301 = vmatpush1.msra.mxu0 %v1846
    %2302 = vmatprep.subr.mxu0 %v1862
    %2303 = vmatpush1.msra.mxu0 %v1861
    %2304 = vmatprep.subr.mxu0 %v1877
    %2305 = vmatpush1.msra.mxu0 %v1876
    %2306 = vmatprep.subr.mxu0 %v1892
    %2307 = vmatpush1.msra.mxu0 %v1891
    %2308 = vmatprep.subr.mxu0 %v1907
    %2309 = vmatpush1.msra.mxu0 %v1906
    %2310 = vmatprep.subr.mxu0 %v1922
    %2311 = vmatpush1.msra.mxu0 %v1921
    %2312 = vmatprep.subr.mxu0 %v1937
    %2313 = vmatpush1.msra.mxu0 %v1936
    %2314 = vmatprep.subr.mxu0 %v1952
    %2315 = vmatpush1.msra.mxu0 %v1951
    %2316 = vmatprep.subr.mxu0 %v1967
    %2317 = vmatpush1.msra.mxu0 %v1966
    %2318 = vmatprep.subr.mxu0 0.0
    %2319 = vmatpush1.msra.mxu0 0.0
    %2320 = vmatprep.subr.mxu0 0.0
    %2321 = vmatpush1.msra.mxu0 0.0
    %2322 = vmatprep.subr.mxu0 0.0
    %2323 = vmatpush1.msra.mxu0 0.0
    %2324 = vmatprep.subr.mxu0 0.0
    %2325 = vmatpush1.msra.mxu0 0.0
    %2326 = vmatprep.subr.mxu0 0.0
    %2327 = vmatpush1.msra.mxu0 0.0
    %2328 = vmatprep.subr.mxu0 0.0
    %2329 = vmatpush1.msra.mxu0 0.0
    %2330 = vmatprep.subr.mxu0 0.0
    %2331 = vmatpush1.msra.mxu0 0.0
    %2332 = vmatprep.subr.mxu0 0.0
    %2333 = vmatpush1.msra.mxu0 0.0
    %2334 = vmatprep.subr.mxu0 0.0
    %2335 = vmatpush1.msra.mxu0 0.0
    %2336 = vmatprep.subr.mxu0 0.0
    %2337 = vmatpush1.msra.mxu0 0.0
    %2338 = vmatprep.subr.mxu0 0.0
    %2339 = vmatpush1.msra.mxu0 0.0
    %2340 = vmatprep.subr.mxu0 0.0
    %2341 = vmatpush1.msra.mxu0 0.0
    %2342 = vmatprep.subr.mxu0 0.0
    %2343 = vmatpush1.msra.mxu0 0.0
    %2344 = vmatprep.subr.mxu0 0.0
    %2345 = vmatpush1.msra.mxu0 0.0
    %2346 = vmatprep.subr.mxu0 0.0
    %2347 = vmatpush1.msra.mxu0 0.0
    %2348 = vmatprep.subr.mxu0 0.0
    %2349 = vmatpush1.msra.mxu0 0.0
    %2350 = vmatprep.subr.mxu0 0.0
    %2351 = vmatpush1.msra.mxu0 0.0
    %2352 = vmatprep.subr.mxu0 0.0
    %2353 = vmatpush1.msra.mxu0 0.0
    %2354 = vmatprep.subr.mxu0 0.0
    %2355 = vmatpush1.msra.mxu0 0.0
    %2356 = vmatprep.subr.mxu0 0.0
    %2357 = vmatpush1.msra.mxu0 0.0
    %2358 = vmatprep.subr.mxu0 0.0
    %2359 = vmatpush1.msra.mxu0 0.0
    %2360 = vmatprep.subr.mxu0 0.0
    %2361 = vmatpush1.msra.mxu0 0.0
    %2362 = vmatprep.subr.mxu0 0.0
    %2363 = vmatpush1.msra.mxu0 0.0
    %2364 = vmatprep.mubr.f32.mxu0 0.0
    %2365 = vmatmul.mubr.f32.gmra.mrb[0].mxu0 %v1987
    %v2366 = vpop.f32.mrb[0].mxu0
    %v2367 = vadd.f32 %v1978, %v2366
    %v2368 = vpop.f32.mrb[0].mxu0
    %v2369 = vadd.f32 %v1978, %v2368
    %2370 = vmatprep.mubr.f32.mxu0 0.0
    %2371 = vmatmul.mubr.f32.gmra.mrb[0].mxu0 %v1990
    %v2372 = vpop.f32.mrb[0].mxu0
    %v2373 = vadd.f32 %v1983, %v2372
    %v2374 = vpop.f32.mrb[0].mxu0
    %v2375 = vadd.f32 %v1983, %v2374
    %2376 = vdwg.mxu0
    %2377 = vmatprep.subr.mxu0 %v1849
    %2378 = vmatpush1.msra.mxu0 %v1848
    %2379 = vmatprep.subr.mxu0 %v1864
    %2380 = vmatpush1.msra.mxu0 %v1863
    %2381 = vmatprep.subr.mxu0 %v1879
    %2382 = vmatpush1.msra.mxu0 %v1878
    %2383 = vmatprep.subr.mxu0 %v1894
    %2384 = vmatpush1.msra.mxu0 %v1893
    %2385 = vmatprep.subr.mxu0 %v1909
    %2386 = vmatpush1.msra.mxu0 %v1908
    %2387 = vmatprep.subr.mxu0 %v1924
    %2388 = vmatpush1.msra.mxu0 %v1923
    %2389 = vmatprep.subr.mxu0 %v1939
    %2390 = vmatpush1.msra.mxu0 %v1938
    %2391 = vmatprep.subr.mxu0 %v1954
    %2392 = vmatpush1.msra.mxu0 %v1953
    %2393 = vmatprep.subr.mxu0 %v1969
    %2394 = vmatpush1.msra.mxu0 %v1968
    %2395 = vmatprep.subr.mxu0 0.0
    %2396 = vmatpush1.msra.mxu0 0.0
    %2397 = vmatprep.subr.mxu0 0.0
    %2398 = vmatpush1.msra.mxu0 0.0
    %2399 = vmatprep.subr.mxu0 0.0
    %2400 = vmatpush1.msra.mxu0 0.0
    %2401 = vmatprep.subr.mxu0 0.0
    %2402 = vmatpush1.msra.mxu0 0.0
    %2403 = vmatprep.subr.mxu0 0.0
    %2404 = vmatpush1.msra.mxu0 0.0
    %2405 = vmatprep.subr.mxu0 0.0
    %2406 = vmatpush1.msra.mxu0 0.0
    %2407 = vmatprep.subr.mxu0 0.0
    %2408 = vmatpush1.msra.mxu0 0.0
    %2409 = vmatprep.subr.mxu0 0.0
    %2410 = vmatpush1.msra.mxu0 0.0
    %2411 = vmatprep.subr.mxu0 0.0
    %2412 = vmatpush1.msra.mxu0 0.0
    %2413 = vmatprep.subr.mxu0 0.0
    %2414 = vmatpush1.msra.mxu0 0.0
    %2415 = vmatprep.subr.mxu0 0.0
    %2416 = vmatpush1.msra.mxu0 0.0
    %2417 = vmatprep.subr.mxu0 0.0
    %2418 = vmatpush1.msra.mxu0 0.0
    %2419 = vmatprep.subr.mxu0 0.0
    %2420 = vmatpush1.msra.mxu0 0.0
    %2421 = vmatprep.subr.mxu0 0.0
    %2422 = vmatpush1.msra.mxu0 0.0
    %2423 = vmatprep.subr.mxu0 0.0
    %2424 = vmatpush1.msra.mxu0 0.0
    %2425 = vmatprep.subr.mxu0 0.0
    %2426 = vmatpush1.msra.mxu0 0.0
    %2427 = vmatprep.subr.mxu0 0.0
    %2428 = vmatpush1.msra.mxu0 0.0
    %2429 = vmatprep.subr.mxu0 0.0
    %2430 = vmatpush1.msra.mxu0 0.0
    %2431 = vmatprep.subr.mxu0 0.0
    %2432 = vmatpush1.msra.mxu0 0.0
    %2433 = vmatprep.subr.mxu0 0.0
    %2434 = vmatpush1.msra.mxu0 0.0
    %2435 = vmatprep.subr.mxu0 0.0
    %2436 = vmatpush1.msra.mxu0 0.0
    %2437 = vmatprep.subr.mxu0 0.0
    %2438 = vmatpush1.msra.mxu0 0.0
    %2439 = vmatprep.subr.mxu0 0.0
    %2440 = vmatpush1.msra.mxu0 0.0
    %2441 = vmatprep.mubr.f32.mxu0 0.0
    %2442 = vmatmul.mubr.f32.gmra.mrb[0].mxu0 %v1987
    %v2443 = vpop.f32.mrb[0].mxu0
    %v2444 = vadd.f32 %v1978, %v2443
    %v2445 = vpop.f32.mrb[0].mxu0
    %v2446 = vadd.f32 %v1978, %v2445
    %2447 = vmatprep.mubr.f32.mxu0 0.0
    %2448 = vmatmul.mubr.f32.gmra.mrb[0].mxu0 %v1990
    %v2449 = vpop.f32.mrb[0].mxu0
    %v2450 = vadd.f32 %v1983, %v2449
    %v2451 = vpop.f32.mrb[0].mxu0
    %v2452 = vadd.f32 %v1983, %v2451
    %2453 = vdwg.mxu0
    %2454 = vmatprep.subr.mxu0 %v1851
    %2455 = vmatpush1.msra.mxu0 %v1850
    %2456 = vmatprep.subr.mxu0 %v1866
    %2457 = vmatpush1.msra.mxu0 %v1865
    %2458 = vmatprep.subr.mxu0 %v1881
    %2459 = vmatpush1.msra.mxu0 %v1880
    %2460 = vmatprep.subr.mxu0 %v1896
    %2461 = vmatpush1.msra.mxu0 %v1895
    %2462 = vmatprep.subr.mxu0 %v1911
    %2463 = vmatpush1.msra.mxu0 %v1910
    %2464 = vmatprep.subr.mxu0 %v1926
    %2465 = vmatpush1.msra.mxu0 %v1925
    %2466 = vmatprep.subr.mxu0 %v1941
    %2467 = vmatpush1.msra.mxu0 %v1940
    %2468 = vmatprep.subr.mxu0 %v1956
    %2469 = vmatpush1.msra.mxu0 %v1955
    %2470 = vmatprep.subr.mxu0 %v1971
    %2471 = vmatpush1.msra.mxu0 %v1970
    %2472 = vmatprep.subr.mxu0 0.0
    %2473 = vmatpush1.msra.mxu0 0.0
    %2474 = vmatprep.subr.mxu0 0.0
    %2475 = vmatpush1.msra.mxu0 0.0
    %2476 = vmatprep.subr.mxu0 0.0
    %2477 = vmatpush1.msra.mxu0 0.0
    %2478 = vmatprep.subr.mxu0 0.0
    %2479 = vmatpush1.msra.mxu0 0.0
    %2480 = vmatprep.subr.mxu0 0.0
    %2481 = vmatpush1.msra.mxu0 0.0
    %2482 = vmatprep.subr.mxu0 0.0
    %2483 = vmatpush1.msra.mxu0 0.0
    %2484 = vmatprep.subr.mxu0 0.0
    %2485 = vmatpush1.msra.mxu0 0.0
    %2486 = vmatprep.subr.mxu0 0.0
    %2487 = vmatpush1.msra.mxu0 0.0
    %2488 = vmatprep.subr.mxu0 0.0
    %2489 = vmatpush1.msra.mxu0 0.0
    %2490 = vmatprep.subr.mxu0 0.0
    %2491 = vmatpush1.msra.mxu0 0.0
    %2492 = vmatprep.subr.mxu0 0.0
    %2493 = vmatpush1.msra.mxu0 0.0
    %2494 = vmatprep.subr.mxu0 0.0
    %2495 = vmatpush1.msra.mxu0 0.0
    %2496 = vmatprep.subr.mxu0 0.0
    %2497 = vmatpush1.msra.mxu0 0.0
    %2498 = vmatprep.subr.mxu0 0.0
    %2499 = vmatpush1.msra.mxu0 0.0
    %2500 = vmatprep.subr.mxu0 0.0
    %2501 = vmatpush1.msra.mxu0 0.0
    %2502 = vmatprep.subr.mxu0 0.0
    %2503 = vmatpush1.msra.mxu0 0.0
    %2504 = vmatprep.subr.mxu0 0.0
    %2505 = vmatpush1.msra.mxu0 0.0
    %2506 = vmatprep.subr.mxu0 0.0
    %2507 = vmatpush1.msra.mxu0 0.0
    %2508 = vmatprep.subr.mxu0 0.0
    %2509 = vmatpush1.msra.mxu0 0.0
    %2510 = vmatprep.subr.mxu0 0.0
    %2511 = vmatpush1.msra.mxu0 0.0
    %2512 = vmatprep.subr.mxu0 0.0
    %2513 = vmatpush1.msra.mxu0 0.0
    %2514 = vmatprep.subr.mxu0 0.0
    %2515 = vmatpush1.msra.mxu0 0.0
    %2516 = vmatprep.subr.mxu0 0.0
    %2517 = vmatpush1.msra.mxu0 0.0
    %2518 = vmatprep.mubr.f32.mxu0 0.0
    %2519 = vmatmul.mubr.f32.gmra.mrb[0].mxu0 %v1987
    %v2520 = vpop.f32.mrb[0].mxu0
    %v2521 = vadd.f32 %v1978, %v2520
    %v2522 = vpop.f32.mrb[0].mxu0
    %v2523 = vadd.f32 %v1978, %v2522
    %2524 = vmatprep.mubr.f32.mxu0 0.0
    %2525 = vmatmul.mubr.f32.gmra.mrb[0].mxu0 %v1990
    %v2526 = vpop.f32.mrb[0].mxu0
    %v2527 = vadd.f32 %v1983, %v2526
    %v2528 = vpop.f32.mrb[0].mxu0
    %v2529 = vadd.f32 %v1983, %v2528
    %2530 = vdwg.mxu0
    %2531 = vmatprep.subr.mxu0 0.0
    %2532 = vmatpush1.msra.mxu0 %v1852
    %2533 = vmatprep.subr.mxu0 0.0
    %2534 = vmatpush1.msra.mxu0 %v1867
    %2535 = vmatprep.subr.mxu0 0.0
    %2536 = vmatpush1.msra.mxu0 %v1882
    %2537 = vmatprep.subr.mxu0 0.0
    %2538 = vmatpush1.msra.mxu0 %v1897
    %2539 = vmatprep.subr.mxu0 0.0
    %2540 = vmatpush1.msra.mxu0 %v1912
    %2541 = vmatprep.subr.mxu0 0.0
    %2542 = vmatpush1.msra.mxu0 %v1927
    %2543 = vmatprep.subr.mxu0 0.0
    %2544 = vmatpush1.msra.mxu0 %v1942
    %2545 = vmatprep.subr.mxu0 0.0
    %2546 = vmatpush1.msra.mxu0 %v1957
    %2547 = vmatprep.subr.mxu0 0.0
    %2548 = vmatpush1.msra.mxu0 %v1972
    %2549 = vmatprep.subr.mxu0 0.0
    %2550 = vmatpush1.msra.mxu0 0.0
    %2551 = vmatprep.subr.mxu0 0.0
    %2552 = vmatpush1.msra.mxu0 0.0
    %2553 = vmatprep.subr.mxu0 0.0
    %2554 = vmatpush1.msra.mxu0 0.0
    %2555 = vmatprep.subr.mxu0 0.0
    %2556 = vmatpush1.msra.mxu0 0.0
    %2557 = vmatprep.subr.mxu0 0.0
    %2558 = vmatpush1.msra.mxu0 0.0
    %2559 = vmatprep.subr.mxu0 0.0
    %2560 = vmatpush1.msra.mxu0 0.0
    %2561 = vmatprep.subr.mxu0 0.0
    %2562 = vmatpush1.msra.mxu0 0.0
    %2563 = vmatprep.subr.mxu0 0.0
    %2564 = vmatpush1.msra.mxu0 0.0
    %2565 = vmatprep.subr.mxu0 0.0
    %2566 = vmatpush1.msra.mxu0 0.0
    %2567 = vmatprep.subr.mxu0 0.0
    %2568 = vmatpush1.msra.mxu0 0.0
    %2569 = vmatprep.subr.mxu0 0.0
    %2570 = vmatpush1.msra.mxu0 0.0
    %2571 = vmatprep.subr.mxu0 0.0
    %2572 = vmatpush1.msra.mxu0 0.0
    %2573 = vmatprep.subr.mxu0 0.0
    %2574 = vmatpush1.msra.mxu0 0.0
    %2575 = vmatprep.subr.mxu0 0.0
    %2576 = vmatpush1.msra.mxu0 0.0
    %2577 = vmatprep.subr.mxu0 0.0
    %2578 = vmatpush1.msra.mxu0 0.0
    %2579 = vmatprep.subr.mxu0 0.0
    %2580 = vmatpush1.msra.mxu0 0.0
    %2581 = vmatprep.subr.mxu0 0.0
    %2582 = vmatpush1.msra.mxu0 0.0
    %2583 = vmatprep.subr.mxu0 0.0
    %2584 = vmatpush1.msra.mxu0 0.0
    %2585 = vmatprep.subr.mxu0 0.0
    %2586 = vmatpush1.msra.mxu0 0.0
    %2587 = vmatprep.subr.mxu0 0.0
    %2588 = vmatpush1.msra.mxu0 0.0
    %2589 = vmatprep.subr.mxu0 0.0
    %2590 = vmatpush1.msra.mxu0 0.0
    %2591 = vmatprep.subr.mxu0 0.0
    %2592 = vmatpush1.msra.mxu0 0.0
    %2593 = vmatprep.subr.mxu0 0.0
    %2594 = vmatpush1.msra.mxu0 0.0
    %2595 = vmatprep.mubr.f32.mxu0 0.0
    %2596 = vmatmul.mubr.f32.gmra.mrb[0].mxu0 %v1987
    %v2597 = vpop.f32.mrb[0].mxu0
    %v2598 = vadd.f32 %v1978, %v2597
    %v2599 = vpop.f32.mrb[0].mxu0
    %2600 = vmatprep.mubr.f32.mxu0 0.0
    %2601 = vmatmul.mubr.f32.gmra.mrb[0].mxu0 %v1990
    %v2602 = vpop.f32.mrb[0].mxu0
    %v2603 = vadd.f32 %v1983, %v2602
    %v2604 = vpop.f32.mrb[0].mxu0
    %2605 = vdwg.mxu0
    %v2606 = vmax.f32 %v2059, 0.0
    %v2607 = vmax.f32 %v2061, 0.0
    %v2608 = vmax.f32 %v2136, 0.0
    %v2609 = vmax.f32 %v2138, 0.0
    %v2610 = vmax.f32 %v2213, 0.0
    %v2611 = vmax.f32 %v2215, 0.0
    %v2612 = vmax.f32 %v2290, 0.0
    %v2613 = vmax.f32 %v2292, 0.0
    %v2614 = vmax.f32 %v2367, 0.0
    %v2615 = vmax.f32 %v2369, 0.0
    %v2616 = vmax.f32 %v2444, 0.0
    %v2617 = vmax.f32 %v2446, 0.0
    %v2618 = vmax.f32 %v2521, 0.0
    %v2619 = vmax.f32 %v2523, 0.0
    %v2620 = vmax.f32 %v2598, 0.0
    %v2621 = vmax.f32 %v2065, 0.0
    %v2622 = vmax.f32 %v2067, 0.0
    %v2623 = vmax.f32 %v2142, 0.0
    %v2624 = vmax.f32 %v2144, 0.0
    %v2625 = vmax.f32 %v2219, 0.0
    %v2626 = vmax.f32 %v2221, 0.0
    %v2627 = vmax.f32 %v2296, 0.0
    %v2628 = vmax.f32 %v2298, 0.0
    %v2629 = vmax.f32 %v2373, 0.0
    %v2630 = vmax.f32 %v2375, 0.0
    %v2631 = vmax.f32 %v2450, 0.0
    %v2632 = vmax.f32 %v2452, 0.0
    %v2633 = vmax.f32 %v2527, 0.0
    %v2634 = vmax.f32 %v2529, 0.0
    %v2635 = vmax.f32 %v2603, 0.0
    %2664 = vrot.lane.b32.xlu0 %v2606, 126
    %v2665 = vpop.permute.xlu0 %2664
    %2666 = vrot.lane.b32.xlu0 %v2607, 126
    %v2667 = vpop.permute.xlu0 %2666
    %2668 = vrot.lane.b32.xlu0 %v2608, 126
    %v2669 = vpop.permute.xlu0 %2668
    %2670 = vrot.lane.b32.xlu0 %v2609, 126
    %v2671 = vpop.permute.xlu0 %2670
    %2672 = vrot.lane.b32.xlu0 %v2610, 126
    %v2673 = vpop.permute.xlu0 %2672
    %2674 = vrot.lane.b32.xlu0 %v2611, 126
    %v2675 = vpop.permute.xlu0 %2674
    %2676 = vrot.lane.b32.xlu0 %v2612, 126
    %v2677 = vpop.permute.xlu0 %2676
    %2678 = vrot.lane.b32.xlu0 %v2613, 126
    %v2679 = vpop.permute.xlu0 %2678
    %2680 = vrot.lane.b32.xlu0 %v2614, 126
    %v2681 = vpop.permute.xlu0 %2680
    %2682 = vrot.lane.b32.xlu0 %v2615, 126
    %v2683 = vpop.permute.xlu0 %2682
    %2684 = vrot.lane.b32.xlu0 %v2616, 126
    %v2685 = vpop.permute.xlu0 %2684
    %2686 = vrot.lane.b32.xlu0 %v2617, 126
    %v2687 = vpop.permute.xlu0 %2686
    %2688 = vrot.lane.b32.xlu0 %v2618, 126
    %v2689 = vpop.permute.xlu0 %2688
    %2690 = vrot.lane.b32.xlu0 %v2619, 126
    %v2691 = vpop.permute.xlu0 %2690
    %2692 = vrot.lane.b32.xlu0 %v2621, 126
    %v2693 = vpop.permute.xlu0 %2692
    %2694 = vrot.lane.b32.xlu0 %v2622, 126
    %v2695 = vpop.permute.xlu0 %2694
    %2696 = vrot.lane.b32.xlu0 %v2623, 126
    %v2697 = vpop.permute.xlu0 %2696
    %2698 = vrot.lane.b32.xlu0 %v2624, 126
    %v2699 = vpop.permute.xlu0 %2698
    %2700 = vrot.lane.b32.xlu0 %v2625, 126
    %v2701 = vpop.permute.xlu0 %2700
    %2702 = vrot.lane.b32.xlu0 %v2626, 126
    %v2703 = vpop.permute.xlu0 %2702
    %2704 = vrot.lane.b32.xlu0 %v2627, 126
    %v2705 = vpop.permute.xlu0 %2704
    %2706 = vrot.lane.b32.xlu0 %v2628, 126
    %v2707 = vpop.permute.xlu0 %2706
    %2708 = vrot.lane.b32.xlu0 %v2629, 126
    %v2709 = vpop.permute.xlu0 %2708
    %2710 = vrot.lane.b32.xlu0 %v2630, 126
    %v2711 = vpop.permute.xlu0 %2710
    %2712 = vrot.lane.b32.xlu0 %v2631, 126
    %v2713 = vpop.permute.xlu0 %2712
    %2714 = vrot.lane.b32.xlu0 %v2632, 126
    %v2715 = vpop.permute.xlu0 %2714
    %2716 = vrot.lane.b32.xlu0 %v2633, 126
    %v2717 = vpop.permute.xlu0 %2716
    %2718 = vrot.lane.b32.xlu0 %v2634, 126
    %v2719 = vpop.permute.xlu0 %2718
    %v2720 = vsel %vm342, %v2665, %v2667
    %v2721 = vsel %vm342, %v2667, %v2669
    %v2722 = vsel %vm342, %v2669, %v2671
    %v2723 = vsel %vm342, %v2671, %v2673
    %v2724 = vsel %vm342, %v2673, %v2675
    %v2725 = vsel %vm342, %v2675, %v2677
    %v2726 = vsel %vm342, %v2677, %v2679
    %v2727 = vsel %vm342, %v2679, %v2681
    %v2728 = vsel %vm342, %v2681, %v2683
    %v2729 = vsel %vm342, %v2683, %v2685
    %v2730 = vsel %vm342, %v2685, %v2687
    %v2731 = vsel %vm342, %v2687, %v2689
    %v2732 = vsel %vm342, %v2689, %v2691
    %v2733 = vsel %vm342, %v2693, %v2695
    %v2734 = vsel %vm342, %v2695, %v2697
    %v2735 = vsel %vm342, %v2697, %v2699
    %v2736 = vsel %vm342, %v2699, %v2701
    %v2737 = vsel %vm342, %v2701, %v2703
    %v2738 = vsel %vm342, %v2703, %v2705
    %v2739 = vsel %vm342, %v2705, %v2707
    %v2740 = vsel %vm342, %v2707, %v2709
    %v2741 = vsel %vm342, %v2709, %v2711
    %v2742 = vsel %vm342, %v2711, %v2713
    %v2743 = vsel %vm342, %v2713, %v2715
    %v2744 = vsel %vm342, %v2715, %v2717
    %v2745 = vsel %vm342, %v2717, %v2719
    %v2774 = vmax.f32 %v2606, %v2720
    %v2775 = vmax.f32 %v2607, %v2721
    %v2776 = vmax.f32 %v2608, %v2722
    %v2777 = vmax.f32 %v2609, %v2723
    %v2778 = vmax.f32 %v2610, %v2724
    %v2779 = vmax.f32 %v2611, %v2725
    %v2780 = vmax.f32 %v2612, %v2726
    %v2781 = vmax.f32 %v2613, %v2727
    %v2782 = vmax.f32 %v2614, %v2728
    %v2783 = vmax.f32 %v2615, %v2729
    %v2784 = vmax.f32 %v2616, %v2730
    %v2785 = vmax.f32 %v2617, %v2731
    %v2786 = vmax.f32 %v2618, %v2732
    %v2787 = vmax.f32 %v2619, %v2691
    %v2788 = vmax.f32 %v2621, %v2733
    %v2789 = vmax.f32 %v2622, %v2734
    %v2790 = vmax.f32 %v2623, %v2735
    %v2791 = vmax.f32 %v2624, %v2736
    %v2792 = vmax.f32 %v2625, %v2737
    %v2793 = vmax.f32 %v2626, %v2738
    %v2794 = vmax.f32 %v2627, %v2739
    %v2795 = vmax.f32 %v2628, %v2740
    %v2796 = vmax.f32 %v2629, %v2741
    %v2797 = vmax.f32 %v2630, %v2742
    %v2798 = vmax.f32 %v2631, %v2743
    %v2799 = vmax.f32 %v2632, %v2744
    %v2800 = vmax.f32 %v2633, %v2745
    %v2801 = vmax.f32 %v2634, %v2719
    %2804 = vrot.lane.b32.xlu0 %v2606, 64
    %v2805 = vpop.permute.xlu0 %2804
    %2806 = vrot.lane.b32.xlu0 %v2607, 64
    %v2807 = vpop.permute.xlu0 %2806
    %2808 = vrot.lane.b32.xlu0 %v2608, 64
    %v2809 = vpop.permute.xlu0 %2808
    %2810 = vrot.lane.b32.xlu0 %v2609, 64
    %v2811 = vpop.permute.xlu0 %2810
    %2812 = vrot.lane.b32.xlu0 %v2610, 64
    %v2813 = vpop.permute.xlu0 %2812
    %2814 = vrot.lane.b32.xlu0 %v2611, 64
    %v2815 = vpop.permute.xlu0 %2814
    %2816 = vrot.lane.b32.xlu0 %v2612, 64
    %v2817 = vpop.permute.xlu0 %2816
    %2818 = vrot.lane.b32.xlu0 %v2613, 64
    %v2819 = vpop.permute.xlu0 %2818
    %2820 = vrot.lane.b32.xlu0 %v2614, 64
    %v2821 = vpop.permute.xlu0 %2820
    %2822 = vrot.lane.b32.xlu0 %v2615, 64
    %v2823 = vpop.permute.xlu0 %2822
    %2824 = vrot.lane.b32.xlu0 %v2616, 64
    %v2825 = vpop.permute.xlu0 %2824
    %2826 = vrot.lane.b32.xlu0 %v2617, 64
    %v2827 = vpop.permute.xlu0 %2826
    %2828 = vrot.lane.b32.xlu0 %v2618, 64
    %v2829 = vpop.permute.xlu0 %2828
    %2830 = vrot.lane.b32.xlu0 %v2619, 64
    %v2831 = vpop.permute.xlu0 %2830
    %2832 = vrot.lane.b32.xlu0 %v2620, 64
    %v2833 = vpop.permute.xlu0 %2832
    %2834 = vrot.lane.b32.xlu0 %v2621, 64
    %v2835 = vpop.permute.xlu0 %2834
    %2836 = vrot.lane.b32.xlu0 %v2622, 64
    %v2837 = vpop.permute.xlu0 %2836
    %2838 = vrot.lane.b32.xlu0 %v2623, 64
    %v2839 = vpop.permute.xlu0 %2838
    %2840 = vrot.lane.b32.xlu0 %v2624, 64
    %v2841 = vpop.permute.xlu0 %2840
    %2842 = vrot.lane.b32.xlu0 %v2625, 64
    %v2843 = vpop.permute.xlu0 %2842
    %2844 = vrot.lane.b32.xlu0 %v2626, 64
    %v2845 = vpop.permute.xlu0 %2844
    %2846 = vrot.lane.b32.xlu0 %v2627, 64
    %v2847 = vpop.permute.xlu0 %2846
    %2848 = vrot.lane.b32.xlu0 %v2628, 64
    %v2849 = vpop.permute.xlu0 %2848
    %2850 = vrot.lane.b32.xlu0 %v2629, 64
    %v2851 = vpop.permute.xlu0 %2850
    %2852 = vrot.lane.b32.xlu0 %v2630, 64
    %v2853 = vpop.permute.xlu0 %2852
    %2854 = vrot.lane.b32.xlu0 %v2631, 64
    %v2855 = vpop.permute.xlu0 %2854
    %2856 = vrot.lane.b32.xlu0 %v2632, 64
    %v2857 = vpop.permute.xlu0 %2856
    %2858 = vrot.lane.b32.xlu0 %v2633, 64
    %v2859 = vpop.permute.xlu0 %2858
    %2860 = vrot.lane.b32.xlu0 %v2634, 64
    %v2861 = vpop.permute.xlu0 %2860
    %2862 = vrot.lane.b32.xlu0 %v2635, 64
    %v2863 = vpop.permute.xlu0 %2862
    %v2864 = vsel %vm806, %v2805, %v2807
    %v2865 = vsel %vm806, %v2807, %v2809
    %v2866 = vsel %vm806, %v2809, %v2811
    %v2867 = vsel %vm806, %v2811, %v2813
    %v2868 = vsel %vm806, %v2813, %v2815
    %v2869 = vsel %vm806, %v2815, %v2817
    %v2870 = vsel %vm806, %v2817, %v2819
    %v2871 = vsel %vm806, %v2819, %v2821
    %v2872 = vsel %vm806, %v2821, %v2823
    %v2873 = vsel %vm806, %v2823, %v2825
    %v2874 = vsel %vm806, %v2825, %v2827
    %v2875 = vsel %vm806, %v2827, %v2829
    %v2876 = vsel %vm806, %v2829, %v2831
    %v2877 = vsel %vm806, %v2831, %v2833
    %v2878 = vsel %vm806, %v2835, %v2837
    %v2879 = vsel %vm806, %v2837, %v2839
    %v2880 = vsel %vm806, %v2839, %v2841
    %v2881 = vsel %vm806, %v2841, %v2843
    %v2882 = vsel %vm806, %v2843, %v2845
    %v2883 = vsel %vm806, %v2845, %v2847
    %v2884 = vsel %vm806, %v2847, %v2849
    %v2885 = vsel %vm806, %v2849, %v2851
    %v2886 = vsel %vm806, %v2851, %v2853
    %v2887 = vsel %vm806, %v2853, %v2855
    %v2888 = vsel %vm806, %v2855, %v2857
    %v2889 = vsel %vm806, %v2857, %v2859
    %v2890 = vsel %vm806, %v2859, %v2861
    %v2891 = vsel %vm806, %v2861, %v2863
    %v2920 = vmax.f32 %v2774, %v2864
    %v2921 = vmax.f32 %v2775, %v2865
    %v2922 = vmax.f32 %v2776, %v2866
    %v2923 = vmax.f32 %v2777, %v2867
    %v2924 = vmax.f32 %v2778, %v2868
    %v2925 = vmax.f32 %v2779, %v2869
    %v2926 = vmax.f32 %v2780, %v2870
    %v2927 = vmax.f32 %v2781, %v2871
    %v2928 = vmax.f32 %v2782, %v2872
    %v2929 = vmax.f32 %v2783, %v2873
    %v2930 = vmax.f32 %v2784, %v2874
    %v2931 = vmax.f32 %v2785, %v2875
    %v2932 = vmax.f32 %v2786, %v2876
    %v2933 = vmax.f32 %v2787, %v2877
    %v2934 = vmax.f32 %v2788, %v2878
    %v2935 = vmax.f32 %v2789, %v2879
    %v2936 = vmax.f32 %v2790, %v2880
    %v2937 = vmax.f32 %v2791, %v2881
    %v2938 = vmax.f32 %v2792, %v2882
    %v2939 = vmax.f32 %v2793, %v2883
    %v2940 = vmax.f32 %v2794, %v2884
    %v2941 = vmax.f32 %v2795, %v2885
    %v2942 = vmax.f32 %v2796, %v2886
    %v2943 = vmax.f32 %v2797, %v2887
    %v2944 = vmax.f32 %v2798, %v2888
    %v2945 = vmax.f32 %v2799, %v2889
    %v2946 = vmax.f32 %v2800, %v2890
    %v2947 = vmax.f32 %v2801, %v2891
    %2948 = vrot.lane.b32.xlu0 %v2606, 62
    %v2949 = vpop.permute.xlu0 %2948
    %2950 = vrot.lane.b32.xlu0 %v2607, 62
    %v2951 = vpop.permute.xlu0 %2950
    %2952 = vrot.lane.b32.xlu0 %v2608, 62
    %v2953 = vpop.permute.xlu0 %2952
    %2954 = vrot.lane.b32.xlu0 %v2609, 62
    %v2955 = vpop.permute.xlu0 %2954
    %2956 = vrot.lane.b32.xlu0 %v2610, 62
    %v2957 = vpop.permute.xlu0 %2956
    %2958 = vrot.lane.b32.xlu0 %v2611, 62
    %v2959 = vpop.permute.xlu0 %2958
    %2960 = vrot.lane.b32.xlu0 %v2612, 62
    %v2961 = vpop.permute.xlu0 %2960
    %2962 = vrot.lane.b32.xlu0 %v2613, 62
    %v2963 = vpop.permute.xlu0 %2962
    %2964 = vrot.lane.b32.xlu0 %v2614, 62
    %v2965 = vpop.permute.xlu0 %2964
    %2966 = vrot.lane.b32.xlu0 %v2615, 62
    %v2967 = vpop.permute.xlu0 %2966
    %2968 = vrot.lane.b32.xlu0 %v2616, 62
    %v2969 = vpop.permute.xlu0 %2968
    %2970 = vrot.lane.b32.xlu0 %v2617, 62
    %v2971 = vpop.permute.xlu0 %2970
    %2972 = vrot.lane.b32.xlu0 %v2618, 62
    %v2973 = vpop.permute.xlu0 %2972
    %2974 = vrot.lane.b32.xlu0 %v2619, 62
    %v2975 = vpop.permute.xlu0 %2974
    %2976 = vrot.lane.b32.xlu0 %v2620, 62
    %v2977 = vpop.permute.xlu0 %2976
    %2978 = vrot.lane.b32.xlu0 %v2621, 62
    %v2979 = vpop.permute.xlu0 %2978
    %2980 = vrot.lane.b32.xlu0 %v2622, 62
    %v2981 = vpop.permute.xlu0 %2980
    %2982 = vrot.lane.b32.xlu0 %v2623, 62
    %v2983 = vpop.permute.xlu0 %2982
    %2984 = vrot.lane.b32.xlu0 %v2624, 62
    %v2985 = vpop.permute.xlu0 %2984
    %2986 = vrot.lane.b32.xlu0 %v2625, 62
    %v2987 = vpop.permute.xlu0 %2986
    %2988 = vrot.lane.b32.xlu0 %v2626, 62
    %v2989 = vpop.permute.xlu0 %2988
    %2990 = vrot.lane.b32.xlu0 %v2627, 62
    %v2991 = vpop.permute.xlu0 %2990
    %2992 = vrot.lane.b32.xlu0 %v2628, 62
    %v2993 = vpop.permute.xlu0 %2992
    %2994 = vrot.lane.b32.xlu0 %v2629, 62
    %v2995 = vpop.permute.xlu0 %2994
    %2996 = vrot.lane.b32.xlu0 %v2630, 62
    %v2997 = vpop.permute.xlu0 %2996
    %2998 = vrot.lane.b32.xlu0 %v2631, 62
    %v2999 = vpop.permute.xlu0 %2998
    %3000 = vrot.lane.b32.xlu0 %v2632, 62
    %v3001 = vpop.permute.xlu0 %3000
    %3002 = vrot.lane.b32.xlu0 %v2633, 62
    %v3003 = vpop.permute.xlu0 %3002
    %3004 = vrot.lane.b32.xlu0 %v2634, 62
    %v3005 = vpop.permute.xlu0 %3004
    %3006 = vrot.lane.b32.xlu0 %v2635, 62
    %v3007 = vpop.permute.xlu0 %3006
    %v3008 = vsel %vm1038, %v2949, %v2951
    %v3009 = vsel %vm1038, %v2951, %v2953
    %v3010 = vsel %vm1038, %v2953, %v2955
    %v3011 = vsel %vm1038, %v2955, %v2957
    %v3012 = vsel %vm1038, %v2957, %v2959
    %v3013 = vsel %vm1038, %v2959, %v2961
    %v3014 = vsel %vm1038, %v2961, %v2963
    %v3015 = vsel %vm1038, %v2963, %v2965
    %v3016 = vsel %vm1038, %v2965, %v2967
    %v3017 = vsel %vm1038, %v2967, %v2969
    %v3018 = vsel %vm1038, %v2969, %v2971
    %v3019 = vsel %vm1038, %v2971, %v2973
    %v3020 = vsel %vm1038, %v2973, %v2975
    %v3021 = vsel %vm1038, %v2975, %v2977
    %v3022 = vsel %vm1038, %v2979, %v2981
    %v3023 = vsel %vm1038, %v2981, %v2983
    %v3024 = vsel %vm1038, %v2983, %v2985
    %v3025 = vsel %vm1038, %v2985, %v2987
    %v3026 = vsel %vm1038, %v2987, %v2989
    %v3027 = vsel %vm1038, %v2989, %v2991
    %v3028 = vsel %vm1038, %v2991, %v2993
    %v3029 = vsel %vm1038, %v2993, %v2995
    %v3030 = vsel %vm1038, %v2995, %v2997
    %v3031 = vsel %vm1038, %v2997, %v2999
    %v3032 = vsel %vm1038, %v2999, %v3001
    %v3033 = vsel %vm1038, %v3001, %v3003
    %v3034 = vsel %vm1038, %v3003, %v3005
    %v3035 = vsel %vm1038, %v3005, %v3007
    %v3064 = vmax.f32 %v2920, %v3008
    %v3065 = vmax.f32 %v2921, %v3009
    %v3066 = vmax.f32 %v2922, %v3010
    %v3067 = vmax.f32 %v2923, %v3011
    %v3068 = vmax.f32 %v2924, %v3012
    %v3069 = vmax.f32 %v2925, %v3013
    %v3070 = vmax.f32 %v2926, %v3014
    %v3071 = vmax.f32 %v2927, %v3015
    %v3072 = vmax.f32 %v2928, %v3016
    %v3073 = vmax.f32 %v2929, %v3017
    %v3074 = vmax.f32 %v2930, %v3018
    %v3075 = vmax.f32 %v2931, %v3019
    %v3076 = vmax.f32 %v2932, %v3020
    %v3077 = vmax.f32 %v2933, %v3021
    %v3078 = vmax.f32 %v2934, %v3022
    %v3079 = vmax.f32 %v2935, %v3023
    %v3080 = vmax.f32 %v2936, %v3024
    %v3081 = vmax.f32 %v2937, %v3025
    %v3082 = vmax.f32 %v2938, %v3026
    %v3083 = vmax.f32 %v2939, %v3027
    %v3084 = vmax.f32 %v2940, %v3028
    %v3085 = vmax.f32 %v2941, %v3029
    %v3086 = vmax.f32 %v2942, %v3030
    %v3087 = vmax.f32 %v2943, %v3031
    %v3088 = vmax.f32 %v2944, %v3032
    %v3089 = vmax.f32 %v2945, %v3033
    %v3090 = vmax.f32 %v2946, %v3034
    %v3091 = vmax.f32 %v2947, %v3035
    %v3092 = vld [vmem:[#allocation4] sm:$0xff]
    %v3093 = vld [vmem:[#allocation4 + $0x8] sm:$0xff]
    %v3094 = vld [vmem:[#allocation4 + $0x10] sm:$0xff]
    %v3095 = vld [vmem:[#allocation4 + $0x18] sm:$0xff]
    %v3096 = vld [vmem:[#allocation4 + $0x20] sm:$0xff]
    %v3097 = vld [vmem:[#allocation4 + $0x28] sm:$0xff]
    %v3098 = vld [vmem:[#allocation4 + $0x30] sm:$0xff]
    %v3099 = vld [vmem:[#allocation4 + $0x38] sm:$0xff]
    %v3100 = vld [vmem:[#allocation4 + $0x40] sm:$0xff]
    %v3101 = vld [vmem:[#allocation4 + $0x48] sm:$0xff]
    %v3102 = vld [vmem:[#allocation4 + $0x50] sm:$0xff]
    %v3103 = vld [vmem:[#allocation4 + $0x58] sm:$0xff]
    %v3104 = vld [vmem:[#allocation4 + $0x60] sm:$0xff]
    %v3105 = vld [vmem:[#allocation4 + $0x68] sm:$0xff]
    %v3106 = vld [vmem:[#allocation4 + $0x70] sm:$0xff]
    %v3107 = vld [vmem:[#allocation4 + $0x78] sm:$0xff]
    %v3108 = vld [vmem:[#allocation4 + $0x80] sm:$0xff]
    %v3109 = vld [vmem:[#allocation4 + $0x88] sm:$0xff]
    %v3110 = vld [vmem:[#allocation4 + $0x90] sm:$0xff]
    %v3111 = vld [vmem:[#allocation4 + $0x98] sm:$0xff]
    %v3112 = vld [vmem:[#allocation4 + $0xa0] sm:$0xff]
    %v3113 = vld [vmem:[#allocation4 + $0xa8] sm:$0xff]
    %v3114 = vld [vmem:[#allocation4 + $0xb0] sm:$0xff]
    %v3115 = vld [vmem:[#allocation4 + $0xb8] sm:$0xff]
    %v3116 = vld [vmem:[#allocation4 + $0xc0] sm:$0xff]
    %v3117 = vld [vmem:[#allocation4 + $0xc8] sm:$0xff]
    %v3118 = vld [vmem:[#allocation4 + $0xd0] sm:$0xff]
    %v3119 = vld [vmem:[#allocation4 + $0xd8] sm:$0xff]
    %v3120 = vld [vmem:[#allocation4 + $0xe0] sm:$0xff]
    %v3121 = vld [vmem:[#allocation4 + $0xe8] sm:$0xff]
    %v3122 = vld [vmem:[#allocation4 + $0xf0] sm:$0xff]
    %v3123 = vld [vmem:[#allocation4 + $0xf8] sm:$0xff]
    %v3124 = vld [vmem:[#allocation4 + $0x100] sm:$0xff]
    %v3125 = vld [vmem:[#allocation4 + $0x108] sm:$0xff]
    %v3126 = vld [vmem:[#allocation4 + $0x110] sm:$0xff]
    %v3127 = vld [vmem:[#allocation4 + $0x118] sm:$0xff]
    %v3128 = vld [vmem:[#allocation4 + $0x120] sm:$0xff]
    %v3129 = vld [vmem:[#allocation4 + $0x128] sm:$0xff]
    %v3130 = vld [vmem:[#allocation4 + $0x130] sm:$0xff]
    %v3131 = vld [vmem:[#allocation4 + $0x138] sm:$0xff]
    %v3132 = vld [vmem:[#allocation4 + $0x140] sm:$0xff]
    %v3133 = vld [vmem:[#allocation4 + $0x148] sm:$0xff]
    %v3134 = vld [vmem:[#allocation4 + $0x150] sm:$0xff]
    %v3135 = vld [vmem:[#allocation4 + $0x158] sm:$0xff]
    %v3136 = vld [vmem:[#allocation4 + $0x160] sm:$0xff]
    %v3137 = vld [vmem:[#allocation4 + $0x168] sm:$0xff]
    %v3138 = vld [vmem:[#allocation4 + $0x170] sm:$0xff]
    %v3139 = vld [vmem:[#allocation4 + $0x178] sm:$0xff]
    %v3140 = vld [vmem:[#allocation4 + $0x180] sm:$0xff]
    %v3141 = vld [vmem:[#allocation4 + $0x188] sm:$0xff]
    %v3142 = vld [vmem:[#allocation4 + $0x190] sm:$0xff]
    %v3143 = vld [vmem:[#allocation4 + $0x198] sm:$0xff]
    %v3144 = vld [vmem:[#allocation4 + $0x1a0] sm:$0xff]
    %v3145 = vld [vmem:[#allocation4 + $0x1a8] sm:$0xff]
    %v3146 = vld [vmem:[#allocation4 + $0x1b0] sm:$0xff]
    %v3147 = vld [vmem:[#allocation4 + $0x1b8] sm:$0xff]
    %v3148 = vld [vmem:[#allocation4 + $0x1c0] sm:$0xff]
    %v3149 = vld [vmem:[#allocation4 + $0x1c8] sm:$0xff]
    %v3150 = vld [vmem:[#allocation4 + $0x1d0] sm:$0xff]
    %v3151 = vld [vmem:[#allocation4 + $0x1d8] sm:$0xff]
    %v3152 = vld [vmem:[#allocation4 + $0x1e0] sm:$0xff]
    %v3153 = vld [vmem:[#allocation4 + $0x1e8] sm:$0xff]
    %v3154 = vld [vmem:[#allocation4 + $0x1f0] sm:$0xff]
    %v3155 = vld [vmem:[#allocation4 + $0x1f8] sm:$0xff]
    %v3156 = vld [vmem:[#allocation4 + $0x200] sm:$0xff]
    %v3157 = vld [vmem:[#allocation4 + $0x208] sm:$0xff]
    %v3158 = vld [vmem:[#allocation4 + $0x210] sm:$0xff]
    %v3159 = vld [vmem:[#allocation4 + $0x218] sm:$0xff]
    %v3160 = vld [vmem:[#allocation4 + $0x220] sm:$0xff]
    %v3161 = vld [vmem:[#allocation4 + $0x228] sm:$0xff]
    %v3162 = vld [vmem:[#allocation4 + $0x230] sm:$0xff]
    %v3163 = vld [vmem:[#allocation4 + $0x238] sm:$0xff]
    %v3164 = vld [vmem:[#allocation4 + $0x240] sm:$0xff]
    %v3165 = vld [vmem:[#allocation4 + $0x248] sm:$0xff]
    %v3166 = vld [vmem:[#allocation4 + $0x250] sm:$0xff]
    %v3167 = vld [vmem:[#allocation4 + $0x258] sm:$0xff]
    %v3168 = vld [vmem:[#allocation4 + $0x260] sm:$0xff]
    %v3169 = vld [vmem:[#allocation4 + $0x268] sm:$0xff]
    %v3170 = vld [vmem:[#allocation4 + $0x270] sm:$0xff]
    %v3171 = vld [vmem:[#allocation4 + $0x278] sm:$0xff]
    %v3172 = vld [vmem:[#allocation4 + $0x280] sm:$0xff]
    %v3173 = vld [vmem:[#allocation4 + $0x288] sm:$0xff]
    %v3174 = vld [vmem:[#allocation4 + $0x290] sm:$0xff]
    %v3175 = vld [vmem:[#allocation4 + $0x298] sm:$0xff]
    %v3176 = vld [vmem:[#allocation4 + $0x2a0] sm:$0xff]
    %v3177 = vld [vmem:[#allocation4 + $0x2a8] sm:$0xff]
    %v3178 = vld [vmem:[#allocation4 + $0x2b0] sm:$0xff]
    %v3179 = vld [vmem:[#allocation4 + $0x2b8] sm:$0xff]
    %v3180 = vld [vmem:[#allocation4 + $0x2c0] sm:$0xff]
    %v3181 = vld [vmem:[#allocation4 + $0x2c8] sm:$0xff]
    %v3182 = vld [vmem:[#allocation4 + $0x2d0] sm:$0xff]
    %v3183 = vld [vmem:[#allocation4 + $0x2d8] sm:$0xff]
    %v3184 = vld [vmem:[#allocation4 + $0x2e0] sm:$0xff]
    %v3185 = vld [vmem:[#allocation4 + $0x2e8] sm:$0xff]
    %v3186 = vld [vmem:[#allocation4 + $0x2f0] sm:$0xff]
    %v3187 = vld [vmem:[#allocation4 + $0x2f8] sm:$0xff]
    %v3188 = vld [vmem:[#allocation4 + $0x300] sm:$0xff]
    %v3189 = vld [vmem:[#allocation4 + $0x308] sm:$0xff]
    %v3190 = vld [vmem:[#allocation4 + $0x310] sm:$0xff]
    %v3191 = vld [vmem:[#allocation4 + $0x318] sm:$0xff]
    %v3192 = vld [vmem:[#allocation4 + $0x320] sm:$0xff]
    %v3193 = vld [vmem:[#allocation4 + $0x328] sm:$0xff]
    %v3194 = vld [vmem:[#allocation4 + $0x330] sm:$0xff]
    %v3195 = vld [vmem:[#allocation4 + $0x338] sm:$0xff]
    %v3196 = vld [vmem:[#allocation4 + $0x340] sm:$0xff]
    %v3197 = vld [vmem:[#allocation4 + $0x348] sm:$0xff]
    %v3198 = vld [vmem:[#allocation4 + $0x350] sm:$0xff]
    %v3199 = vld [vmem:[#allocation4 + $0x358] sm:$0xff]
    %v3200 = vld [vmem:[#allocation4 + $0x360] sm:$0xff]
    %v3201 = vld [vmem:[#allocation4 + $0x368] sm:$0xff]
    %v3202 = vld [vmem:[#allocation4 + $0x370] sm:$0xff]
    %v3203 = vld [vmem:[#allocation4 + $0x378] sm:$0xff]
    %v3204 = vld [vmem:[#allocation4 + $0x380] sm:$0xff]
    %v3205 = vld [vmem:[#allocation4 + $0x388] sm:$0xff]
    %v3206 = vld [vmem:[#allocation4 + $0x390] sm:$0xff]
    %v3207 = vld [vmem:[#allocation4 + $0x398] sm:$0xff]
    %v3208 = vld [vmem:[#allocation4 + $0x3a0] sm:$0xff]
    %v3209 = vld [vmem:[#allocation4 + $0x3a8] sm:$0xff]
    %v3210 = vld [vmem:[#allocation4 + $0x3b0] sm:$0xff]
    %v3211 = vld [vmem:[#allocation4 + $0x3b8] sm:$0xff]
    %v3212 = vld [vmem:[#allocation4 + $0x3c0] sm:$0xff]
    %v3213 = vld [vmem:[#allocation4 + $0x3c8] sm:$0xff]
    %v3214 = vld [vmem:[#allocation4 + $0x3d0] sm:$0xff]
    %v3215 = vld [vmem:[#allocation4 + $0x3d8] sm:$0xff]
    %v3216 = vld [vmem:[#allocation4 + $0x3e0] sm:$0xff]
    %v3217 = vld [vmem:[#allocation4 + $0x3e8] sm:$0xff]
    %v3218 = vld [vmem:[#allocation4 + $0x3f0] sm:$0xff]
    %v3219 = vld [vmem:[#allocation4 + $0x3f8] sm:$0xff]
    %v3220 = vld [vmem:[#allocation4 + $0x400] sm:$0xff]
    %v3221 = vld [vmem:[#allocation4 + $0x408] sm:$0xff]
    %v3222 = vld [vmem:[#allocation4 + $0x410] sm:$0xff]
    %v3223 = vld [vmem:[#allocation4 + $0x418] sm:$0xff]
    %v3224 = vld [vmem:[#allocation4 + $0x420] sm:$0xff]
    %v3225 = vld [vmem:[#allocation4 + $0x428] sm:$0xff]
    %v3226 = vld [vmem:[#allocation4 + $0x430] sm:$0xff]
    %v3227 = vld [vmem:[#allocation4 + $0x438] sm:$0xff]
    %v3228 = vld [vmem:[#allocation4 + $0x440] sm:$0xff]
    %v3229 = vld [vmem:[#allocation4 + $0x448] sm:$0xff]
    %v3230 = vld [vmem:[#allocation4 + $0x450] sm:$0xff]
    %v3231 = vld [vmem:[#allocation4 + $0x458] sm:$0xff]
    %v3232 = vld [vmem:[#allocation4 + $0x460] sm:$0xff]
    %v3233 = vld [vmem:[#allocation4 + $0x468] sm:$0xff]
    %v3234 = vld [vmem:[#allocation4 + $0x470] sm:$0xff]
    %v3235 = vld [vmem:[#allocation4 + $0x478] sm:$0xff]
    %v3236 = vld [vmem:[#allocation4 + $0x480] sm:$0xff]
    %v3237 = vld [vmem:[#allocation4 + $0x488] sm:$0xff]
    %v3238 = vld [vmem:[#allocation4 + $0x490] sm:$0xff]
    %v3239 = vld [vmem:[#allocation4 + $0x498] sm:$0xff]
    %v3240 = vld [vmem:[#allocation4 + $0x4a0] sm:$0xff]
    %v3241 = vld [vmem:[#allocation4 + $0x4a8] sm:$0xff]
    %v3242 = vld [vmem:[#allocation4 + $0x4b0] sm:$0xff]
    %v3243 = vld [vmem:[#allocation4 + $0x4b8] sm:$0xff]
    %v3244 = vld [vmem:[#allocation4 + $0x4c0] sm:$0xff]
    %v3245 = vld [vmem:[#allocation4 + $0x4c8] sm:$0xff]
    %v3246 = vld [vmem:[#allocation4 + $0x4d0] sm:$0xff]
    %v3247 = vld [vmem:[#allocation4 + $0x4d8] sm:$0xff]
    %v3248 = vld [vmem:[#allocation4 + $0x4e0] sm:$0xff]
    %v3249 = vld [vmem:[#allocation4 + $0x4e8] sm:$0xff]
    %v3250 = vld [vmem:[#allocation4 + $0x4f0] sm:$0xff]
    %v3251 = vld [vmem:[#allocation4 + $0x4f8] sm:$0xff]
    %v3252 = vld [vmem:[#allocation4 + $0x500] sm:$0xff]
    %v3253 = vld [vmem:[#allocation4 + $0x508] sm:$0xff]
    %v3254 = vld [vmem:[#allocation4 + $0x510] sm:$0xff]
    %v3255 = vld [vmem:[#allocation4 + $0x518] sm:$0xff]
    %v3256 = vld [vmem:[#allocation4 + $0x520] sm:$0xff]
    %v3257 = vld [vmem:[#allocation4 + $0x528] sm:$0xff]
    %v3258 = vld [vmem:[#allocation4 + $0x530] sm:$0xff]
    %v3259 = vld [vmem:[#allocation4 + $0x538] sm:$0xff]
    %v3260 = vld [vmem:[#allocation4 + $0x540] sm:$0xff]
    %v3261 = vld [vmem:[#allocation4 + $0x548] sm:$0xff]
    %v3262 = vld [vmem:[#allocation4 + $0x550] sm:$0xff]
    %v3263 = vld [vmem:[#allocation4 + $0x558] sm:$0xff]
    %v3264 = vld [vmem:[#allocation4 + $0x560] sm:$0xff]
    %v3265 = vld [vmem:[#allocation4 + $0x568] sm:$0xff]
    %v3266 = vld [vmem:[#allocation4 + $0x570] sm:$0xff]
    %v3267 = vld [vmem:[#allocation4 + $0x578] sm:$0xff]
    %v3268 = vld [vmem:[#allocation4 + $0x580] sm:$0xff]
    %v3269 = vld [vmem:[#allocation4 + $0x588] sm:$0xff]
    %v3270 = vld [vmem:[#allocation4 + $0x590] sm:$0xff]
    %v3271 = vld [vmem:[#allocation4 + $0x598] sm:$0xff]
    %v3272 = vld [vmem:[#allocation4 + $0x5a0] sm:$0xff]
    %v3273 = vld [vmem:[#allocation4 + $0x5a8] sm:$0xff]
    %v3274 = vld [vmem:[#allocation4 + $0x5b0] sm:$0xff]
    %v3275 = vld [vmem:[#allocation4 + $0x5b8] sm:$0xff]
    %v3276 = vld [vmem:[#allocation4 + $0x5c0] sm:$0xff]
    %v3277 = vld [vmem:[#allocation4 + $0x5c8] sm:$0xff]
    %v3278 = vld [vmem:[#allocation4 + $0x5d0] sm:$0xff]
    %v3279 = vld [vmem:[#allocation4 + $0x5d8] sm:$0xff]
    %v3280 = vld [vmem:[#allocation4 + $0x5e0] sm:$0xff]
    %v3281 = vld [vmem:[#allocation4 + $0x5e8] sm:$0xff]
    %v3282 = vld [vmem:[#allocation4 + $0x5f0] sm:$0xff]
    %v3283 = vld [vmem:[#allocation4 + $0x5f8] sm:$0xff]
    %v3284 = vld [vmem:[#allocation4 + $0x600] sm:$0xff]
    %v3285 = vld [vmem:[#allocation4 + $0x608] sm:$0xff]
    %v3286 = vld [vmem:[#allocation4 + $0x610] sm:$0xff]
    %v3287 = vld [vmem:[#allocation4 + $0x618] sm:$0xff]
    %v3288 = vld [vmem:[#allocation4 + $0x620] sm:$0xff]
    %v3289 = vld [vmem:[#allocation4 + $0x628] sm:$0xff]
    %v3290 = vld [vmem:[#allocation4 + $0x630] sm:$0xff]
    %v3291 = vld [vmem:[#allocation4 + $0x638] sm:$0xff]
    %v3292 = vld [vmem:[#allocation4 + $0x640] sm:$0xff]
    %v3293 = vld [vmem:[#allocation4 + $0x648] sm:$0xff]
    %v3294 = vld [vmem:[#allocation4 + $0x650] sm:$0xff]
    %v3295 = vld [vmem:[#allocation4 + $0x658] sm:$0xff]
    %v3296 = vld [vmem:[#allocation4 + $0x660] sm:$0xff]
    %v3297 = vld [vmem:[#allocation4 + $0x668] sm:$0xff]
    %v3298 = vld [vmem:[#allocation4 + $0x670] sm:$0xff]
    %v3299 = vld [vmem:[#allocation4 + $0x678] sm:$0xff]
    %v3300 = vld [vmem:[#allocation4 + $0x680] sm:$0xff]
    %v3301 = vld [vmem:[#allocation4 + $0x688] sm:$0xff]
    %v3302 = vld [vmem:[#allocation4 + $0x690] sm:$0xff]
    %v3303 = vld [vmem:[#allocation4 + $0x698] sm:$0xff]
    %v3304 = vld [vmem:[#allocation4 + $0x6a0] sm:$0xff]
    %v3305 = vld [vmem:[#allocation4 + $0x6a8] sm:$0xff]
    %v3306 = vld [vmem:[#allocation4 + $0x6b0] sm:$0xff]
    %v3307 = vld [vmem:[#allocation4 + $0x6b8] sm:$0xff]
    %v3308 = vld [vmem:[#allocation4 + $0x6c0] sm:$0xff]
    %v3309 = vld [vmem:[#allocation4 + $0x6c8] sm:$0xff]
    %v3310 = vld [vmem:[#allocation4 + $0x6d0] sm:$0x7f]
    %vm3311 = vcmask 711680
    %v3313 = vsel %vm3311, %v3077, 0
    %v3316 = vsel %vm3311, %v3091, 0
    %vm3318 = vcmask 1046528
    %v3320 = vsel %vm3318, %v3310, 0
    %3322 = vmatprep.subr.mxu0 0.0
    %3323 = vmatpush1.msra.mxu0 %v3092
    %3324 = vmatprep.subr.mxu0 0.0
    %3325 = vmatpush1.msra.mxu0 %v3093
    %3326 = vmatprep.subr.mxu0 0.0
    %3327 = vmatpush1.msra.mxu0 %v3094
    %3328 = vmatprep.subr.mxu0 0.0
    %3329 = vmatpush1.msra.mxu0 %v3095
    %3330 = vmatprep.subr.mxu0 0.0
    %3331 = vmatpush1.msra.mxu0 %v3096
    %3332 = vmatprep.subr.mxu0 0.0
    %3333 = vmatpush1.msra.mxu0 %v3097
    %3334 = vmatprep.subr.mxu0 0.0
    %3335 = vmatpush1.msra.mxu0 %v3098
    %3336 = vmatprep.subr.mxu0 0.0
    %3337 = vmatpush1.msra.mxu0 %v3099
    %3338 = vmatprep.subr.mxu0 0.0
    %3339 = vmatpush1.msra.mxu0 %v3100
    %3340 = vmatprep.subr.mxu0 0.0
    %3341 = vmatpush1.msra.mxu0 %v3101
    %3342 = vmatprep.subr.mxu0 0.0
    %3343 = vmatpush1.msra.mxu0 %v3102
    %3344 = vmatprep.subr.mxu0 0.0
    %3345 = vmatpush1.msra.mxu0 %v3103
    %3346 = vmatprep.subr.mxu0 0.0
    %3347 = vmatpush1.msra.mxu0 %v3104
    %3348 = vmatprep.subr.mxu0 0.0
    %3349 = vmatpush1.msra.mxu0 %v3105
    %3350 = vmatprep.subr.mxu0 0.0
    %3351 = vmatpush1.msra.mxu0 %v3106
    %3352 = vmatprep.subr.mxu0 0.0
    %3353 = vmatpush1.msra.mxu0 %v3107
    %3354 = vmatprep.subr.mxu0 0.0
    %3355 = vmatpush1.msra.mxu0 %v3108
    %3356 = vmatprep.subr.mxu0 0.0
    %3357 = vmatpush1.msra.mxu0 %v3109
    %3358 = vmatprep.subr.mxu0 0.0
    %3359 = vmatpush1.msra.mxu0 %v3110
    %3360 = vmatprep.subr.mxu0 0.0
    %3361 = vmatpush1.msra.mxu0 %v3111
    %3362 = vmatprep.subr.mxu0 0.0
    %3363 = vmatpush1.msra.mxu0 %v3112
    %3364 = vmatprep.subr.mxu0 0.0
    %3365 = vmatpush1.msra.mxu0 %v3113
    %3366 = vmatprep.subr.mxu0 0.0
    %3367 = vmatpush1.msra.mxu0 %v3114
    %3368 = vmatprep.subr.mxu0 0.0
    %3369 = vmatpush1.msra.mxu0 %v3115
    %3370 = vmatprep.subr.mxu0 0.0
    %3371 = vmatpush1.msra.mxu0 %v3116
    %3372 = vmatprep.subr.mxu0 0.0
    %3373 = vmatpush1.msra.mxu0 %v3117
    %3374 = vmatprep.subr.mxu0 0.0
    %3375 = vmatpush1.msra.mxu0 %v3118
    %3376 = vmatprep.subr.mxu0 0.0
    %3377 = vmatpush1.msra.mxu0 %v3119
    %3378 = vmatprep.subr.mxu0 0.0
    %3379 = vmatpush1.msra.mxu0 %v3120
    %3380 = vmatprep.subr.mxu0 0.0
    %3381 = vmatpush1.msra.mxu0 %v3121
    %3382 = vmatprep.subr.mxu0 0.0
    %3383 = vmatpush1.msra.mxu0 %v3122
    %3384 = vmatprep.subr.mxu0 0.0
    %3385 = vmatpush1.msra.mxu0 %v3123
    %3386 = vmatprep.mubr.f32.mxu0 %v3065
    %3387 = vmatmul.mubr.f32.gmra.mrb[0].mxu0 %v3064
    %v3388 = vpop.f32.mrb[0].mxu0
    %v3389 = vadd.f32 0.0, %v3388
    %v3390 = vpop.f32.mrb[0].mxu0
    %3391 = vmatprep.mubr.f32.mxu0 %v3079
    %3392 = vmatmul.mubr.f32.gmra.mrb[0].mxu0 %v3078
    %v3393 = vpop.f32.mrb[0].mxu0
    %v3394 = vadd.f32 0.0, %v3393
    %v3395 = vpop.f32.mrb[0].mxu0
    %3396 = vdwg.mxu0
    %3397 = vmatprep.subr.mxu0 0.0
    %3398 = vmatpush1.msra.mxu0 %v3124
    %3399 = vmatprep.subr.mxu0 0.0
    %3400 = vmatpush1.msra.mxu0 %v3125
    %3401 = vmatprep.subr.mxu0 0.0
    %3402 = vmatpush1.msra.mxu0 %v3126
    %3403 = vmatprep.subr.mxu0 0.0
    %3404 = vmatpush1.msra.mxu0 %v3127
    %3405 = vmatprep.subr.mxu0 0.0
    %3406 = vmatpush1.msra.mxu0 %v3128
    %3407 = vmatprep.subr.mxu0 0.0
    %3408 = vmatpush1.msra.mxu0 %v3129
    %3409 = vmatprep.subr.mxu0 0.0
    %3410 = vmatpush1.msra.mxu0 %v3130
    %3411 = vmatprep.subr.mxu0 0.0
    %3412 = vmatpush1.msra.mxu0 %v3131
    %3413 = vmatprep.subr.mxu0 0.0
    %3414 = vmatpush1.msra.mxu0 %v3132
    %3415 = vmatprep.subr.mxu0 0.0
    %3416 = vmatpush1.msra.mxu0 %v3133
    %3417 = vmatprep.subr.mxu0 0.0
    %3418 = vmatpush1.msra.mxu0 %v3134
    %3419 = vmatprep.subr.mxu0 0.0
    %3420 = vmatpush1.msra.mxu0 %v3135
    %3421 = vmatprep.subr.mxu0 0.0
    %3422 = vmatpush1.msra.mxu0 %v3136
    %3423 = vmatprep.subr.mxu0 0.0
    %3424 = vmatpush1.msra.mxu0 %v3137
    %3425 = vmatprep.subr.mxu0 0.0
    %3426 = vmatpush1.msra.mxu0 %v3138
    %3427 = vmatprep.subr.mxu0 0.0
    %3428 = vmatpush1.msra.mxu0 %v3139
    %3429 = vmatprep.subr.mxu0 0.0
    %3430 = vmatpush1.msra.mxu0 %v3140
    %3431 = vmatprep.subr.mxu0 0.0
    %3432 = vmatpush1.msra.mxu0 %v3141
    %3433 = vmatprep.subr.mxu0 0.0
    %3434 = vmatpush1.msra.mxu0 %v3142
    %3435 = vmatprep.subr.mxu0 0.0
    %3436 = vmatpush1.msra.mxu0 %v3143
    %3437 = vmatprep.subr.mxu0 0.0
    %3438 = vmatpush1.msra.mxu0 %v3144
    %3439 = vmatprep.subr.mxu0 0.0
    %3440 = vmatpush1.msra.mxu0 %v3145
    %3441 = vmatprep.subr.mxu0 0.0
    %3442 = vmatpush1.msra.mxu0 %v3146
    %3443 = vmatprep.subr.mxu0 0.0
    %3444 = vmatpush1.msra.mxu0 %v3147
    %3445 = vmatprep.subr.mxu0 0.0
    %3446 = vmatpush1.msra.mxu0 %v3148
    %3447 = vmatprep.subr.mxu0 0.0
    %3448 = vmatpush1.msra.mxu0 %v3149
    %3449 = vmatprep.subr.mxu0 0.0
    %3450 = vmatpush1.msra.mxu0 %v3150
    %3451 = vmatprep.subr.mxu0 0.0
    %3452 = vmatpush1.msra.mxu0 %v3151
    %3453 = vmatprep.subr.mxu0 0.0
    %3454 = vmatpush1.msra.mxu0 %v3152
    %3455 = vmatprep.subr.mxu0 0.0
    %3456 = vmatpush1.msra.mxu0 %v3153
    %3457 = vmatprep.subr.mxu0 0.0
    %3458 = vmatpush1.msra.mxu0 %v3154
    %3459 = vmatprep.subr.mxu0 0.0
    %3460 = vmatpush1.msra.mxu0 %v3155
    %3461 = vmatprep.mubr.f32.mxu0 %v3067
    %3462 = vmatmul.mubr.f32.gmra.mrb[0].mxu0 %v3066
    %v3463 = vpop.f32.mrb[0].mxu0
    %v3464 = vadd.f32 %v3389, %v3463
    %v3465 = vpop.f32.mrb[0].mxu0
    %3466 = vmatprep.mubr.f32.mxu0 %v3081
    %3467 = vmatmul.mubr.f32.gmra.mrb[0].mxu0 %v3080
    %v3468 = vpop.f32.mrb[0].mxu0
    %v3469 = vadd.f32 %v3394, %v3468
    %v3470 = vpop.f32.mrb[0].mxu0
    %3471 = vdwg.mxu0
    %3472 = vmatprep.subr.mxu0 0.0
    %3473 = vmatpush1.msra.mxu0 %v3156
    %3474 = vmatprep.subr.mxu0 0.0
    %3475 = vmatpush1.msra.mxu0 %v3157
    %3476 = vmatprep.subr.mxu0 0.0
    %3477 = vmatpush1.msra.mxu0 %v3158
    %3478 = vmatprep.subr.mxu0 0.0
    %3479 = vmatpush1.msra.mxu0 %v3159
    %3480 = vmatprep.subr.mxu0 0.0
    %3481 = vmatpush1.msra.mxu0 %v3160
    %3482 = vmatprep.subr.mxu0 0.0
    %3483 = vmatpush1.msra.mxu0 %v3161
    %3484 = vmatprep.subr.mxu0 0.0
    %3485 = vmatpush1.msra.mxu0 %v3162
    %3486 = vmatprep.subr.mxu0 0.0
    %3487 = vmatpush1.msra.mxu0 %v3163
    %3488 = vmatprep.subr.mxu0 0.0
    %3489 = vmatpush1.msra.mxu0 %v3164
    %3490 = vmatprep.subr.mxu0 0.0
    %3491 = vmatpush1.msra.mxu0 %v3165
    %3492 = vmatprep.subr.mxu0 0.0
    %3493 = vmatpush1.msra.mxu0 %v3166
    %3494 = vmatprep.subr.mxu0 0.0
    %3495 = vmatpush1.msra.mxu0 %v3167
    %3496 = vmatprep.subr.mxu0 0.0
    %3497 = vmatpush1.msra.mxu0 %v3168
    %3498 = vmatprep.subr.mxu0 0.0
    %3499 = vmatpush1.msra.mxu0 %v3169
    %3500 = vmatprep.subr.mxu0 0.0
    %3501 = vmatpush1.msra.mxu0 %v3170
    %3502 = vmatprep.subr.mxu0 0.0
    %3503 = vmatpush1.msra.mxu0 %v3171
    %3504 = vmatprep.subr.mxu0 0.0
    %3505 = vmatpush1.msra.mxu0 %v3172
    %3506 = vmatprep.subr.mxu0 0.0
    %3507 = vmatpush1.msra.mxu0 %v3173
    %3508 = vmatprep.subr.mxu0 0.0
    %3509 = vmatpush1.msra.mxu0 %v3174
    %3510 = vmatprep.subr.mxu0 0.0
    %3511 = vmatpush1.msra.mxu0 %v3175
    %3512 = vmatprep.subr.mxu0 0.0
    %3513 = vmatpush1.msra.mxu0 %v3176
    %3514 = vmatprep.subr.mxu0 0.0
    %3515 = vmatpush1.msra.mxu0 %v3177
    %3516 = vmatprep.subr.mxu0 0.0
    %3517 = vmatpush1.msra.mxu0 %v3178
    %3518 = vmatprep.subr.mxu0 0.0
    %3519 = vmatpush1.msra.mxu0 %v3179
    %3520 = vmatprep.subr.mxu0 0.0
    %3521 = vmatpush1.msra.mxu0 %v3180
    %3522 = vmatprep.subr.mxu0 0.0
    %3523 = vmatpush1.msra.mxu0 %v3181
    %3524 = vmatprep.subr.mxu0 0.0
    %3525 = vmatpush1.msra.mxu0 %v3182
    %3526 = vmatprep.subr.mxu0 0.0
    %3527 = vmatpush1.msra.mxu0 %v3183
    %3528 = vmatprep.subr.mxu0 0.0
    %3529 = vmatpush1.msra.mxu0 %v3184
    %3530 = vmatprep.subr.mxu0 0.0
    %3531 = vmatpush1.msra.mxu0 %v3185
    %3532 = vmatprep.subr.mxu0 0.0
    %3533 = vmatpush1.msra.mxu0 %v3186
    %3534 = vmatprep.subr.mxu0 0.0
    %3535 = vmatpush1.msra.mxu0 %v3187
    %3536 = vmatprep.mubr.f32.mxu0 %v3069
    %3537 = vmatmul.mubr.f32.gmra.mrb[0].mxu0 %v3068
    %v3538 = vpop.f32.mrb[0].mxu0
    %v3539 = vadd.f32 %v3464, %v3538
    %v3540 = vpop.f32.mrb[0].mxu0
    %3541 = vmatprep.mubr.f32.mxu0 %v3083
    %3542 = vmatmul.mubr.f32.gmra.mrb[0].mxu0 %v3082
    %v3543 = vpop.f32.mrb[0].mxu0
    %v3544 = vadd.f32 %v3469, %v3543
    %v3545 = vpop.f32.mrb[0].mxu0
    %3546 = vdwg.mxu0
    %3547 = vmatprep.subr.mxu0 0.0
    %3548 = vmatpush1.msra.mxu0 %v3188
    %3549 = vmatprep.subr.mxu0 0.0
    %3550 = vmatpush1.msra.mxu0 %v3189
    %3551 = vmatprep.subr.mxu0 0.0
    %3552 = vmatpush1.msra.mxu0 %v3190
    %3553 = vmatprep.subr.mxu0 0.0
    %3554 = vmatpush1.msra.mxu0 %v3191
    %3555 = vmatprep.subr.mxu0 0.0
    %3556 = vmatpush1.msra.mxu0 %v3192
    %3557 = vmatprep.subr.mxu0 0.0
    %3558 = vmatpush1.msra.mxu0 %v3193
    %3559 = vmatprep.subr.mxu0 0.0
    %3560 = vmatpush1.msra.mxu0 %v3194
    %3561 = vmatprep.subr.mxu0 0.0
    %3562 = vmatpush1.msra.mxu0 %v3195
    %3563 = vmatprep.subr.mxu0 0.0
    %3564 = vmatpush1.msra.mxu0 %v3196
    %3565 = vmatprep.subr.mxu0 0.0
    %3566 = vmatpush1.msra.mxu0 %v3197
    %3567 = vmatprep.subr.mxu0 0.0
    %3568 = vmatpush1.msra.mxu0 %v3198
    %3569 = vmatprep.subr.mxu0 0.0
    %3570 = vmatpush1.msra.mxu0 %v3199
    %3571 = vmatprep.subr.mxu0 0.0
    %3572 = vmatpush1.msra.mxu0 %v3200
    %3573 = vmatprep.subr.mxu0 0.0
    %3574 = vmatpush1.msra.mxu0 %v3201
    %3575 = vmatprep.subr.mxu0 0.0
    %3576 = vmatpush1.msra.mxu0 %v3202
    %3577 = vmatprep.subr.mxu0 0.0
    %3578 = vmatpush1.msra.mxu0 %v3203
    %3579 = vmatprep.subr.mxu0 0.0
    %3580 = vmatpush1.msra.mxu0 %v3204
    %3581 = vmatprep.subr.mxu0 0.0
    %3582 = vmatpush1.msra.mxu0 %v3205
    %3583 = vmatprep.subr.mxu0 0.0
    %3584 = vmatpush1.msra.mxu0 %v3206
    %3585 = vmatprep.subr.mxu0 0.0
    %3586 = vmatpush1.msra.mxu0 %v3207
    %3587 = vmatprep.subr.mxu0 0.0
    %3588 = vmatpush1.msra.mxu0 %v3208
    %3589 = vmatprep.subr.mxu0 0.0
    %3590 = vmatpush1.msra.mxu0 %v3209
    %3591 = vmatprep.subr.mxu0 0.0
    %3592 = vmatpush1.msra.mxu0 %v3210
    %3593 = vmatprep.subr.mxu0 0.0
    %3594 = vmatpush1.msra.mxu0 %v3211
    %3595 = vmatprep.subr.mxu0 0.0
    %3596 = vmatpush1.msra.mxu0 %v3212
    %3597 = vmatprep.subr.mxu0 0.0
    %3598 = vmatpush1.msra.mxu0 %v3213
    %3599 = vmatprep.subr.mxu0 0.0
    %3600 = vmatpush1.msra.mxu0 %v3214
    %3601 = vmatprep.subr.mxu0 0.0
    %3602 = vmatpush1.msra.mxu0 %v3215
    %3603 = vmatprep.subr.mxu0 0.0
    %3604 = vmatpush1.msra.mxu0 %v3216
    %3605 = vmatprep.subr.mxu0 0.0
    %3606 = vmatpush1.msra.mxu0 %v3217
    %3607 = vmatprep.subr.mxu0 0.0
    %3608 = vmatpush1.msra.mxu0 %v3218
    %3609 = vmatprep.subr.mxu0 0.0
    %3610 = vmatpush1.msra.mxu0 %v3219
    %3611 = vmatprep.mubr.f32.mxu0 %v3071
    %3612 = vmatmul.mubr.f32.gmra.mrb[0].mxu0 %v3070
    %v3613 = vpop.f32.mrb[0].mxu0
    %v3614 = vadd.f32 %v3539, %v3613
    %v3615 = vpop.f32.mrb[0].mxu0
    %3616 = vmatprep.mubr.f32.mxu0 %v3085
    %3617 = vmatmul.mubr.f32.gmra.mrb[0].mxu0 %v3084
    %v3618 = vpop.f32.mrb[0].mxu0
    %v3619 = vadd.f32 %v3544, %v3618
    %v3620 = vpop.f32.mrb[0].mxu0
    %3621 = vdwg.mxu0
    %3622 = vmatprep.subr.mxu0 0.0
    %3623 = vmatpush1.msra.mxu0 %v3220
    %3624 = vmatprep.subr.mxu0 0.0
    %3625 = vmatpush1.msra.mxu0 %v3221
    %3626 = vmatprep.subr.mxu0 0.0
    %3627 = vmatpush1.msra.mxu0 %v3222
    %3628 = vmatprep.subr.mxu0 0.0
    %3629 = vmatpush1.msra.mxu0 %v3223
    %3630 = vmatprep.subr.mxu0 0.0
    %3631 = vmatpush1.msra.mxu0 %v3224
    %3632 = vmatprep.subr.mxu0 0.0
    %3633 = vmatpush1.msra.mxu0 %v3225
    %3634 = vmatprep.subr.mxu0 0.0
    %3635 = vmatpush1.msra.mxu0 %v3226
    %3636 = vmatprep.subr.mxu0 0.0
    %3637 = vmatpush1.msra.mxu0 %v3227
    %3638 = vmatprep.subr.mxu0 0.0
    %3639 = vmatpush1.msra.mxu0 %v3228
    %3640 = vmatprep.subr.mxu0 0.0
    %3641 = vmatpush1.msra.mxu0 %v3229
    %3642 = vmatprep.subr.mxu0 0.0
    %3643 = vmatpush1.msra.mxu0 %v3230
    %3644 = vmatprep.subr.mxu0 0.0
    %3645 = vmatpush1.msra.mxu0 %v3231
    %3646 = vmatprep.subr.mxu0 0.0
    %3647 = vmatpush1.msra.mxu0 %v3232
    %3648 = vmatprep.subr.mxu0 0.0
    %3649 = vmatpush1.msra.mxu0 %v3233
    %3650 = vmatprep.subr.mxu0 0.0
    %3651 = vmatpush1.msra.mxu0 %v3234
    %3652 = vmatprep.subr.mxu0 0.0
    %3653 = vmatpush1.msra.mxu0 %v3235
    %3654 = vmatprep.subr.mxu0 0.0
    %3655 = vmatpush1.msra.mxu0 %v3236
    %3656 = vmatprep.subr.mxu0 0.0
    %3657 = vmatpush1.msra.mxu0 %v3237
    %3658 = vmatprep.subr.mxu0 0.0
    %3659 = vmatpush1.msra.mxu0 %v3238
    %3660 = vmatprep.subr.mxu0 0.0
    %3661 = vmatpush1.msra.mxu0 %v3239
    %3662 = vmatprep.subr.mxu0 0.0
    %3663 = vmatpush1.msra.mxu0 %v3240
    %3664 = vmatprep.subr.mxu0 0.0
    %3665 = vmatpush1.msra.mxu0 %v3241
    %3666 = vmatprep.subr.mxu0 0.0
    %3667 = vmatpush1.msra.mxu0 %v3242
    %3668 = vmatprep.subr.mxu0 0.0
    %3669 = vmatpush1.msra.mxu0 %v3243
    %3670 = vmatprep.subr.mxu0 0.0
    %3671 = vmatpush1.msra.mxu0 %v3244
    %3672 = vmatprep.subr.mxu0 0.0
    %3673 = vmatpush1.msra.mxu0 %v3245
    %3674 = vmatprep.subr.mxu0 0.0
    %3675 = vmatpush1.msra.mxu0 %v3246
    %3676 = vmatprep.subr.mxu0 0.0
    %3677 = vmatpush1.msra.mxu0 %v3247
    %3678 = vmatprep.subr.mxu0 0.0
    %3679 = vmatpush1.msra.mxu0 %v3248
    %3680 = vmatprep.subr.mxu0 0.0
    %3681 = vmatpush1.msra.mxu0 %v3249
    %3682 = vmatprep.subr.mxu0 0.0
    %3683 = vmatpush1.msra.mxu0 %v3250
    %3684 = vmatprep.subr.mxu0 0.0
    %3685 = vmatpush1.msra.mxu0 %v3251
    %3686 = vmatprep.mubr.f32.mxu0 %v3073
    %3687 = vmatmul.mubr.f32.gmra.mrb[0].mxu0 %v3072
    %v3688 = vpop.f32.mrb[0].mxu0
    %v3689 = vadd.f32 %v3614, %v3688
    %v3690 = vpop.f32.mrb[0].mxu0
    %3691 = vmatprep.mubr.f32.mxu0 %v3087
    %3692 = vmatmul.mubr.f32.gmra.mrb[0].mxu0 %v3086
    %v3693 = vpop.f32.mrb[0].mxu0
    %v3694 = vadd.f32 %v3619, %v3693
    %v3695 = vpop.f32.mrb[0].mxu0
    %3696 = vdwg.mxu0
    %3697 = vmatprep.subr.mxu0 0.0
    %3698 = vmatpush1.msra.mxu0 %v3252
    %3699 = vmatprep.subr.mxu0 0.0
    %3700 = vmatpush1.msra.mxu0 %v3253
    %3701 = vmatprep.subr.mxu0 0.0
    %3702 = vmatpush1.msra.mxu0 %v3254
    %3703 = vmatprep.subr.mxu0 0.0
    %3704 = vmatpush1.msra.mxu0 %v3255
    %3705 = vmatprep.subr.mxu0 0.0
    %3706 = vmatpush1.msra.mxu0 %v3256
    %3707 = vmatprep.subr.mxu0 0.0
    %3708 = vmatpush1.msra.mxu0 %v3257
    %3709 = vmatprep.subr.mxu0 0.0
    %3710 = vmatpush1.msra.mxu0 %v3258
    %3711 = vmatprep.subr.mxu0 0.0
    %3712 = vmatpush1.msra.mxu0 %v3259
    %3713 = vmatprep.subr.mxu0 0.0
    %3714 = vmatpush1.msra.mxu0 %v3260
    %3715 = vmatprep.subr.mxu0 0.0
    %3716 = vmatpush1.msra.mxu0 %v3261
    %3717 = vmatprep.subr.mxu0 0.0
    %3718 = vmatpush1.msra.mxu0 %v3262
    %3719 = vmatprep.subr.mxu0 0.0
    %3720 = vmatpush1.msra.mxu0 %v3263
    %3721 = vmatprep.subr.mxu0 0.0
    %3722 = vmatpush1.msra.mxu0 %v3264
    %3723 = vmatprep.subr.mxu0 0.0
    %3724 = vmatpush1.msra.mxu0 %v3265
    %3725 = vmatprep.subr.mxu0 0.0
    %3726 = vmatpush1.msra.mxu0 %v3266
    %3727 = vmatprep.subr.mxu0 0.0
    %3728 = vmatpush1.msra.mxu0 %v3267
    %3729 = vmatprep.subr.mxu0 0.0
    %3730 = vmatpush1.msra.mxu0 %v3268
    %3731 = vmatprep.subr.mxu0 0.0
    %3732 = vmatpush1.msra.mxu0 %v3269
    %3733 = vmatprep.subr.mxu0 0.0
    %3734 = vmatpush1.msra.mxu0 %v3270
    %3735 = vmatprep.subr.mxu0 0.0
    %3736 = vmatpush1.msra.mxu0 %v3271
    %3737 = vmatprep.subr.mxu0 0.0
    %3738 = vmatpush1.msra.mxu0 %v3272
    %3739 = vmatprep.subr.mxu0 0.0
    %3740 = vmatpush1.msra.mxu0 %v3273
    %3741 = vmatprep.subr.mxu0 0.0
    %3742 = vmatpush1.msra.mxu0 %v3274
    %3743 = vmatprep.subr.mxu0 0.0
    %3744 = vmatpush1.msra.mxu0 %v3275
    %3745 = vmatprep.subr.mxu0 0.0
    %3746 = vmatpush1.msra.mxu0 %v3276
    %3747 = vmatprep.subr.mxu0 0.0
    %3748 = vmatpush1.msra.mxu0 %v3277
    %3749 = vmatprep.subr.mxu0 0.0
    %3750 = vmatpush1.msra.mxu0 %v3278
    %3751 = vmatprep.subr.mxu0 0.0
    %3752 = vmatpush1.msra.mxu0 %v3279
    %3753 = vmatprep.subr.mxu0 0.0
    %3754 = vmatpush1.msra.mxu0 %v3280
    %3755 = vmatprep.subr.mxu0 0.0
    %3756 = vmatpush1.msra.mxu0 %v3281
    %3757 = vmatprep.subr.mxu0 0.0
    %3758 = vmatpush1.msra.mxu0 %v3282
    %3759 = vmatprep.subr.mxu0 0.0
    %3760 = vmatpush1.msra.mxu0 %v3283
    %3761 = vmatprep.mubr.f32.mxu0 %v3075
    %3762 = vmatmul.mubr.f32.gmra.mrb[0].mxu0 %v3074
    %v3763 = vpop.f32.mrb[0].mxu0
    %v3764 = vadd.f32 %v3689, %v3763
    %v3765 = vpop.f32.mrb[0].mxu0
    %3766 = vmatprep.mubr.f32.mxu0 %v3089
    %3767 = vmatmul.mubr.f32.gmra.mrb[0].mxu0 %v3088
    %v3768 = vpop.f32.mrb[0].mxu0
    %v3769 = vadd.f32 %v3694, %v3768
    %v3770 = vpop.f32.mrb[0].mxu0
    %3771 = vdwg.mxu0
    %3772 = vmatprep.subr.mxu0 0.0
    %3773 = vmatpush1.msra.mxu0 %v3284
    %3774 = vmatprep.subr.mxu0 0.0
    %3775 = vmatpush1.msra.mxu0 %v3285
    %3776 = vmatprep.subr.mxu0 0.0
    %3777 = vmatpush1.msra.mxu0 %v3286
    %3778 = vmatprep.subr.mxu0 0.0
    %3779 = vmatpush1.msra.mxu0 %v3287
    %3780 = vmatprep.subr.mxu0 0.0
    %3781 = vmatpush1.msra.mxu0 %v3288
    %3782 = vmatprep.subr.mxu0 0.0
    %3783 = vmatpush1.msra.mxu0 %v3289
    %3784 = vmatprep.subr.mxu0 0.0
    %3785 = vmatpush1.msra.mxu0 %v3290
    %3786 = vmatprep.subr.mxu0 0.0
    %3787 = vmatpush1.msra.mxu0 %v3291
    %3788 = vmatprep.subr.mxu0 0.0
    %3789 = vmatpush1.msra.mxu0 %v3292
    %3790 = vmatprep.subr.mxu0 0.0
    %3791 = vmatpush1.msra.mxu0 %v3293
    %3792 = vmatprep.subr.mxu0 0.0
    %3793 = vmatpush1.msra.mxu0 %v3294
    %3794 = vmatprep.subr.mxu0 0.0
    %3795 = vmatpush1.msra.mxu0 %v3295
    %3796 = vmatprep.subr.mxu0 0.0
    %3797 = vmatpush1.msra.mxu0 %v3296
    %3798 = vmatprep.subr.mxu0 0.0
    %3799 = vmatpush1.msra.mxu0 %v3297
    %3800 = vmatprep.subr.mxu0 0.0
    %3801 = vmatpush1.msra.mxu0 %v3298
    %3802 = vmatprep.subr.mxu0 0.0
    %3803 = vmatpush1.msra.mxu0 %v3299
    %3804 = vmatprep.subr.mxu0 0.0
    %3805 = vmatpush1.msra.mxu0 %v3300
    %3806 = vmatprep.subr.mxu0 0.0
    %3807 = vmatpush1.msra.mxu0 %v3301
    %3808 = vmatprep.subr.mxu0 0.0
    %3809 = vmatpush1.msra.mxu0 %v3302
    %3810 = vmatprep.subr.mxu0 0.0
    %3811 = vmatpush1.msra.mxu0 %v3303
    %3812 = vmatprep.subr.mxu0 0.0
    %3813 = vmatpush1.msra.mxu0 %v3304
    %3814 = vmatprep.subr.mxu0 0.0
    %3815 = vmatpush1.msra.mxu0 %v3305
    %3816 = vmatprep.subr.mxu0 0.0
    %3817 = vmatpush1.msra.mxu0 %v3306
    %3818 = vmatprep.subr.mxu0 0.0
    %3819 = vmatpush1.msra.mxu0 %v3307
    %3820 = vmatprep.subr.mxu0 0.0
    %3821 = vmatpush1.msra.mxu0 %v3308
    %3822 = vmatprep.subr.mxu0 0.0
    %3823 = vmatpush1.msra.mxu0 %v3309
    %3824 = vmatprep.subr.mxu0 0.0
    %3825 = vmatpush1.msra.mxu0 %v3320
    %3826 = vmatprep.subr.mxu0 0.0
    %3827 = vmatpush1.msra.mxu0 0.0
    %3828 = vmatprep.subr.mxu0 0.0
    %3829 = vmatpush1.msra.mxu0 0.0
    %3830 = vmatprep.subr.mxu0 0.0
    %3831 = vmatpush1.msra.mxu0 0.0
    %3832 = vmatprep.subr.mxu0 0.0
    %3833 = vmatpush1.msra.mxu0 0.0
    %3834 = vmatprep.subr.mxu0 0.0
    %3835 = vmatpush1.msra.mxu0 0.0
    %3836 = vmatprep.mubr.f32.mxu0 %v3313
    %3837 = vmatmul.mubr.f32.gmra.mrb[0].mxu0 %v3076
    %v3838 = vpop.f32.mrb[0].mxu0
    %v3839 = vadd.f32 %v3764, %v3838
    %v3840 = vpop.f32.mrb[0].mxu0
    %3841 = vmatprep.mubr.f32.mxu0 %v3316
    %3842 = vmatmul.mubr.f32.gmra.mrb[0].mxu0 %v3090
    %v3843 = vpop.f32.mrb[0].mxu0
    %v3844 = vadd.f32 %v3769, %v3843
    %v3845 = vpop.f32.mrb[0].mxu0
    %3846 = vdwg.mxu0
    %vm3847 = vcmask 474112
    %3848 = vst.msk [vmem:[#allocation3] sm:$0xff] %vm3847, %v3839
    %3849 = vst.msk [vmem:[#allocation3 + $0x8] sm:$0xff] %vm3847, %v3844
    %3852 = vrot.lane.b32.xlu0 %v3839, 127
    %v3853 = vpop.permute.xlu0 %3852
    %3854 = vrot.lane.b32.xlu0 %v3844, 127
    %v3855 = vpop.permute.xlu0 %3854
    %3858 = vst.msk [vmem:[#allocation3 + $0x10] sm:$0xff] %vm3847, %v3853
    %3859 = vst.msk [vmem:[#allocation3 + $0x18] sm:$0xff] %vm3847, %v3855
    %3860 = vrot.lane.b32.xlu0 %v3839, 126
    %v3861 = vpop.permute.xlu0 %3860
    %3862 = vrot.lane.b32.xlu0 %v3844, 126
    %v3863 = vpop.permute.xlu0 %3862
    %3866 = vst.msk [vmem:[#allocation3 + $0x20] sm:$0xff] %vm3847, %v3861
    %3867 = vst.msk [vmem:[#allocation3 + $0x28] sm:$0xff] %vm3847, %v3863
    %3868 = vrot.lane.b32.xlu0 %v3839, 122
    %v3869 = vpop.permute.xlu0 %3868
    %3870 = vrot.lane.b32.xlu0 %v3844, 122
    %v3871 = vpop.permute.xlu0 %3870
    %3874 = vst.msk [vmem:[#allocation3 + $0x30] sm:$0xff] %vm3847, %v3869
    %3875 = vst.msk [vmem:[#allocation3 + $0x38] sm:$0xff] %vm3847, %v3871
    %3876 = vrot.lane.b32.xlu0 %v3839, 121
    %v3877 = vpop.permute.xlu0 %3876
    %3878 = vrot.lane.b32.xlu0 %v3844, 121
    %v3879 = vpop.permute.xlu0 %3878
    %3882 = vst.msk [vmem:[#allocation3 + $0x40] sm:$0xff] %vm3847, %v3877
    %3883 = vst.msk [vmem:[#allocation3 + $0x48] sm:$0xff] %vm3847, %v3879
    %3884 = vrot.lane.b32.xlu0 %v3839, 120
    %v3885 = vpop.permute.xlu0 %3884
    %3886 = vrot.lane.b32.xlu0 %v3844, 120
    %v3887 = vpop.permute.xlu0 %3886
    %3890 = vst.msk [vmem:[#allocation3 + $0x50] sm:$0xff] %vm3847, %v3885
    %3891 = vst.msk [vmem:[#allocation3 + $0x58] sm:$0xff] %vm3847, %v3887
    %3892 = vrot.lane.b32.xlu0 %v3839, 116
    %v3893 = vpop.permute.xlu0 %3892
    %3894 = vrot.lane.b32.xlu0 %v3844, 116
    %v3895 = vpop.permute.xlu0 %3894
    %3898 = vst.msk [vmem:[#allocation3 + $0x60] sm:$0xff] %vm3847, %v3893
    %3899 = vst.msk [vmem:[#allocation3 + $0x68] sm:$0xff] %vm3847, %v3895
    %3900 = vrot.lane.b32.xlu0 %v3839, 115
    %v3901 = vpop.permute.xlu0 %3900
    %3902 = vrot.lane.b32.xlu0 %v3844, 115
    %v3903 = vpop.permute.xlu0 %3902
    %3906 = vst.msk [vmem:[#allocation3 + $0x70] sm:$0xff] %vm3847, %v3901
    %3907 = vst.msk [vmem:[#allocation3 + $0x78] sm:$0xff] %vm3847, %v3903
    %3908 = vrot.lane.b32.xlu0 %v3839, 114
    %v3909 = vpop.permute.xlu0 %3908
    %3910 = vrot.lane.b32.xlu0 %v3844, 114
    %v3911 = vpop.permute.xlu0 %3910
    %3914 = vst.msk [vmem:[#allocation3 + $0x80] sm:$0xff] %vm3847, %v3909
    %3915 = vst.msk [vmem:[#allocation3 + $0x88] sm:$0xff] %vm3847, %v3911
    %v3916 = vld [vmem:[%s5] sm:$0xff]
    %v3917 = vld [vmem:[%s5 + $0x8] sm:$0xff]
    %v3918 = vld [vmem:[%s5 + $0x10] sm:$0xff]
    %v3919 = vld [vmem:[%s5 + $0x18] sm:$0xff]
    %v3920 = vld [vmem:[%s5 + $0x20] sm:$0xff]
    %v3921 = vld [vmem:[%s5 + $0x28] sm:$0xff]
    %v3922 = vld [vmem:[%s5 + $0x30] sm:$0xff]
    %v3923 = vld [vmem:[%s5 + $0x38] sm:$0xff]
    %v3924 = vld [vmem:[#allocation3] sm:$0xff]
    %v3925 = vld [vmem:[#allocation3 + $0x8] sm:$0xff]
    %v3926 = vld [vmem:[#allocation3 + $0x10] sm:$0xff]
    %v3927 = vld [vmem:[#allocation3 + $0x18] sm:$0xff]
    %v3928 = vld [vmem:[#allocation3 + $0x20] sm:$0xff]
    %v3929 = vld [vmem:[#allocation3 + $0x28] sm:$0xff]
    %v3930 = vld [vmem:[#allocation3 + $0x30] sm:$0xff]
    %v3931 = vld [vmem:[#allocation3 + $0x38] sm:$0xff]
    %v3932 = vld [vmem:[#allocation3 + $0x40] sm:$0xff]
    %v3933 = vld [vmem:[#allocation3 + $0x48] sm:$0xff]
    %v3934 = vld [vmem:[#allocation3 + $0x50] sm:$0xff]
    %v3935 = vld [vmem:[#allocation3 + $0x58] sm:$0xff]
    %v3936 = vld [vmem:[#allocation3 + $0x60] sm:$0xff]
    %v3937 = vld [vmem:[#allocation3 + $0x68] sm:$0xff]
    %v3938 = vld [vmem:[#allocation3 + $0x70] sm:$0xff]
    %v3939 = vld [vmem:[#allocation3 + $0x78] sm:$0xff]
    %v3940 = vld [vmem:[#allocation3 + $0x80] sm:$0xff]
    %v3941 = vld [vmem:[#allocation3 + $0x88] sm:$0xff]
    %v3942 = vld [vmem:[%s6] sm:$0xff]
    %v3943 = vld [vmem:[%s6 + $0x8] sm:$0xff]
    %v3944 = vld [vmem:[%s6 + $0x10] sm:$0xff]
    %v3945 = vld [vmem:[%s6 + $0x18] sm:$0xff]
    %3947 = vset.pattern.permute.xlu0 0
    %3948 = vperm.xlu0 %3947, %v3942
    %v3949 = vpop.permute.xlu0 %3948
    %3952 = vset.pattern.permute.xlu0 0
    %3953 = vperm.xlu0 %3952, %v3943
    %v3954 = vpop.permute.xlu0 %3953
    %3957 = vset.pattern.permute.xlu0 0
    %3958 = vperm.xlu0 %3957, %v3944
    %v3959 = vpop.permute.xlu0 %3958
    %3962 = vset.pattern.permute.xlu0 0
    %3963 = vperm.xlu0 %3962, %v3945
    %v3964 = vpop.permute.xlu0 %3963
    %vm3966 = vcmask 130048
    %v3968 = vsel %vm3966, %v3917, 0
    %v3971 = vsel %vm3966, %v3919, 0
    %v3974 = vsel %vm3966, %v3921, 0
    %v3977 = vsel %vm3966, %v3923, 0
    %3979 = vmatprep.subr.mxu0 0.0
    %3980 = vmatpush1.msra.mxu0 %v3924
    %3981 = vmatprep.subr.mxu0 0.0
    %3982 = vmatpush1.msra.mxu0 %v3925
    %3983 = vmatprep.subr.mxu0 0.0
    %3984 = vmatpush1.msra.mxu0 %v3926
    %3985 = vmatprep.subr.mxu0 0.0
    %3986 = vmatpush1.msra.mxu0 %v3927
    %3987 = vmatprep.subr.mxu0 0.0
    %3988 = vmatpush1.msra.mxu0 %v3928
    %3989 = vmatprep.subr.mxu0 0.0
    %3990 = vmatpush1.msra.mxu0 %v3929
    %3991 = vmatprep.subr.mxu0 0.0
    %3992 = vmatpush1.msra.mxu0 %v3930
    %3993 = vmatprep.subr.mxu0 0.0
    %3994 = vmatpush1.msra.mxu0 %v3931
    %3995 = vmatprep.subr.mxu0 0.0
    %3996 = vmatpush1.msra.mxu0 %v3932
    %3997 = vmatprep.subr.mxu0 0.0
    %3998 = vmatpush1.msra.mxu0 %v3933
    %3999 = vmatprep.subr.mxu0 0.0
    %4000 = vmatpush1.msra.mxu0 %v3934
    %4001 = vmatprep.subr.mxu0 0.0
    %4002 = vmatpush1.msra.mxu0 %v3935
    %4003 = vmatprep.subr.mxu0 0.0
    %4004 = vmatpush1.msra.mxu0 %v3936
    %4005 = vmatprep.subr.mxu0 0.0
    %4006 = vmatpush1.msra.mxu0 %v3937
    %4007 = vmatprep.subr.mxu0 0.0
    %4008 = vmatpush1.msra.mxu0 %v3938
    %4009 = vmatprep.subr.mxu0 0.0
    %4010 = vmatpush1.msra.mxu0 %v3939
    %4011 = vmatprep.subr.mxu0 0.0
    %4012 = vmatpush1.msra.mxu0 %v3940
    %4013 = vmatprep.subr.mxu0 0.0
    %4014 = vmatpush1.msra.mxu0 %v3941
    %4015 = vmatprep.subr.mxu0 0.0
    %4016 = vmatpush1.msra.mxu0 0.0
    %4017 = vmatprep.subr.mxu0 0.0
    %4018 = vmatpush1.msra.mxu0 0.0
    %4019 = vmatprep.subr.mxu0 0.0
    %4020 = vmatpush1.msra.mxu0 0.0
    %4021 = vmatprep.subr.mxu0 0.0
    %4022 = vmatpush1.msra.mxu0 0.0
    %4023 = vmatprep.subr.mxu0 0.0
    %4024 = vmatpush1.msra.mxu0 0.0
    %4025 = vmatprep.subr.mxu0 0.0
    %4026 = vmatpush1.msra.mxu0 0.0
    %4027 = vmatprep.subr.mxu0 0.0
    %4028 = vmatpush1.msra.mxu0 0.0
    %4029 = vmatprep.subr.mxu0 0.0
    %4030 = vmatpush1.msra.mxu0 0.0
    %4031 = vmatprep.subr.mxu0 0.0
    %4032 = vmatpush1.msra.mxu0 0.0
    %4033 = vmatprep.subr.mxu0 0.0
    %4034 = vmatpush1.msra.mxu0 0.0
    %4035 = vmatprep.subr.mxu0 0.0
    %4036 = vmatpush1.msra.mxu0 0.0
    %4037 = vmatprep.subr.mxu0 0.0
    %4038 = vmatpush1.msra.mxu0 0.0
    %4039 = vmatprep.subr.mxu0 0.0
    %4040 = vmatpush1.msra.mxu0 0.0
    %4041 = vmatprep.subr.mxu0 0.0
    %4042 = vmatpush1.msra.mxu0 0.0
    %4043 = vmatprep.mubr.f32.mxu0 %v3968
    %4044 = vmatmul.mubr.f32.gmra.mrb[0].mxu0 %v3916
    %v4045 = vpop.f32.mrb[0].mxu0
    %v4046 = vadd.f32 %v3949, %v4045
    %v4047 = vpop.f32.mrb[0].mxu0
    %4048 = vmatprep.mubr.f32.mxu0 %v3971
    %4049 = vmatmul.mubr.f32.gmra.mrb[0].mxu0 %v3918
    %v4050 = vpop.f32.mrb[0].mxu0
    %v4051 = vadd.f32 %v3954, %v4050
    %v4052 = vpop.f32.mrb[0].mxu0
    %4053 = vmatprep.mubr.f32.mxu0 %v3974
    %4054 = vmatmul.mubr.f32.gmra.mrb[0].mxu0 %v3920
    %v4055 = vpop.f32.mrb[0].mxu0
    %v4056 = vadd.f32 %v3959, %v4055
    %v4057 = vpop.f32.mrb[0].mxu0
    %4058 = vmatprep.mubr.f32.mxu0 %v3977
    %4059 = vmatmul.mubr.f32.gmra.mrb[0].mxu0 %v3922
    %v4060 = vpop.f32.mrb[0].mxu0
    %v4061 = vadd.f32 %v3964, %v4060
    %v4062 = vpop.f32.mrb[0].mxu0
    %4063 = vdwg.mxu0
    %v4064 = vmax.f32 %v4046, 0.0
    %v4065 = vmax.f32 %v4051, 0.0
    %v4066 = vmax.f32 %v4056, 0.0
    %v4067 = vmax.f32 %v4061, 0.0
    %v4068 = vld [vmem:[%s8] sm:$0xff]
    %v4069 = vld [vmem:[%s8 + $0x8] sm:$0xff]
    %v4070 = vld [vmem:[%s8 + $0x10] sm:$0xff]
    %v4071 = vld [vmem:[%s8 + $0x18] sm:$0xff]
    %v4072 = vld [vmem:[%s8 + $0x20] sm:$0xff]
    %v4073 = vld [vmem:[%s8 + $0x28] sm:$0xff]
    %v4074 = vld [vmem:[%s8 + $0x30] sm:$0xff]
    %v4075 = vld [vmem:[%s8 + $0x38] sm:$0x3]
    %v4077 = vsel %vm3847, %v4064, 0
    %v4080 = vsel %vm3847, %v4065, 0
    %v4083 = vsel %vm3847, %v4066, 0
    %v4086 = vsel %vm3847, %v4067, 0
    %vm4088 = vcmask 1041408
    %v4090 = vsel %vm4088, %v4075, 0
    %4092 = vmatprep.subr.mxu0 0.0
    %4093 = vmatpush1.msra.mxu0 %v4068
    %4094 = vmatprep.subr.mxu0 0.0
    %4095 = vmatpush1.msra.mxu0 %v4069
    %4096 = vmatprep.subr.mxu0 0.0
    %4097 = vmatpush1.msra.mxu0 %v4070
    %4098 = vmatprep.subr.mxu0 0.0
    %4099 = vmatpush1.msra.mxu0 %v4071
    %4100 = vmatprep.subr.mxu0 0.0
    %4101 = vmatpush1.msra.mxu0 %v4072
    %4102 = vmatprep.subr.mxu0 0.0
    %4103 = vmatpush1.msra.mxu0 %v4073
    %4104 = vmatprep.subr.mxu0 0.0
    %4105 = vmatpush1.msra.mxu0 %v4074
    %4106 = vmatprep.subr.mxu0 0.0
    %4107 = vmatpush1.msra.mxu0 %v4090
    %4108 = vmatprep.subr.mxu0 0.0
    %4109 = vmatpush1.msra.mxu0 0.0
    %4110 = vmatprep.subr.mxu0 0.0
    %4111 = vmatpush1.msra.mxu0 0.0
    %4112 = vmatprep.subr.mxu0 0.0
    %4113 = vmatpush1.msra.mxu0 0.0
    %4114 = vmatprep.subr.mxu0 0.0
    %4115 = vmatpush1.msra.mxu0 0.0
    %4116 = vmatprep.subr.mxu0 0.0
    %4117 = vmatpush1.msra.mxu0 0.0
    %4118 = vmatprep.subr.mxu0 0.0
    %4119 = vmatpush1.msra.mxu0 0.0
    %4120 = vmatprep.subr.mxu0 0.0
    %4121 = vmatpush1.msra.mxu0 0.0
    %4122 = vmatprep.subr.mxu0 0.0
    %4123 = vmatpush1.msra.mxu0 0.0
    %4124 = vmatprep.subr.mxu0 0.0
    %4125 = vmatpush1.msra.mxu0 0.0
    %4126 = vmatprep.subr.mxu0 0.0
    %4127 = vmatpush1.msra.mxu0 0.0
    %4128 = vmatprep.subr.mxu0 0.0
    %4129 = vmatpush1.msra.mxu0 0.0
    %4130 = vmatprep.subr.mxu0 0.0
    %4131 = vmatpush1.msra.mxu0 0.0
    %4132 = vmatprep.subr.mxu0 0.0
    %4133 = vmatpush1.msra.mxu0 0.0
    %4134 = vmatprep.subr.mxu0 0.0
    %4135 = vmatpush1.msra.mxu0 0.0
    %4136 = vmatprep.subr.mxu0 0.0
    %4137 = vmatpush1.msra.mxu0 0.0
    %4138 = vmatprep.subr.mxu0 0.0
    %4139 = vmatpush1.msra.mxu0 0.0
    %4140 = vmatprep.subr.mxu0 0.0
    %4141 = vmatpush1.msra.mxu0 0.0
    %4142 = vmatprep.subr.mxu0 0.0
    %4143 = vmatpush1.msra.mxu0 0.0
    %4144 = vmatprep.subr.mxu0 0.0
    %4145 = vmatpush1.msra.mxu0 0.0
    %4146 = vmatprep.subr.mxu0 0.0
    %4147 = vmatpush1.msra.mxu0 0.0
    %4148 = vmatprep.subr.mxu0 0.0
    %4149 = vmatpush1.msra.mxu0 0.0
    %4150 = vmatprep.subr.mxu0 0.0
    %4151 = vmatpush1.msra.mxu0 0.0
    %4152 = vmatprep.subr.mxu0 0.0
    %4153 = vmatpush1.msra.mxu0 0.0
    %4154 = vmatprep.subr.mxu0 0.0
    %4155 = vmatpush1.msra.mxu0 0.0
    %4156 = vmatprep.mubr.f32.mxu0 0.0
    %4157 = vmatmul.mubr.f32.gmra.mrb[0].mxu0 %v4077
    %v4158 = vpop.f32.mrb[0].mxu0
    %v4159 = vadd.f32 0.0, %v4158
    %v4160 = vpop.f32.mrb[0].mxu0
    %4161 = vmatprep.mubr.f32.mxu0 0.0
    %4162 = vmatmul.mubr.f32.gmra.mrb[0].mxu0 %v4080
    %v4163 = vpop.f32.mrb[0].mxu0
    %v4164 = vadd.f32 0.0, %v4163
    %v4165 = vpop.f32.mrb[0].mxu0
    %4166 = vmatprep.mubr.f32.mxu0 0.0
    %4167 = vmatmul.mubr.f32.gmra.mrb[0].mxu0 %v4083
    %v4168 = vpop.f32.mrb[0].mxu0
    %v4169 = vadd.f32 0.0, %v4168
    %v4170 = vpop.f32.mrb[0].mxu0
    %4171 = vmatprep.mubr.f32.mxu0 0.0
    %4172 = vmatmul.mubr.f32.gmra.mrb[0].mxu0 %v4086
    %v4173 = vpop.f32.mrb[0].mxu0
    %v4174 = vadd.f32 0.0, %v4173
    %v4175 = vpop.f32.mrb[0].mxu0
    %4176 = vdwg.mxu0
    %v4177 = vld [vmem:[%s9] sm:$0xff]
    %v4178 = vld [vmem:[%s9 + $0x8] sm:$0xff]
    %v4179 = vld [vmem:[%s9 + $0x10] sm:$0xf]
    %v4180 = vld [vmem:[%s10] sm:$0xff]
    %v4181 = vld [vmem:[%s10 + $0x8] sm:$0xff]
    %v4182 = vld [vmem:[%s10 + $0x10] sm:$0xf]
    %4184 = vset.pattern.permute.xlu0 0
    %4185 = vperm.xlu0 %4184, %v4180
    %v4186 = vpop.permute.xlu0 %4185
    %4189 = vset.pattern.permute.xlu0 0
    %4190 = vperm.xlu0 %4189, %v4181
    %v4191 = vpop.permute.xlu0 %4190
    %4194 = vset.pattern.permute.xlu0 0
    %4195 = vperm.xlu0 %4194, %v4182
    %v4196 = vpop.permute.xlu0 %4195
    %vm4198 = vcmask 261120
    %v4200 = vsel %vm4198, %v4177, 0
    %v4203 = vsel %vm4198, %v4178, 0
    %v4206 = vsel %vm4198, %v4179, 0
    %4208 = vmatprep.subr.mxu0 0.0
    %4209 = vmatpush1.msra.mxu0 %v4159
    %4210 = vmatprep.subr.mxu0 0.0
    %4211 = vmatpush1.msra.mxu0 %v4164
    %4212 = vmatprep.subr.mxu0 0.0
    %4213 = vmatpush1.msra.mxu0 %v4169
    %4214 = vmatprep.subr.mxu0 0.0
    %4215 = vmatpush1.msra.mxu0 %v4174
    %4216 = vmatprep.subr.mxu0 0.0
    %4217 = vmatpush1.msra.mxu0 0.0
    %4218 = vmatprep.subr.mxu0 0.0
    %4219 = vmatpush1.msra.mxu0 0.0
    %4220 = vmatprep.subr.mxu0 0.0
    %4221 = vmatpush1.msra.mxu0 0.0
    %4222 = vmatprep.subr.mxu0 0.0
    %4223 = vmatpush1.msra.mxu0 0.0
    %4224 = vmatprep.subr.mxu0 0.0
    %4225 = vmatpush1.msra.mxu0 0.0
    %4226 = vmatprep.subr.mxu0 0.0
    %4227 = vmatpush1.msra.mxu0 0.0
    %4228 = vmatprep.subr.mxu0 0.0
    %4229 = vmatpush1.msra.mxu0 0.0
    %4230 = vmatprep.subr.mxu0 0.0
    %4231 = vmatpush1.msra.mxu0 0.0
    %4232 = vmatprep.subr.mxu0 0.0
    %4233 = vmatpush1.msra.mxu0 0.0
    %4234 = vmatprep.subr.mxu0 0.0
    %4235 = vmatpush1.msra.mxu0 0.0
    %4236 = vmatprep.subr.mxu0 0.0
    %4237 = vmatpush1.msra.mxu0 0.0
    %4238 = vmatprep.subr.mxu0 0.0
    %4239 = vmatpush1.msra.mxu0 0.0
    %4240 = vmatprep.subr.mxu0 0.0
    %4241 = vmatpush1.msra.mxu0 0.0
    %4242 = vmatprep.subr.mxu0 0.0
    %4243 = vmatpush1.msra.mxu0 0.0
    %4244 = vmatprep.subr.mxu0 0.0
    %4245 = vmatpush1.msra.mxu0 0.0
    %4246 = vmatprep.subr.mxu0 0.0
    %4247 = vmatpush1.msra.mxu0 0.0
    %4248 = vmatprep.subr.mxu0 0.0
    %4249 = vmatpush1.msra.mxu0 0.0
    %4250 = vmatprep.subr.mxu0 0.0
    %4251 = vmatpush1.msra.mxu0 0.0
    %4252 = vmatprep.subr.mxu0 0.0
    %4253 = vmatpush1.msra.mxu0 0.0
    %4254 = vmatprep.subr.mxu0 0.0
    %4255 = vmatpush1.msra.mxu0 0.0
    %4256 = vmatprep.subr.mxu0 0.0
    %4257 = vmatpush1.msra.mxu0 0.0
    %4258 = vmatprep.subr.mxu0 0.0
    %4259 = vmatpush1.msra.mxu0 0.0
    %4260 = vmatprep.subr.mxu0 0.0
    %4261 = vmatpush1.msra.mxu0 0.0
    %4262 = vmatprep.subr.mxu0 0.0
    %4263 = vmatpush1.msra.mxu0 0.0
    %4264 = vmatprep.subr.mxu0 0.0
    %4265 = vmatpush1.msra.mxu0 0.0
    %4266 = vmatprep.subr.mxu0 0.0
    %4267 = vmatpush1.msra.mxu0 0.0
    %4268 = vmatprep.subr.mxu0 0.0
    %4269 = vmatpush1.msra.mxu0 0.0
    %4270 = vmatprep.subr.mxu0 0.0
    %4271 = vmatpush1.msra.mxu0 0.0
    %4272 = vmatprep.mubr.f32.mxu0 0.0
    %4273 = vmatmul.mubr.f32.gmra.mrb[0].mxu0 %v4200
    %v4274 = vpop.f32.mrb[0].mxu0
    %v4275 = vadd.f32 %v4186, %v4274
    %v4276 = vpop.f32.mrb[0].mxu0
    %4277 = vmatprep.mubr.f32.mxu0 0.0
    %4278 = vmatmul.mubr.f32.gmra.mrb[0].mxu0 %v4203
    %v4279 = vpop.f32.mrb[0].mxu0
    %v4280 = vadd.f32 %v4191, %v4279
    %v4281 = vpop.f32.mrb[0].mxu0
    %4282 = vmatprep.mubr.f32.mxu0 0.0
    %4283 = vmatmul.mubr.f32.gmra.mrb[0].mxu0 %v4206
    %v4284 = vpop.f32.mrb[0].mxu0
    %v4285 = vadd.f32 %v4196, %v4284
    %v4286 = vpop.f32.mrb[0].mxu0
    %4287 = vdwg.mxu0
    %vm4288 = vcmask 15360
    %4289 = vst.msk [vmem:[%s11] sm:$0xff] %vm4288, %v4275
    %4290 = vst.msk [vmem:[%s11 + $0x8] sm:$0xff] %vm4288, %v4280
    %vm4291 = vcmask 11264
    %4292 = vst.msk [vmem:[%s11 + $0x10] sm:$0xf] %vm4291, %v4285
    // Predicated region
    $region50: #{posecnn_forward.1} parent=1 // pred_check
      _
    $region51: #{posecnn_forward.1} parent=1 // pred_check_branch
      %4294 = sbr.rel (0) target = $region53
    $region52: #{posecnn_forward.1} parent=1 // pred_region
      _
    $region53: #{posecnn_forward.1} parent=1 // pred_fallthru
      _
    // Predicated region
    $region54: #{posecnn_forward.1} parent=1 // pred_check
      _
    $region55: #{posecnn_forward.1} parent=1 // pred_check_branch
      %4296 = sbr.rel (0) target = $region57
    $region56: #{posecnn_forward.1} parent=1 // pred_region
      _
    $region57: #{posecnn_forward.1} parent=1 // pred_fallthru
      _
    %4297 = vsyncpa [#allocation5], 1

</llo_original>
